<compile_context>
chip_gen: v6e
topology: v6e:2x2x1
jax: 0.10.0
libtpu: 0.0.40
codegen_flags: <defaults>
</compile_context>

<pallas_src>
import jax
import jax.numpy as jnp
from jax import lax
from jax.experimental import pallas as pl
from jax.experimental.pallas import tpu as pltpu

# ----------------------------- problem sizes -----------------------------
B = 2            # batch
C_IN = 4         # input channels
H = W = 16       # spatial
KH = KW = 3      # conv kernel (padding=1 -> 'SAME')
F_HID = 32       # conv output channels (feature dim z)
N_CLASSES = 8    # fc output dim
HP, WP = H + 2, W + 2          # padded spatial
HWN = H * W                    # 256 spatial positions per image
F_PAD = 128                    # lane-padded feature dim (32 -> 128)
OUT_ROWS = 8                   # sublane-padded output rows per image


# ------------------------------- kernel ----------------------------------
def deconfnet_kernel(xp_ref, convw_ref, pool_ref, fcw_ref, fcb_ref, out_ref):
    # xp_ref   : (1, HP, WP, C_IN)      zero-padded NHWC image (one batch elem)
    # convw_ref: (KH*KW, C_IN, F_PAD)   conv weight, one (C_IN,F_PAD) slab per tap
    # pool_ref : (OUT_ROWS, HWN)        row 0 = 1/HWN, rows 1.. = 0
    # fcw_ref  : (F_PAD, F_PAD)         fc weight zero-padded
    # fcb_ref  : (1, F_PAD)             fc bias zero-padded
    # out_ref  : (1, OUT_ROWS, F_PAD)   padded logits; row 0 / cols :N_CLASSES real
    x = xp_ref[0]                                    # (HP, WP, C_IN)

    # Conv2d(k=3, pad=1) as 9 shifted matmuls accumulated on the MXU.
    h = jnp.zeros((HWN, F_PAD), dtype=jnp.float32)
    for dy in range(KH):
        for dx in range(KW):
            xs = x[dy:dy + H, dx:dx + W, :].reshape(HWN, C_IN)       # (256, 4)
            wk = convw_ref[dy * KW + dx]                             # (4, 128)
            h = h + jnp.dot(xs, wk, preferred_element_type=jnp.float32)

    h = jnp.maximum(h, 0.0)                          # ReLU (VPU, f32)

    # Global average pool as a matmul: row 0 of z == mean over the spatial axis.
    z = jnp.dot(pool_ref[...], h, preferred_element_type=jnp.float32)   # (8,128)

    # fc head: logits = z @ W + b  (padded, lane-dense)
    logits = jnp.dot(z, fcw_ref[...], preferred_element_type=jnp.float32)
    logits = logits + fcb_ref[...]
    out_ref[...] = logits.reshape(1, OUT_ROWS, F_PAD).astype(out_ref.dtype)


def deconfnet_forward(x_nchw, conv_w, fc_w, fc_b):
    """x_nchw: (B, C, H, W) float32; conv_w: (F, C, KH, KW) (PyTorch layout)."""
    # ---- glue (no im2col expansion): NCHW -> NHWC + zero pad (padding=1) ----
    x = jnp.transpose(x_nchw, (0, 2, 3, 1))                         # (B,H,W,C)
    xp = jnp.pad(x, ((0, 0), (1, 1), (1, 1), (0, 0)))               # (B,HP,WP,C)

    # conv weight (F,C,KH,KW) -> (KH*KW, C, F_PAD): one matmul slab per tap,
    # feature dim zero-padded to a full 128-lane row.
    w_taps = jnp.transpose(conv_w, (2, 3, 1, 0)).reshape(KH * KW, C_IN, F_HID)
    w_taps = jnp.pad(w_taps, ((0, 0), (0, 0), (0, F_PAD - F_HID)))

    # pooling matrix (mean over HWN rows) and zero-padded fc weight / bias.
    pool = jnp.zeros((OUT_ROWS, HWN), jnp.float32).at[0, :].set(1.0 / HWN)
    fcw_pad = jnp.zeros((F_PAD, F_PAD), jnp.float32).at[:F_HID, :N_CLASSES].set(fc_w)
    fcb_pad = jnp.zeros((1, F_PAD), jnp.float32).at[0, :N_CLASSES].set(fc_b)

    flops = B * (2 * HWN * C_IN * F_PAD * KH * KW        # conv taps
                 + 2 * OUT_ROWS * HWN * F_PAD            # pooling matmul
                 + 2 * OUT_ROWS * F_PAD * F_PAD)         # fc
    bytes_accessed = 4 * (xp.size + w_taps.size + pool.size + fcw_pad.size
                          + fcb_pad.size + B * OUT_ROWS * F_PAD)

    out_padded = pl.pallas_call(
        deconfnet_kernel,
        out_shape=jax.ShapeDtypeStruct((B, OUT_ROWS, F_PAD), jnp.float32),
        grid=(B,),
        in_specs=[
            pl.BlockSpec((1, HP, WP, C_IN), lambda b: (b, 0, 0, 0)),
            pl.BlockSpec((KH * KW, C_IN, F_PAD), lambda b: (0, 0, 0)),
            pl.BlockSpec((OUT_ROWS, HWN), lambda b: (0, 0)),
            pl.BlockSpec((F_PAD, F_PAD), lambda b: (0, 0)),
            pl.BlockSpec((1, F_PAD), lambda b: (0, 0)),
        ],
        out_specs=pl.BlockSpec((1, OUT_ROWS, F_PAD), lambda b: (b, 0, 0)),
        compiler_params=pltpu.CompilerParams(
            dimension_semantics=("parallel",)),
        cost_estimate=pl.CostEstimate(
            flops=flops, transcendentals=0, bytes_accessed=bytes_accessed),
    )(xp, w_taps, pool, fcw_pad, fcb_pad)

    # padded (B, 8, 128) -> logical (B, N_CLASSES)
    return out_padded[:, 0, :N_CLASSES]


# ------------------------- plain-JAX reference ----------------------------
def deconfnet_reference(x_nchw, conv_w, fc_w, fc_b):
    x = jnp.transpose(x_nchw, (0, 2, 3, 1))                         # NHWC
    w_hwio = jnp.transpose(conv_w, (2, 3, 1, 0))                    # HWIO
    y = lax.conv_general_dilated(
        x, w_hwio, window_strides=(1, 1), padding="SAME",
        dimension_numbers=("NHWC", "HWIO", "NHWC"))
    y = jnp.maximum(y, 0.0)
    z = jnp.mean(y, axis=(1, 2))                                    # (B, F)
    return z @ fc_w + fc_b


if __name__ == "__main__":
    key = jax.random.PRNGKey(0)
    k_x, k_cw, k_fw, k_fb = jax.random.split(key, 4)

    # deterministic synthetic parameters (this is NOT a checkpoint load)
    x = jax.random.normal(k_x, (B, C_IN, H, W), dtype=jnp.float32)
    conv_w = 0.1 * jax.random.normal(k_cw, (F_HID, C_IN, KH, KW), dtype=jnp.float32)
    fc_w = 0.1 * jax.random.normal(k_fw, (F_HID, N_CLASSES), dtype=jnp.float32)
    fc_b = 0.01 * jax.random.normal(k_fb, (N_CLASSES,), dtype=jnp.float32)

    out = deconfnet_forward(x, conv_w, fc_w, fc_b)
    out = jax.block_until_ready(out)

    ref = deconfnet_reference(x, conv_w, fc_w, fc_b)
    assert out.shape == (B, N_CLASSES)
    assert jnp.allclose(out, ref, atol=1e-4, rtol=1e-4), (out, ref)

    print("KERNEL_OK")
</pallas_src>

<mosaic_0001>
module attributes {stable_mosaic.version = 11 : i64} {
  func.func @deconfnet_kernel(%arg0: i32, %arg1: memref<1x18x18x4xf32, #tpu.memory_space<vmem>>, %arg2: memref<9x4x128xf32, #tpu.memory_space<vmem>>, %arg3: memref<8x256xf32, #tpu.memory_space<vmem>>, %arg4: memref<128x128xf32, #tpu.memory_space<vmem>>, %arg5: memref<1x128xf32, #tpu.memory_space<vmem>>, %arg6: memref<1x8x128xf32, #tpu.memory_space<vmem>>) attributes {dimension_semantics = [#tpu.dimension_semantics<parallel>], iteration_bounds = array<i64: 2>, scalar_prefetch = 0 : i64, scratch_operands = 0 : i64, tpu.core_type = #tpu.core_type<tc>, window_params = [{transform_indices = @transform_0, window_bounds = array<i64: 1, 18, 18, 4>}, {pipeline_mode = #tpu.pipeline_mode<synchronous>, transform_indices = @transform_1, window_bounds = array<i64: 9, 4, 128>}, {pipeline_mode = #tpu.pipeline_mode<synchronous>, transform_indices = @transform_2, window_bounds = array<i64: 8, 256>}, {pipeline_mode = #tpu.pipeline_mode<synchronous>, transform_indices = @transform_3, window_bounds = array<i64: 128, 128>}, {pipeline_mode = #tpu.pipeline_mode<synchronous>, transform_indices = @transform_4, window_bounds = array<i64: 1, 128>}, {transform_indices = @transform_5, window_bounds = array<i64: 1, 8, 128>}]} {
    %c0 = arith.constant 0 : index
    %c0_0 = arith.constant 0 : index
    %c0_1 = arith.constant 0 : index
    %c0_2 = arith.constant 0 : index
    %0 = vector.load %arg1[%c0, %c0_0, %c0_1, %c0_2] : memref<1x18x18x4xf32, #tpu.memory_space<vmem>>, vector<1x18x18x4xf32>
    %1 = vector.shape_cast %0 : vector<1x18x18x4xf32> to vector<18x18x4xf32>
    %cst = arith.constant 0.000000e+00 : f32
    %2 = vector.broadcast %cst : f32 to vector<256x128xf32>
    %3 = vector.extract_strided_slice %1 {offsets = [0, 0, 0], sizes = [16, 16, 4], strides = [1, 1, 1]} : vector<18x18x4xf32> to vector<16x16x4xf32>
    %4 = vector.shape_cast %3 : vector<16x16x4xf32> to vector<256x4xf32>
    %c0_3 = arith.constant 0 : index
    %c0_4 = arith.constant 0 : index
    %c0_5 = arith.constant 0 : index
    %5 = vector.load %arg2[%c0_3, %c0_4, %c0_5] : memref<9x4x128xf32, #tpu.memory_space<vmem>>, vector<1x4x128xf32>
    %6 = vector.shape_cast %5 : vector<1x4x128xf32> to vector<4x128xf32>
    %cst_6 = arith.constant dense<0.000000e+00> : vector<256x128xf32>
    %7 = tpu.matmul %4, %6, %cst_6 {dimension_numbers = #tpu.dot_dimension_numbers<[1], [0], [0], [1], [0, 0, 1, 1], [], []>} : vector<256x4xf32>, vector<4x128xf32>, vector<256x128xf32> -> vector<256x128xf32>
    %8 = arith.addf %2, %7 : vector<256x128xf32>
    %9 = vector.extract_strided_slice %1 {offsets = [0, 1, 0], sizes = [16, 16, 4], strides = [1, 1, 1]} : vector<18x18x4xf32> to vector<16x16x4xf32>
    %10 = vector.shape_cast %9 : vector<16x16x4xf32> to vector<256x4xf32>
    %c1 = arith.constant 1 : index
    %c0_7 = arith.constant 0 : index
    %c0_8 = arith.constant 0 : index
    %11 = vector.load %arg2[%c1, %c0_7, %c0_8] : memref<9x4x128xf32, #tpu.memory_space<vmem>>, vector<1x4x128xf32>
    %12 = vector.shape_cast %11 : vector<1x4x128xf32> to vector<4x128xf32>
    %cst_9 = arith.constant dense<0.000000e+00> : vector<256x128xf32>
    %13 = tpu.matmul %10, %12, %cst_9 {dimension_numbers = #tpu.dot_dimension_numbers<[1], [0], [0], [1], [0, 0, 1, 1], [], []>} : vector<256x4xf32>, vector<4x128xf32>, vector<256x128xf32> -> vector<256x128xf32>
    %14 = arith.addf %8, %13 : vector<256x128xf32>
    %15 = vector.extract_strided_slice %1 {offsets = [0, 2, 0], sizes = [16, 16, 4], strides = [1, 1, 1]} : vector<18x18x4xf32> to vector<16x16x4xf32>
    %16 = vector.shape_cast %15 : vector<16x16x4xf32> to vector<256x4xf32>
    %c2 = arith.constant 2 : index
    %c0_10 = arith.constant 0 : index
    %c0_11 = arith.constant 0 : index
    %17 = vector.load %arg2[%c2, %c0_10, %c0_11] : memref<9x4x128xf32, #tpu.memory_space<vmem>>, vector<1x4x128xf32>
    %18 = vector.shape_cast %17 : vector<1x4x128xf32> to vector<4x128xf32>
    %cst_12 = arith.constant dense<0.000000e+00> : vector<256x128xf32>
    %19 = tpu.matmul %16, %18, %cst_12 {dimension_numbers = #tpu.dot_dimension_numbers<[1], [0], [0], [1], [0, 0, 1, 1], [], []>} : vector<256x4xf32>, vector<4x128xf32>, vector<256x128xf32> -> vector<256x128xf32>
    %20 = arith.addf %14, %19 : vector<256x128xf32>
    %21 = vector.extract_strided_slice %1 {offsets = [1, 0, 0], sizes = [16, 16, 4], strides = [1, 1, 1]} : vector<18x18x4xf32> to vector<16x16x4xf32>
    %22 = vector.shape_cast %21 : vector<16x16x4xf32> to vector<256x4xf32>
    %c3 = arith.constant 3 : index
    %c0_13 = arith.constant 0 : index
    %c0_14 = arith.constant 0 : index
    %23 = vector.load %arg2[%c3, %c0_13, %c0_14] : memref<9x4x128xf32, #tpu.memory_space<vmem>>, vector<1x4x128xf32>
    %24 = vector.shape_cast %23 : vector<1x4x128xf32> to vector<4x128xf32>
    %cst_15 = arith.constant dense<0.000000e+00> : vector<256x128xf32>
    %25 = tpu.matmul %22, %24, %cst_15 {dimension_numbers = #tpu.dot_dimension_numbers<[1], [0], [0], [1], [0, 0, 1, 1], [], []>} : vector<256x4xf32>, vector<4x128xf32>, vector<256x128xf32> -> vector<256x128xf32>
    %26 = arith.addf %20, %25 : vector<256x128xf32>
    %27 = vector.extract_strided_slice %1 {offsets = [1, 1, 0], sizes = [16, 16, 4], strides = [1, 1, 1]} : vector<18x18x4xf32> to vector<16x16x4xf32>
    %28 = vector.shape_cast %27 : vector<16x16x4xf32> to vector<256x4xf32>
    %c4 = arith.constant 4 : index
    %c0_16 = arith.constant 0 : index
    %c0_17 = arith.constant 0 : index
    %29 = vector.load %arg2[%c4, %c0_16, %c0_17] : memref<9x4x128xf32, #tpu.memory_space<vmem>>, vector<1x4x128xf32>
    %30 = vector.shape_cast %29 : vector<1x4x128xf32> to vector<4x128xf32>
    %cst_18 = arith.constant dense<0.000000e+00> : vector<256x128xf32>
    %31 = tpu.matmul %28, %30, %cst_18 {dimension_numbers = #tpu.dot_dimension_numbers<[1], [0], [0], [1], [0, 0, 1, 1], [], []>} : vector<256x4xf32>, vector<4x128xf32>, vector<256x128xf32> -> vector<256x128xf32>
    %32 = arith.addf %26, %31 : vector<256x128xf32>
    %33 = vector.extract_strided_slice %1 {offsets = [1, 2, 0], sizes = [16, 16, 4], strides = [1, 1, 1]} : vector<18x18x4xf32> to vector<16x16x4xf32>
    %34 = vector.shape_cast %33 : vector<16x16x4xf32> to vector<256x4xf32>
    %c5 = arith.constant 5 : index
    %c0_19 = arith.constant 0 : index
    %c0_20 = arith.constant 0 : index
    %35 = vector.load %arg2[%c5, %c0_19, %c0_20] : memref<9x4x128xf32, #tpu.memory_space<vmem>>, vector<1x4x128xf32>
    %36 = vector.shape_cast %35 : vector<1x4x128xf32> to vector<4x128xf32>
    %cst_21 = arith.constant dense<0.000000e+00> : vector<256x128xf32>
    %37 = tpu.matmul %34, %36, %cst_21 {dimension_numbers = #tpu.dot_dimension_numbers<[1], [0], [0], [1], [0, 0, 1, 1], [], []>} : vector<256x4xf32>, vector<4x128xf32>, vector<256x128xf32> -> vector<256x128xf32>
    %38 = arith.addf %32, %37 : vector<256x128xf32>
    %39 = vector.extract_strided_slice %1 {offsets = [2, 0, 0], sizes = [16, 16, 4], strides = [1, 1, 1]} : vector<18x18x4xf32> to vector<16x16x4xf32>
    %40 = vector.shape_cast %39 : vector<16x16x4xf32> to vector<256x4xf32>
    %c6 = arith.constant 6 : index
    %c0_22 = arith.constant 0 : index
    %c0_23 = arith.constant 0 : index
    %41 = vector.load %arg2[%c6, %c0_22, %c0_23] : memref<9x4x128xf32, #tpu.memory_space<vmem>>, vector<1x4x128xf32>
    %42 = vector.shape_cast %41 : vector<1x4x128xf32> to vector<4x128xf32>
    %cst_24 = arith.constant dense<0.000000e+00> : vector<256x128xf32>
    %43 = tpu.matmul %40, %42, %cst_24 {dimension_numbers = #tpu.dot_dimension_numbers<[1], [0], [0], [1], [0, 0, 1, 1], [], []>} : vector<256x4xf32>, vector<4x128xf32>, vector<256x128xf32> -> vector<256x128xf32>
    %44 = arith.addf %38, %43 : vector<256x128xf32>
    %45 = vector.extract_strided_slice %1 {offsets = [2, 1, 0], sizes = [16, 16, 4], strides = [1, 1, 1]} : vector<18x18x4xf32> to vector<16x16x4xf32>
    %46 = vector.shape_cast %45 : vector<16x16x4xf32> to vector<256x4xf32>
    %c7 = arith.constant 7 : index
    %c0_25 = arith.constant 0 : index
    %c0_26 = arith.constant 0 : index
    %47 = vector.load %arg2[%c7, %c0_25, %c0_26] : memref<9x4x128xf32, #tpu.memory_space<vmem>>, vector<1x4x128xf32>
    %48 = vector.shape_cast %47 : vector<1x4x128xf32> to vector<4x128xf32>
    %cst_27 = arith.constant dense<0.000000e+00> : vector<256x128xf32>
    %49 = tpu.matmul %46, %48, %cst_27 {dimension_numbers = #tpu.dot_dimension_numbers<[1], [0], [0], [1], [0, 0, 1, 1], [], []>} : vector<256x4xf32>, vector<4x128xf32>, vector<256x128xf32> -> vector<256x128xf32>
    %50 = arith.addf %44, %49 : vector<256x128xf32>
    %51 = vector.extract_strided_slice %1 {offsets = [2, 2, 0], sizes = [16, 16, 4], strides = [1, 1, 1]} : vector<18x18x4xf32> to vector<16x16x4xf32>
    %52 = vector.shape_cast %51 : vector<16x16x4xf32> to vector<256x4xf32>
    %c8 = arith.constant 8 : index
    %c0_28 = arith.constant 0 : index
    %c0_29 = arith.constant 0 : index
    %53 = vector.load %arg2[%c8, %c0_28, %c0_29] : memref<9x4x128xf32, #tpu.memory_space<vmem>>, vector<1x4x128xf32>
    %54 = vector.shape_cast %53 : vector<1x4x128xf32> to vector<4x128xf32>
    %cst_30 = arith.constant dense<0.000000e+00> : vector<256x128xf32>
    %55 = tpu.matmul %52, %54, %cst_30 {dimension_numbers = #tpu.dot_dimension_numbers<[1], [0], [0], [1], [0, 0, 1, 1], [], []>} : vector<256x4xf32>, vector<4x128xf32>, vector<256x128xf32> -> vector<256x128xf32>
    %56 = arith.addf %50, %55 : vector<256x128xf32>
    %cst_31 = arith.constant 0.000000e+00 : f32
    %57 = vector.broadcast %cst_31 : f32 to vector<256x128xf32>
    %58 = arith.maximumf %56, %57 : vector<256x128xf32>
    %c0_32 = arith.constant 0 : index
    %c0_33 = arith.constant 0 : index
    %59 = vector.load %arg3[%c0_32, %c0_33] : memref<8x256xf32, #tpu.memory_space<vmem>>, vector<8x256xf32>
    %cst_34 = arith.constant dense<0.000000e+00> : vector<8x128xf32>
    %60 = tpu.matmul %59, %58, %cst_34 {dimension_numbers = #tpu.dot_dimension_numbers<[1], [0], [0], [1], [0, 0, 1, 1], [], []>} : vector<8x256xf32>, vector<256x128xf32>, vector<8x128xf32> -> vector<8x128xf32>
    %c0_35 = arith.constant 0 : index
    %c0_36 = arith.constant 0 : index
    %61 = vector.load %arg4[%c0_35, %c0_36] : memref<128x128xf32, #tpu.memory_space<vmem>>, vector<128x128xf32>
    %cst_37 = arith.constant dense<0.000000e+00> : vector<8x128xf32>
    %62 = tpu.matmul %60, %61, %cst_37 {dimension_numbers = #tpu.dot_dimension_numbers<[1], [0], [0], [1], [0, 0, 1, 1], [], []>} : vector<8x128xf32>, vector<128x128xf32>, vector<8x128xf32> -> vector<8x128xf32>
    %c0_38 = arith.constant 0 : index
    %c0_39 = arith.constant 0 : index
    %63 = vector.load %arg5[%c0_38, %c0_39] : memref<1x128xf32, #tpu.memory_space<vmem>>, vector<1x128xf32>
    %64 = vector.broadcast %63 : vector<1x128xf32> to vector<8x128xf32>
    %65 = arith.addf %62, %64 : vector<8x128xf32>
    %66 = vector.shape_cast %65 : vector<8x128xf32> to vector<1x8x128xf32>
    %c0_40 = arith.constant 0 : index
    %c0_41 = arith.constant 0 : index
    %c0_42 = arith.constant 0 : index
    %67 = vector.load %arg6[%c0_40, %c0_41, %c0_42] : memref<1x8x128xf32, #tpu.memory_space<vmem>>, vector<1x8x128xf32>
    tpu.vector_store %arg6[%c0_40, %c0_41, %c0_42], %66 {strides = array<i32>} : memref<1x8x128xf32, #tpu.memory_space<vmem>>, vector<1x8x128xf32>,
    return
  }
  func.func @transform_0(%arg0: i32) -> (i32, i32, i32, i32) {
    %c0_i32 = arith.constant 0 : i32
    %c0_i32_0 = arith.constant 0 : i32
    %c0_i32_1 = arith.constant 0 : i32
    %c0_i32_2 = arith.constant 0 : i32
    return %arg0, %c0_i32, %c0_i32_0, %c0_i32_1 : i32, i32, i32, i32
  }
  func.func @transform_1(%arg0: i32) -> (i32, i32, i32) {
    %c0_i32 = arith.constant 0 : i32
    %c0_i32_0 = arith.constant 0 : i32
    %c0_i32_1 = arith.constant 0 : i32
    %c0_i32_2 = arith.constant 0 : i32
    return %c0_i32, %c0_i32_0, %c0_i32_1 : i32, i32, i32
  }
  func.func @transform_2(%arg0: i32) -> (i32, i32) {
    %c0_i32 = arith.constant 0 : i32
    %c0_i32_0 = arith.constant 0 : i32
    %c0_i32_1 = arith.constant 0 : i32
    return %c0_i32, %c0_i32_0 : i32, i32
  }
  func.func @transform_3(%arg0: i32) -> (i32, i32) {
    %c0_i32 = arith.constant 0 : i32
    %c0_i32_0 = arith.constant 0 : i32
    %c0_i32_1 = arith.constant 0 : i32
    return %c0_i32, %c0_i32_0 : i32, i32
  }
  func.func @transform_4(%arg0: i32) -> (i32, i32) {
    %c0_i32 = arith.constant 0 : i32
    %c0_i32_0 = arith.constant 0 : i32
    %c0_i32_1 = arith.constant 0 : i32
    return %c0_i32, %c0_i32_0 : i32, i32
  }
  func.func @transform_5(%arg0: i32) -> (i32, i32, i32) {
    %c0_i32 = arith.constant 0 : i32
    %c0_i32_0 = arith.constant 0 : i32
    %c0_i32_1 = arith.constant 0 : i32
    return %arg0, %c0_i32, %c0_i32_0 : i32, i32, i32
  }
}

</mosaic_0001>

<llo_original>
// kernel: tpu_custom_call.1
$region0: #{tpu_custom_call.1}
  #allocation0 [shape = 'u32[]', space=smem, size = 0x4, offset = 0x4, fixed_abs, tag = 'smem constant byte address 0x4 - core index']
  #allocation1 [shape = 'u32[144,128]{1,0:T(1,128)}', space=vmem, size = 0x12000, scoped, tag = 'internal scratch']
  %s0 = inlined_call_operand.vmem [shape: f32[2,18,18,4], index: 0, kind: input, shape index: {}]
  %s1 = inlined_call_operand.vmem [shape: f32[9,4,128], index: 1, kind: input, shape index: {}]
  %s2 = inlined_call_operand.vmem [shape: f32[8,256], index: 2, kind: input, shape index: {}]
  %s3 = inlined_call_operand.vmem [shape: f32[128,128], index: 3, kind: input, shape index: {}]
  %s4 = inlined_call_operand.vmem [shape: f32[1,128], index: 4, kind: input, shape index: {}]
  %s5 = inlined_call_operand.hbm [shape: f32[2,8,128], index: 5, kind: output, shape index: {}]
  %s6 = sld [smem:[#allocation0]]
  $region53: #{tpu_custom_call.1} parent=0
    _
  %s8 = ssub.s32 1, %s6
  %s9 = scalar_select 0, %s8, %s6
  $region1: #{tpu_custom_call.1} parent=0
    #allocation2 [shape = 'u8[8192]{0}', space=vmem, size = 0x2000, scoped, tag = 'output window, operand 0']
    #allocation3 [shape = 's32[2]{0}', space=sflag, size = 0x8, scoped, tag = 'scoped memory for tpu_custom_call.1']
    %10 = vsyncpa [#allocation3], 0
    %s11 = scalar_lea.sflag [#allocation3], 1
    %12 = vsyncpa %s11, 0
    loop: start=0, step=1, limit=4
    $region2: #{tpu_custom_call.1} parent=1 // loop_pre_header
      _
    $region3: #{tpu_custom_call.1} parent=1 // loop_header
      %s14 = sphi 0, %s18
      %p15 = scmp.ge.s32.totalorder %s14, 4
      %s24 = sphi 0, %s26
      %s27 = sphi 0, %s24
      %s28 = sphi 0, %s27
      %s44 = sphi 0, %s28
      %s48 = sphi 0, %s48
      %s50 = sphi 0, %s48
      %s51 = sphi 0, %s50
      %s65 = sphi 0, %s51
      %s69 = sphi 0, %s69
      %s71 = sphi 0, %s69
      %s72 = sphi 0, %s71
      %s86 = sphi 0, %s72
      %s90 = sphi 0, %s90
      %s92 = sphi 0, %s90
      %s93 = sphi 0, %s92
      %s107 = sphi 0, %s93
      %s111 = sphi 0, %s111
      %s113 = sphi 0, %s111
      %s114 = sphi 0, %s113
      %s128 = sphi 0, %s114
      %s134 = sphi 0, %s136
      %s137 = sphi 0, %s134
      %s138 = sphi 0, %s137
      %s154 = sphi 0, %s138
    $region4: #{tpu_custom_call.1} parent=1 // loop_header_branch
      %17 = sbr.rel (%p15) target = $region8
    $region5: #{tpu_custom_call.1} parent=1 // loop_body
      %s19 = ssub.s32 %s14, 1
      %s20 = ssub.s32 %s14, 2
      %s21 = sadd.s32 %s14, 1
      %s22 = ssub.s32 %s14, %s21
      %p23 = scmp.eq.s32.totalorder %s22, 0
      %s25 = sadd.s32 %s24, 1
      %s26 = scalar_select %p23, %s24, %s25
      %p29 = pneg %p23
      %p30 = scmp.eq.s32.totalorder %s14, 1
      %p31 = por %p29, %p30
      %p32 = scmp.ne.s32.totalorder %s24, %s27
      %p33 = scmp.eq.s32.totalorder %s14, 0
      %p34 = por %p32, %p33
      %p35 = scmp.ne.s32.totalorder %s24, %s27
      %p36 = scmp.eq.s32.totalorder %s19, 1
      %p37 = por %p35, %p36
      %p38 = scmp.ne.s32.totalorder %s27, %s28
      %p39 = scmp.eq.s32.totalorder %s19, 0
      %p40 = por %p38, %p39
      %p41 = scmp.ne.s32.totalorder %s27, %s28
      %p42 = scmp.eq.s32.totalorder %s20, 1
      %p43 = por %p41, %p42
      %p45 = scmp.ne.s32.totalorder %s28, %s44
      %p46 = scmp.eq.s32.totalorder %s20, 0
      %p47 = por %p45, %p46
      %s49 = sadd.s32 %s48, 1
      %p52 = scmp.eq.s32.totalorder %s14, 1
      %p53 = scmp.ne.s32.totalorder %s48, %s50
      %p54 = scmp.eq.s32.totalorder %s14, 0
      %p55 = por %p53, %p54
      %p56 = scmp.ne.s32.totalorder %s48, %s50
      %p57 = scmp.eq.s32.totalorder %s19, 1
      %p58 = por %p56, %p57
      %p59 = scmp.ne.s32.totalorder %s50, %s51
      %p60 = scmp.eq.s32.totalorder %s19, 0
      %p61 = por %p59, %p60
      %p62 = scmp.ne.s32.totalorder %s50, %s51
      %p63 = scmp.eq.s32.totalorder %s20, 1
      %p64 = por %p62, %p63
      %p66 = scmp.ne.s32.totalorder %s51, %s65
      %p67 = scmp.eq.s32.totalorder %s20, 0
      %p68 = por %p66, %p67
      %s70 = sadd.s32 %s69, 1
      %p73 = scmp.eq.s32.totalorder %s14, 1
      %p74 = scmp.ne.s32.totalorder %s69, %s71
      %p75 = scmp.eq.s32.totalorder %s14, 0
      %p76 = por %p74, %p75
      %p77 = scmp.ne.s32.totalorder %s69, %s71
      %p78 = scmp.eq.s32.totalorder %s19, 1
      %p79 = por %p77, %p78
      %p80 = scmp.ne.s32.totalorder %s71, %s72
      %p81 = scmp.eq.s32.totalorder %s19, 0
      %p82 = por %p80, %p81
      %p83 = scmp.ne.s32.totalorder %s71, %s72
      %p84 = scmp.eq.s32.totalorder %s20, 1
      %p85 = por %p83, %p84
      %p87 = scmp.ne.s32.totalorder %s72, %s86
      %p88 = scmp.eq.s32.totalorder %s20, 0
      %p89 = por %p87, %p88
      %s91 = sadd.s32 %s90, 1
      %p94 = scmp.eq.s32.totalorder %s14, 1
      %p95 = scmp.ne.s32.totalorder %s90, %s92
      %p96 = scmp.eq.s32.totalorder %s14, 0
      %p97 = por %p95, %p96
      %p98 = scmp.ne.s32.totalorder %s90, %s92
      %p99 = scmp.eq.s32.totalorder %s19, 1
      %p100 = por %p98, %p99
      %p101 = scmp.ne.s32.totalorder %s92, %s93
      %p102 = scmp.eq.s32.totalorder %s19, 0
      %p103 = por %p101, %p102
      %p104 = scmp.ne.s32.totalorder %s92, %s93
      %p105 = scmp.eq.s32.totalorder %s20, 1
      %p106 = por %p104, %p105
      %p108 = scmp.ne.s32.totalorder %s93, %s107
      %p109 = scmp.eq.s32.totalorder %s20, 0
      %p110 = por %p108, %p109
      %s112 = sadd.s32 %s111, 1
      %p115 = scmp.eq.s32.totalorder %s14, 1
      %p116 = scmp.ne.s32.totalorder %s111, %s113
      %p117 = scmp.eq.s32.totalorder %s14, 0
      %p118 = por %p116, %p117
      %p119 = scmp.ne.s32.totalorder %s111, %s113
      %p120 = scmp.eq.s32.totalorder %s19, 1
      %p121 = por %p119, %p120
      %p122 = scmp.ne.s32.totalorder %s113, %s114
      %p123 = scmp.eq.s32.totalorder %s19, 0
      %p124 = por %p122, %p123
      %p125 = scmp.ne.s32.totalorder %s113, %s114
      %p126 = scmp.eq.s32.totalorder %s20, 1
      %p127 = por %p125, %p126
      %p129 = scmp.ne.s32.totalorder %s114, %s128
      %p130 = scmp.eq.s32.totalorder %s20, 0
      %p131 = por %p129, %p130
      %s132 = ssub.s32 %s14, %s21
      %p133 = scmp.eq.s32.totalorder %s132, 0
      %s135 = sadd.s32 %s134, 1
      %s136 = scalar_select %p133, %s134, %s135
      %p139 = pneg %p133
      %p140 = scmp.eq.s32.totalorder %s14, 1
      %p141 = por %p139, %p140
      %p142 = scmp.ne.s32.totalorder %s134, %s137
      %p143 = scmp.eq.s32.totalorder %s14, 0
      %p144 = por %p142, %p143
      %p145 = scmp.ne.s32.totalorder %s134, %s137
      %p146 = scmp.eq.s32.totalorder %s19, 1
      %p147 = por %p145, %p146
      %p148 = scmp.ne.s32.totalorder %s137, %s138
      %p149 = scmp.eq.s32.totalorder %s19, 0
      %p150 = por %p148, %p149
      %p151 = scmp.ne.s32.totalorder %s137, %s138
      %p152 = scmp.eq.s32.totalorder %s20, 1
      %p153 = por %p151, %p152
      %p155 = scmp.ne.s32.totalorder %s138, %s154
      %p156 = scmp.eq.s32.totalorder %s20, 0
      %p157 = por %p155, %p156
      %p158 = scmp.le.s32.totalorder 1, %s14
      %p159 = scmp.lt.s32.totalorder %s14, 3
      %p160 = pnand %p158, %p159
      %p161 = pneg %p160
      // Predicated region
      $region9: #{tpu_custom_call.1} parent=5 // pred_check
        _
      $region10: #{tpu_custom_call.1} parent=5 // pred_check_branch
        %163 = sbr.rel (%p160) target = $region12
      $region11: #{tpu_custom_call.1} parent=5 // pred_region
        %s164 = ssub.s32 %s14, 1
        // Predicated region
        $region13: #{tpu_custom_call.1} parent=11 // pred_check
          %p165 = pneg %p61
        $region14: #{tpu_custom_call.1} parent=11 // pred_check_branch
          %167 = sbr.rel (%p165) target = $region16
        $region15: #{tpu_custom_call.1} parent=11 // pred_region
          _
        $region16: #{tpu_custom_call.1} parent=11 // pred_fallthru
          _
        // Predicated region
        $region17: #{tpu_custom_call.1} parent=11 // pred_check
          %p168 = pneg %p82
        $region18: #{tpu_custom_call.1} parent=11 // pred_check_branch
          %170 = sbr.rel (%p168) target = $region20
        $region19: #{tpu_custom_call.1} parent=11 // pred_region
          _
        $region20: #{tpu_custom_call.1} parent=11 // pred_fallthru
          _
        // Predicated region
        $region21: #{tpu_custom_call.1} parent=11 // pred_check
          %p171 = pneg %p103
        $region22: #{tpu_custom_call.1} parent=11 // pred_check_branch
          %173 = sbr.rel (%p171) target = $region24
        $region23: #{tpu_custom_call.1} parent=11 // pred_region
          _
        $region24: #{tpu_custom_call.1} parent=11 // pred_fallthru
          _
        // Predicated region
        $region25: #{tpu_custom_call.1} parent=11 // pred_check
          %p174 = pneg %p124
        $region26: #{tpu_custom_call.1} parent=11 // pred_check_branch
          %176 = sbr.rel (%p174) target = $region28
        $region27: #{tpu_custom_call.1} parent=11 // pred_region
          _
        $region28: #{tpu_custom_call.1} parent=11 // pred_fallthru
          _
      $region12: #{tpu_custom_call.1} parent=5 // pred_fallthru
        _
      %p177 = scmp.lt.s32.totalorder %s14, 2
      // Predicated region
      $region29: #{tpu_custom_call.1} parent=5 // pred_check
        %p178 = pneg %p177
      $region30: #{tpu_custom_call.1} parent=5 // pred_check_branch
        %180 = sbr.rel (%p178) target = $region32
      $region31: #{tpu_custom_call.1} parent=5 // pred_region
        // Predicated region
        $region33: #{tpu_custom_call.1} parent=31 // pred_check
          %p181 = pneg %p34
        $region34: #{tpu_custom_call.1} parent=31 // pred_check_branch
          %183 = sbr.rel (%p181) target = $region36
        $region35: #{tpu_custom_call.1} parent=31 // pred_region
          %p184 = scmp.lt.s32.totalorder %s14, 1
          %s185 = scalar_select %p184, %s14, 1
          %s186 = smul.addr %s185, 54
          %s187 = smul.addr %s186, 8
          %s188 = scalar_lea.vmem %s0, %s187
        $region36: #{tpu_custom_call.1} parent=31 // pred_fallthru
          _
      $region32: #{tpu_custom_call.1} parent=5 // pred_fallthru
        _
      %p189 = scmp.le.s32.totalorder 1, %s14
      %p190 = scmp.lt.s32.totalorder %s14, 3
      %p191 = pnand %p189, %p190
      %p192 = pneg %p191
      // Predicated region
      $region37: #{tpu_custom_call.1} parent=5 // pred_check
        _
      $region38: #{tpu_custom_call.1} parent=5 // pred_check_branch
        %194 = sbr.rel (%p191) target = $region40
      $region39: #{tpu_custom_call.1} parent=5 // pred_region
        %s195 = ssub.s32 %s14, 1
        %p196 = scmp.lt.s32.totalorder %s19, 1
        %s197 = scalar_select %p196, %s19, 1
        %s198 = smul.addr %s197, 54
        %s199 = smul.addr %s198, 8
        %s200 = scalar_lea.vmem %s0, %s199
        %p201 = pneg %p40
        %p202 = pneg %p37
        %p203 = pneg %p61
        %p204 = pneg %p58
        %p205 = pneg %p82
        %p206 = pneg %p79
        %p207 = pneg %p103
        %p208 = pneg %p100
        %p209 = pneg %p124
        %p210 = pneg %p121
        %p211 = pneg %p150
        %p212 = pneg %p147
        %s213 = sand.u32 %s137, 1
        %s214 = scalar_lea.sflag [#allocation3], %s213
        %s215 = sand.u32 %s137, 1
        %s216 = smul.addr %s215, 8
        %s217 = scalar_lea.vmem [#allocation2], %s216
        %p218 = scmp.lt.s32.totalorder %s19, 1
        %s219 = scalar_select %p218, %s19, 1
        %s220 = smul.addr %s219, 54
        %s221 = smul.addr %s220, 8
        %s222 = scalar_lea.vmem %s0, %s221
        %v223 = vld [vmem:[%s222] sm:$0xff]
        %v224 = vld [vmem:[%s222 + $0x8] sm:$0xff]
        %v225 = vld [vmem:[%s222 + $0x10] sm:$0x3]
        %v226 = vld [vmem:[%s222 + $0x18] sm:$0xff]
        %v227 = vld [vmem:[%s222 + $0x20] sm:$0xff]
        %v228 = vld [vmem:[%s222 + $0x28] sm:$0x3]
        %v229 = vld [vmem:[%s222 + $0x30] sm:$0xff]
        %v230 = vld [vmem:[%s222 + $0x38] sm:$0xff]
        %v231 = vld [vmem:[%s222 + $0x40] sm:$0x3]
        %v232 = vld [vmem:[%s222 + $0x48] sm:$0xff]
        %v233 = vld [vmem:[%s222 + $0x50] sm:$0xff]
        %v234 = vld [vmem:[%s222 + $0x58] sm:$0x3]
        %v235 = vld [vmem:[%s222 + $0x60] sm:$0xff]
        %v236 = vld [vmem:[%s222 + $0x68] sm:$0xff]
        %v237 = vld [vmem:[%s222 + $0x70] sm:$0x3]
        %v238 = vld [vmem:[%s222 + $0x78] sm:$0xff]
        %v239 = vld [vmem:[%s222 + $0x80] sm:$0xff]
        %v240 = vld [vmem:[%s222 + $0x88] sm:$0x3]
        %v241 = vld [vmem:[%s222 + $0x90] sm:$0xff]
        %v242 = vld [vmem:[%s222 + $0x98] sm:$0xff]
        %v243 = vld [vmem:[%s222 + $0xa0] sm:$0x3]
        %v244 = vld [vmem:[%s222 + $0xa8] sm:$0xff]
        %v245 = vld [vmem:[%s222 + $0xb0] sm:$0xff]
        %v246 = vld [vmem:[%s222 + $0xb8] sm:$0x3]
        %v247 = vld [vmem:[%s222 + $0xc0] sm:$0xff]
        %v248 = vld [vmem:[%s222 + $0xc8] sm:$0xff]
        %v249 = vld [vmem:[%s222 + $0xd0] sm:$0x3]
        %v250 = vld [vmem:[%s222 + $0xd8] sm:$0xff]
        %v251 = vld [vmem:[%s222 + $0xe0] sm:$0xff]
        %v252 = vld [vmem:[%s222 + $0xe8] sm:$0x3]
        %v253 = vld [vmem:[%s222 + $0xf0] sm:$0xff]
        %v254 = vld [vmem:[%s222 + $0xf8] sm:$0xff]
        %v255 = vld [vmem:[%s222 + $0x100] sm:$0x3]
        %v256 = vld [vmem:[%s222 + $0x108] sm:$0xff]
        %v257 = vld [vmem:[%s222 + $0x110] sm:$0xff]
        %v258 = vld [vmem:[%s222 + $0x118] sm:$0x3]
        %v259 = vld [vmem:[%s222 + $0x120] sm:$0xff]
        %v260 = vld [vmem:[%s222 + $0x128] sm:$0xff]
        %v261 = vld [vmem:[%s222 + $0x130] sm:$0x3]
        %v262 = vld [vmem:[%s222 + $0x138] sm:$0xff]
        %v263 = vld [vmem:[%s222 + $0x140] sm:$0xff]
        %v264 = vld [vmem:[%s222 + $0x148] sm:$0x3]
        %v265 = vld [vmem:[%s222 + $0x150] sm:$0xff]
        %v266 = vld [vmem:[%s222 + $0x158] sm:$0xff]
        %v267 = vld [vmem:[%s222 + $0x160] sm:$0x3]
        %v268 = vld [vmem:[%s222 + $0x168] sm:$0xff]
        %v269 = vld [vmem:[%s222 + $0x170] sm:$0xff]
        %v270 = vld [vmem:[%s222 + $0x178] sm:$0x3]
        %v271 = vld [vmem:[%s222 + $0x180] sm:$0xff]
        %v272 = vld [vmem:[%s222 + $0x188] sm:$0xff]
        %v273 = vld [vmem:[%s222 + $0x190] sm:$0x3]
        %v274 = vld [vmem:[%s222 + $0x198] sm:$0xff]
        %v275 = vld [vmem:[%s222 + $0x1a0] sm:$0xff]
        %v276 = vld [vmem:[%s222 + $0x1a8] sm:$0x3]
        %v277 = vld [vmem:[%s1] sm:$0xf]
        %vm326 = vcmask 1046528
        %v327 = vrot.slane %v223, 1
        %v328 = vrot.slane %v224, 1
        %v329 = vsel %vm326, %v327, %v328
        %v330 = vrot.slane %v225, 1
        %v331 = vsel %vm326, %v328, %v330
        %v332 = vrot.slane %v226, 1
        %v333 = vrot.slane %v227, 1
        %v334 = vsel %vm326, %v332, %v333
        %v335 = vrot.slane %v228, 1
        %v336 = vsel %vm326, %v333, %v335
        %v337 = vrot.slane %v229, 1
        %v338 = vrot.slane %v230, 1
        %v339 = vsel %vm326, %v337, %v338
        %v340 = vrot.slane %v231, 1
        %v341 = vsel %vm326, %v338, %v340
        %v342 = vrot.slane %v232, 1
        %v343 = vrot.slane %v233, 1
        %v344 = vsel %vm326, %v342, %v343
        %v345 = vrot.slane %v234, 1
        %v346 = vsel %vm326, %v343, %v345
        %v347 = vrot.slane %v235, 1
        %v348 = vrot.slane %v236, 1
        %v349 = vsel %vm326, %v347, %v348
        %v350 = vrot.slane %v237, 1
        %v351 = vsel %vm326, %v348, %v350
        %v352 = vrot.slane %v238, 1
        %v353 = vrot.slane %v239, 1
        %v354 = vsel %vm326, %v352, %v353
        %v355 = vrot.slane %v240, 1
        %v356 = vsel %vm326, %v353, %v355
        %v357 = vrot.slane %v241, 1
        %v358 = vrot.slane %v242, 1
        %v359 = vsel %vm326, %v357, %v358
        %v360 = vrot.slane %v243, 1
        %v361 = vsel %vm326, %v358, %v360
        %v362 = vrot.slane %v244, 1
        %v363 = vrot.slane %v245, 1
        %v364 = vsel %vm326, %v362, %v363
        %v365 = vrot.slane %v246, 1
        %v366 = vsel %vm326, %v363, %v365
        %v367 = vrot.slane %v247, 1
        %v368 = vrot.slane %v248, 1
        %v369 = vsel %vm326, %v367, %v368
        %v370 = vrot.slane %v249, 1
        %v371 = vsel %vm326, %v368, %v370
        %v372 = vrot.slane %v250, 1
        %v373 = vrot.slane %v251, 1
        %v374 = vsel %vm326, %v372, %v373
        %v375 = vrot.slane %v252, 1
        %v376 = vsel %vm326, %v373, %v375
        %v377 = vrot.slane %v253, 1
        %v378 = vrot.slane %v254, 1
        %v379 = vsel %vm326, %v377, %v378
        %v380 = vrot.slane %v255, 1
        %v381 = vsel %vm326, %v378, %v380
        %v382 = vrot.slane %v256, 1
        %v383 = vrot.slane %v257, 1
        %v384 = vsel %vm326, %v382, %v383
        %v385 = vrot.slane %v258, 1
        %v386 = vsel %vm326, %v383, %v385
        %v387 = vrot.slane %v259, 1
        %v388 = vrot.slane %v260, 1
        %v389 = vsel %vm326, %v387, %v388
        %v390 = vrot.slane %v261, 1
        %v391 = vsel %vm326, %v388, %v390
        %v392 = vrot.slane %v262, 1
        %v393 = vrot.slane %v263, 1
        %v394 = vsel %vm326, %v392, %v393
        %v395 = vrot.slane %v264, 1
        %v396 = vsel %vm326, %v393, %v395
        %v397 = vrot.slane %v265, 1
        %v398 = vrot.slane %v266, 1
        %v399 = vsel %vm326, %v397, %v398
        %v400 = vrot.slane %v267, 1
        %v401 = vsel %vm326, %v398, %v400
        %v402 = vrot.slane %v268, 1
        %v403 = vrot.slane %v269, 1
        %v404 = vsel %vm326, %v402, %v403
        %v405 = vrot.slane %v270, 1
        %v406 = vsel %vm326, %v403, %v405
        %s407 = scalar_lea.vmem %s1, 4
        %v408 = vld [vmem:[%s407] sm:$0xf]
        %vm409 = vcmask 31744
        %v410 = vsel %vm409, %v329, 0
        %v412 = vsel %vm409, %v331, 0
        %v414 = vsel %vm409, %v334, 0
        %v416 = vsel %vm409, %v336, 0
        %v418 = vsel %vm409, %v339, 0
        %v420 = vsel %vm409, %v341, 0
        %v422 = vsel %vm409, %v344, 0
        %v424 = vsel %vm409, %v346, 0
        %v426 = vsel %vm409, %v349, 0
        %v428 = vsel %vm409, %v351, 0
        %v430 = vsel %vm409, %v354, 0
        %v432 = vsel %vm409, %v356, 0
        %v434 = vsel %vm409, %v359, 0
        %v436 = vsel %vm409, %v361, 0
        %v438 = vsel %vm409, %v364, 0
        %v440 = vsel %vm409, %v366, 0
        %v442 = vsel %vm409, %v369, 0
        %v444 = vsel %vm409, %v371, 0
        %v446 = vsel %vm409, %v374, 0
        %v448 = vsel %vm409, %v376, 0
        %v450 = vsel %vm409, %v379, 0
        %v452 = vsel %vm409, %v381, 0
        %v454 = vsel %vm409, %v384, 0
        %v456 = vsel %vm409, %v386, 0
        %v458 = vsel %vm409, %v389, 0
        %v460 = vsel %vm409, %v391, 0
        %v462 = vsel %vm409, %v394, 0
        %v464 = vsel %vm409, %v396, 0
        %v466 = vsel %vm409, %v399, 0
        %v468 = vsel %vm409, %v401, 0
        %v470 = vsel %vm409, %v404, 0
        %v472 = vsel %vm409, %v406, 0
        %vm474 = vcmask 1043456
        %v476 = vsel %vm474, %v408, 0
        %478 = vmatprep.subr.mxu0 0.0
        %479 = vmatpush1.msra.mxu0 0.0
        %480 = vmatprep.subr.mxu0 0.0
        %481 = vmatpush1.msra.mxu0 0.0
        %482 = vmatprep.subr.mxu0 0.0
        %483 = vmatpush1.msra.mxu0 0.0
        %484 = vmatprep.subr.mxu0 0.0
        %485 = vmatpush1.msra.mxu0 0.0
        %486 = vmatprep.subr.mxu0 0.0
        %487 = vmatpush1.msra.mxu0 0.0
        %488 = vmatprep.subr.mxu0 0.0
        %489 = vmatpush1.msra.mxu0 0.0
        %490 = vmatprep.subr.mxu0 0.0
        %491 = vmatpush1.msra.mxu0 0.0
        %492 = vmatprep.subr.mxu0 0.0
        %493 = vmatpush1.msra.mxu0 0.0
        %494 = vmatprep.subr.mxu0 0.0
        %495 = vmatpush1.msra.mxu0 0.0
        %496 = vmatprep.subr.mxu0 0.0
        %497 = vmatpush1.msra.mxu0 0.0
        %498 = vmatprep.subr.mxu0 0.0
        %499 = vmatpush1.msra.mxu0 0.0
        %500 = vmatprep.subr.mxu0 0.0
        %501 = vmatpush1.msra.mxu0 0.0
        %502 = vmatprep.subr.mxu0 0.0
        %503 = vmatpush1.msra.mxu0 0.0
        %504 = vmatprep.subr.mxu0 0.0
        %505 = vmatpush1.msra.mxu0 0.0
        %506 = vmatprep.subr.mxu0 0.0
        %507 = vmatpush1.msra.mxu0 0.0
        %508 = vmatprep.subr.mxu0 0.0
        %509 = vmatpush1.msra.mxu0 %v476
        %510 = vmatprep.subr.mxu0 0.0
        %511 = vmatpush2.msra.mxu0 0.0
        %512 = vmatprep.subr.mxu0 0.0
        %513 = vmatpush2.msra.mxu0 0.0
        %514 = vmatprep.subr.mxu0 0.0
        %515 = vmatpush2.msra.mxu0 0.0
        %516 = vmatprep.subr.mxu0 0.0
        %517 = vmatpush2.msra.mxu0 0.0
        %518 = vmatprep.subr.mxu0 0.0
        %519 = vmatpush2.msra.mxu0 0.0
        %520 = vmatprep.subr.mxu0 0.0
        %521 = vmatpush2.msra.mxu0 0.0
        %522 = vmatprep.subr.mxu0 0.0
        %523 = vmatpush2.msra.mxu0 0.0
        %524 = vmatprep.subr.mxu0 0.0
        %525 = vmatpush2.msra.mxu0 0.0
        %526 = vmatprep.subr.mxu0 0.0
        %527 = vmatpush2.msra.mxu0 0.0
        %528 = vmatprep.subr.mxu0 0.0
        %529 = vmatpush2.msra.mxu0 0.0
        %530 = vmatprep.subr.mxu0 0.0
        %531 = vmatpush2.msra.mxu0 0.0
        %532 = vmatprep.subr.mxu0 0.0
        %533 = vmatpush2.msra.mxu0 0.0
        %534 = vmatprep.subr.mxu0 0.0
        %535 = vmatpush2.msra.mxu0 0.0
        %536 = vmatprep.subr.mxu0 0.0
        %537 = vmatpush2.msra.mxu0 0.0
        %538 = vmatprep.subr.mxu0 0.0
        %539 = vmatpush2.msra.mxu0 0.0
        %540 = vmatprep.subr.mxu0 0.0
        %541 = vmatpush2.msra.mxu0 0.0
        %542 = vmatprep.mubr.f32.mxu0 0.0
        %543 = vmatmul.mubr.f32.gmra.mxu0 %v410
        %v544 = vpop.f32.mrf.mxu0
        %v545 = vadd.f32 0.0, %v544
        %v546 = vpop.f32.mrf.mxu0
        %547 = vmatprep.mubr.f32.mxu0 0.0
        %548 = vmatmul.mubr.f32.gmra.mxu0 %v412
        %v549 = vpop.f32.mrf.mxu0
        %v550 = vadd.f32 0.0, %v549
        %v551 = vpop.f32.mrf.mxu0
        %552 = vmatprep.mubr.f32.mxu0 0.0
        %553 = vmatmul.mubr.f32.gmra.mxu0 %v414
        %v554 = vpop.f32.mrf.mxu0
        %v555 = vadd.f32 0.0, %v554
        %v556 = vpop.f32.mrf.mxu0
        %557 = vmatprep.mubr.f32.mxu0 0.0
        %558 = vmatmul.mubr.f32.gmra.mxu0 %v416
        %v559 = vpop.f32.mrf.mxu0
        %v560 = vadd.f32 0.0, %v559
        %v561 = vpop.f32.mrf.mxu0
        %562 = vmatprep.mubr.f32.mxu0 0.0
        %563 = vmatmul.mubr.f32.gmra.mxu0 %v418
        %v564 = vpop.f32.mrf.mxu0
        %v565 = vadd.f32 0.0, %v564
        %v566 = vpop.f32.mrf.mxu0
        %567 = vmatprep.mubr.f32.mxu0 0.0
        %568 = vmatmul.mubr.f32.gmra.mxu0 %v420
        %v569 = vpop.f32.mrf.mxu0
        %v570 = vadd.f32 0.0, %v569
        %v571 = vpop.f32.mrf.mxu0
        %572 = vmatprep.mubr.f32.mxu0 0.0
        %573 = vmatmul.mubr.f32.gmra.mxu0 %v422
        %v574 = vpop.f32.mrf.mxu0
        %v575 = vadd.f32 0.0, %v574
        %v576 = vpop.f32.mrf.mxu0
        %577 = vmatprep.mubr.f32.mxu0 0.0
        %578 = vmatmul.mubr.f32.gmra.mxu0 %v424
        %v579 = vpop.f32.mrf.mxu0
        %v580 = vadd.f32 0.0, %v579
        %v581 = vpop.f32.mrf.mxu0
        %582 = vmatprep.mubr.f32.mxu0 0.0
        %583 = vmatmul.mubr.f32.gmra.mxu0 %v426
        %v584 = vpop.f32.mrf.mxu0
        %v585 = vadd.f32 0.0, %v584
        %v586 = vpop.f32.mrf.mxu0
        %587 = vmatprep.mubr.f32.mxu0 0.0
        %588 = vmatmul.mubr.f32.gmra.mxu0 %v428
        %v589 = vpop.f32.mrf.mxu0
        %v590 = vadd.f32 0.0, %v589
        %v591 = vpop.f32.mrf.mxu0
        %592 = vmatprep.mubr.f32.mxu0 0.0
        %593 = vmatmul.mubr.f32.gmra.mxu0 %v430
        %v594 = vpop.f32.mrf.mxu0
        %v595 = vadd.f32 0.0, %v594
        %v596 = vpop.f32.mrf.mxu0
        %597 = vmatprep.mubr.f32.mxu0 0.0
        %598 = vmatmul.mubr.f32.gmra.mxu0 %v432
        %v599 = vpop.f32.mrf.mxu0
        %v600 = vadd.f32 0.0, %v599
        %v601 = vpop.f32.mrf.mxu0
        %602 = vmatprep.mubr.f32.mxu0 0.0
        %603 = vmatmul.mubr.f32.gmra.mxu0 %v434
        %v604 = vpop.f32.mrf.mxu0
        %v605 = vadd.f32 0.0, %v604
        %v606 = vpop.f32.mrf.mxu0
        %607 = vmatprep.mubr.f32.mxu0 0.0
        %608 = vmatmul.mubr.f32.gmra.mxu0 %v436
        %v609 = vpop.f32.mrf.mxu0
        %v610 = vadd.f32 0.0, %v609
        %v611 = vpop.f32.mrf.mxu0
        %612 = vmatprep.mubr.f32.mxu0 0.0
        %613 = vmatmul.mubr.f32.gmra.mxu0 %v438
        %v614 = vpop.f32.mrf.mxu0
        %v615 = vadd.f32 0.0, %v614
        %v616 = vpop.f32.mrf.mxu0
        %617 = vmatprep.mubr.f32.mxu0 0.0
        %618 = vmatmul.mubr.f32.gmra.mxu0 %v440
        %v619 = vpop.f32.mrf.mxu0
        %v620 = vadd.f32 0.0, %v619
        %v621 = vpop.f32.mrf.mxu0
        %622 = vmatprep.mubr.f32.mxu0 0.0
        %623 = vmatmul.mubr.f32.gmra.mxu0 %v442
        %v624 = vpop.f32.mrf.mxu0
        %v625 = vadd.f32 0.0, %v624
        %v626 = vpop.f32.mrf.mxu0
        %627 = vmatprep.mubr.f32.mxu0 0.0
        %628 = vmatmul.mubr.f32.gmra.mxu0 %v444
        %v629 = vpop.f32.mrf.mxu0
        %v630 = vadd.f32 0.0, %v629
        %v631 = vpop.f32.mrf.mxu0
        %632 = vmatprep.mubr.f32.mxu0 0.0
        %633 = vmatmul.mubr.f32.gmra.mxu0 %v446
        %v634 = vpop.f32.mrf.mxu0
        %v635 = vadd.f32 0.0, %v634
        %v636 = vpop.f32.mrf.mxu0
        %637 = vmatprep.mubr.f32.mxu0 0.0
        %638 = vmatmul.mubr.f32.gmra.mxu0 %v448
        %v639 = vpop.f32.mrf.mxu0
        %v640 = vadd.f32 0.0, %v639
        %v641 = vpop.f32.mrf.mxu0
        %642 = vmatprep.mubr.f32.mxu0 0.0
        %643 = vmatmul.mubr.f32.gmra.mxu0 %v450
        %v644 = vpop.f32.mrf.mxu0
        %v645 = vadd.f32 0.0, %v644
        %v646 = vpop.f32.mrf.mxu0
        %647 = vmatprep.mubr.f32.mxu0 0.0
        %648 = vmatmul.mubr.f32.gmra.mxu0 %v452
        %v649 = vpop.f32.mrf.mxu0
        %v650 = vadd.f32 0.0, %v649
        %v651 = vpop.f32.mrf.mxu0
        %652 = vmatprep.mubr.f32.mxu0 0.0
        %653 = vmatmul.mubr.f32.gmra.mxu0 %v454
        %v654 = vpop.f32.mrf.mxu0
        %v655 = vadd.f32 0.0, %v654
        %v656 = vpop.f32.mrf.mxu0
        %657 = vmatprep.mubr.f32.mxu0 0.0
        %658 = vmatmul.mubr.f32.gmra.mxu0 %v456
        %v659 = vpop.f32.mrf.mxu0
        %v660 = vadd.f32 0.0, %v659
        %v661 = vpop.f32.mrf.mxu0
        %662 = vmatprep.mubr.f32.mxu0 0.0
        %663 = vmatmul.mubr.f32.gmra.mxu0 %v458
        %v664 = vpop.f32.mrf.mxu0
        %v665 = vadd.f32 0.0, %v664
        %v666 = vpop.f32.mrf.mxu0
        %667 = vmatprep.mubr.f32.mxu0 0.0
        %668 = vmatmul.mubr.f32.gmra.mxu0 %v460
        %v669 = vpop.f32.mrf.mxu0
        %v670 = vadd.f32 0.0, %v669
        %v671 = vpop.f32.mrf.mxu0
        %672 = vmatprep.mubr.f32.mxu0 0.0
        %673 = vmatmul.mubr.f32.gmra.mxu0 %v462
        %v674 = vpop.f32.mrf.mxu0
        %v675 = vadd.f32 0.0, %v674
        %v676 = vpop.f32.mrf.mxu0
        %677 = vmatprep.mubr.f32.mxu0 0.0
        %678 = vmatmul.mubr.f32.gmra.mxu0 %v464
        %v679 = vpop.f32.mrf.mxu0
        %v680 = vadd.f32 0.0, %v679
        %v681 = vpop.f32.mrf.mxu0
        %682 = vmatprep.mubr.f32.mxu0 0.0
        %683 = vmatmul.mubr.f32.gmra.mxu0 %v466
        %v684 = vpop.f32.mrf.mxu0
        %v685 = vadd.f32 0.0, %v684
        %v686 = vpop.f32.mrf.mxu0
        %687 = vmatprep.mubr.f32.mxu0 0.0
        %688 = vmatmul.mubr.f32.gmra.mxu0 %v468
        %v689 = vpop.f32.mrf.mxu0
        %v690 = vadd.f32 0.0, %v689
        %v691 = vpop.f32.mrf.mxu0
        %692 = vmatprep.mubr.f32.mxu0 0.0
        %693 = vmatmul.mubr.f32.gmra.mxu0 %v470
        %v694 = vpop.f32.mrf.mxu0
        %v695 = vadd.f32 0.0, %v694
        %v696 = vpop.f32.mrf.mxu0
        %697 = vmatprep.mubr.f32.mxu0 0.0
        %698 = vmatmul.mubr.f32.gmra.mxu0 %v472
        %v699 = vpop.f32.mrf.mxu0
        %v700 = vadd.f32 0.0, %v699
        %v701 = vpop.f32.mrf.mxu0
        %702 = vdwg.mxu0
        %v703 = vsel %vm409, %v223, 0
        %v705 = vsel %vm409, %v224, 0
        %v707 = vsel %vm409, %v226, 0
        %v709 = vsel %vm409, %v227, 0
        %v711 = vsel %vm409, %v229, 0
        %v713 = vsel %vm409, %v230, 0
        %v715 = vsel %vm409, %v232, 0
        %v717 = vsel %vm409, %v233, 0
        %v719 = vsel %vm409, %v235, 0
        %v721 = vsel %vm409, %v236, 0
        %v723 = vsel %vm409, %v238, 0
        %v725 = vsel %vm409, %v239, 0
        %v727 = vsel %vm409, %v241, 0
        %v729 = vsel %vm409, %v242, 0
        %v731 = vsel %vm409, %v244, 0
        %v733 = vsel %vm409, %v245, 0
        %v735 = vsel %vm409, %v247, 0
        %v737 = vsel %vm409, %v248, 0
        %v739 = vsel %vm409, %v250, 0
        %v741 = vsel %vm409, %v251, 0
        %v743 = vsel %vm409, %v253, 0
        %v745 = vsel %vm409, %v254, 0
        %v747 = vsel %vm409, %v256, 0
        %v749 = vsel %vm409, %v257, 0
        %v751 = vsel %vm409, %v259, 0
        %v753 = vsel %vm409, %v260, 0
        %v755 = vsel %vm409, %v262, 0
        %v757 = vsel %vm409, %v263, 0
        %v759 = vsel %vm409, %v265, 0
        %v761 = vsel %vm409, %v266, 0
        %v763 = vsel %vm409, %v268, 0
        %v765 = vsel %vm409, %v269, 0
        %v768 = vsel %vm474, %v277, 0
        %770 = vmatprep.subr.mxu0 0.0
        %771 = vmatpush1.msra.mxu0 0.0
        %772 = vmatprep.subr.mxu0 0.0
        %773 = vmatpush1.msra.mxu0 0.0
        %774 = vmatprep.subr.mxu0 0.0
        %775 = vmatpush1.msra.mxu0 0.0
        %776 = vmatprep.subr.mxu0 0.0
        %777 = vmatpush1.msra.mxu0 0.0
        %778 = vmatprep.subr.mxu0 0.0
        %779 = vmatpush1.msra.mxu0 0.0
        %780 = vmatprep.subr.mxu0 0.0
        %781 = vmatpush1.msra.mxu0 0.0
        %782 = vmatprep.subr.mxu0 0.0
        %783 = vmatpush1.msra.mxu0 0.0
        %784 = vmatprep.subr.mxu0 0.0
        %785 = vmatpush1.msra.mxu0 0.0
        %786 = vmatprep.subr.mxu0 0.0
        %787 = vmatpush1.msra.mxu0 0.0
        %788 = vmatprep.subr.mxu0 0.0
        %789 = vmatpush1.msra.mxu0 0.0
        %790 = vmatprep.subr.mxu0 0.0
        %791 = vmatpush1.msra.mxu0 0.0
        %792 = vmatprep.subr.mxu0 0.0
        %793 = vmatpush1.msra.mxu0 0.0
        %794 = vmatprep.subr.mxu0 0.0
        %795 = vmatpush1.msra.mxu0 0.0
        %796 = vmatprep.subr.mxu0 0.0
        %797 = vmatpush1.msra.mxu0 0.0
        %798 = vmatprep.subr.mxu0 0.0
        %799 = vmatpush1.msra.mxu0 0.0
        %800 = vmatprep.subr.mxu0 0.0
        %801 = vmatpush1.msra.mxu0 %v768
        %802 = vmatprep.subr.mxu0 0.0
        %803 = vmatpush2.msra.mxu0 0.0
        %804 = vmatprep.subr.mxu0 0.0
        %805 = vmatpush2.msra.mxu0 0.0
        %806 = vmatprep.subr.mxu0 0.0
        %807 = vmatpush2.msra.mxu0 0.0
        %808 = vmatprep.subr.mxu0 0.0
        %809 = vmatpush2.msra.mxu0 0.0
        %810 = vmatprep.subr.mxu0 0.0
        %811 = vmatpush2.msra.mxu0 0.0
        %812 = vmatprep.subr.mxu0 0.0
        %813 = vmatpush2.msra.mxu0 0.0
        %814 = vmatprep.subr.mxu0 0.0
        %815 = vmatpush2.msra.mxu0 0.0
        %816 = vmatprep.subr.mxu0 0.0
        %817 = vmatpush2.msra.mxu0 0.0
        %818 = vmatprep.subr.mxu0 0.0
        %819 = vmatpush2.msra.mxu0 0.0
        %820 = vmatprep.subr.mxu0 0.0
        %821 = vmatpush2.msra.mxu0 0.0
        %822 = vmatprep.subr.mxu0 0.0
        %823 = vmatpush2.msra.mxu0 0.0
        %824 = vmatprep.subr.mxu0 0.0
        %825 = vmatpush2.msra.mxu0 0.0
        %826 = vmatprep.subr.mxu0 0.0
        %827 = vmatpush2.msra.mxu0 0.0
        %828 = vmatprep.subr.mxu0 0.0
        %829 = vmatpush2.msra.mxu0 0.0
        %830 = vmatprep.subr.mxu0 0.0
        %831 = vmatpush2.msra.mxu0 0.0
        %832 = vmatprep.subr.mxu0 0.0
        %833 = vmatpush2.msra.mxu0 0.0
        %834 = vmatprep.mubr.f32.mxu0 0.0
        %835 = vmatmul.mubr.f32.gmra.mxu0 %v703
        %v836 = vpop.f32.mrf.mxu0
        %v837 = vadd.f32 %v545, %v836
        %v838 = vpop.f32.mrf.mxu0
        %839 = vmatprep.mubr.f32.mxu0 0.0
        %840 = vmatmul.mubr.f32.gmra.mxu0 %v705
        %v841 = vpop.f32.mrf.mxu0
        %v842 = vadd.f32 %v550, %v841
        %v843 = vpop.f32.mrf.mxu0
        %844 = vmatprep.mubr.f32.mxu0 0.0
        %845 = vmatmul.mubr.f32.gmra.mxu0 %v707
        %v846 = vpop.f32.mrf.mxu0
        %v847 = vadd.f32 %v555, %v846
        %v848 = vpop.f32.mrf.mxu0
        %849 = vmatprep.mubr.f32.mxu0 0.0
        %850 = vmatmul.mubr.f32.gmra.mxu0 %v709
        %v851 = vpop.f32.mrf.mxu0
        %v852 = vadd.f32 %v560, %v851
        %v853 = vpop.f32.mrf.mxu0
        %854 = vmatprep.mubr.f32.mxu0 0.0
        %855 = vmatmul.mubr.f32.gmra.mxu0 %v711
        %v856 = vpop.f32.mrf.mxu0
        %v857 = vadd.f32 %v565, %v856
        %v858 = vpop.f32.mrf.mxu0
        %859 = vmatprep.mubr.f32.mxu0 0.0
        %860 = vmatmul.mubr.f32.gmra.mxu0 %v713
        %v861 = vpop.f32.mrf.mxu0
        %v862 = vadd.f32 %v570, %v861
        %v863 = vpop.f32.mrf.mxu0
        %864 = vmatprep.mubr.f32.mxu0 0.0
        %865 = vmatmul.mubr.f32.gmra.mxu0 %v715
        %v866 = vpop.f32.mrf.mxu0
        %v867 = vadd.f32 %v575, %v866
        %v868 = vpop.f32.mrf.mxu0
        %869 = vmatprep.mubr.f32.mxu0 0.0
        %870 = vmatmul.mubr.f32.gmra.mxu0 %v717
        %v871 = vpop.f32.mrf.mxu0
        %v872 = vadd.f32 %v580, %v871
        %v873 = vpop.f32.mrf.mxu0
        %874 = vmatprep.mubr.f32.mxu0 0.0
        %875 = vmatmul.mubr.f32.gmra.mxu0 %v719
        %v876 = vpop.f32.mrf.mxu0
        %v877 = vadd.f32 %v585, %v876
        %v878 = vpop.f32.mrf.mxu0
        %879 = vmatprep.mubr.f32.mxu0 0.0
        %880 = vmatmul.mubr.f32.gmra.mxu0 %v721
        %v881 = vpop.f32.mrf.mxu0
        %v882 = vadd.f32 %v590, %v881
        %v883 = vpop.f32.mrf.mxu0
        %884 = vmatprep.mubr.f32.mxu0 0.0
        %885 = vmatmul.mubr.f32.gmra.mxu0 %v723
        %v886 = vpop.f32.mrf.mxu0
        %v887 = vadd.f32 %v595, %v886
        %v888 = vpop.f32.mrf.mxu0
        %889 = vmatprep.mubr.f32.mxu0 0.0
        %890 = vmatmul.mubr.f32.gmra.mxu0 %v725
        %v891 = vpop.f32.mrf.mxu0
        %v892 = vadd.f32 %v600, %v891
        %v893 = vpop.f32.mrf.mxu0
        %894 = vmatprep.mubr.f32.mxu0 0.0
        %895 = vmatmul.mubr.f32.gmra.mxu0 %v727
        %v896 = vpop.f32.mrf.mxu0
        %v897 = vadd.f32 %v605, %v896
        %v898 = vpop.f32.mrf.mxu0
        %899 = vmatprep.mubr.f32.mxu0 0.0
        %900 = vmatmul.mubr.f32.gmra.mxu0 %v729
        %v901 = vpop.f32.mrf.mxu0
        %v902 = vadd.f32 %v610, %v901
        %v903 = vpop.f32.mrf.mxu0
        %904 = vmatprep.mubr.f32.mxu0 0.0
        %905 = vmatmul.mubr.f32.gmra.mxu0 %v731
        %v906 = vpop.f32.mrf.mxu0
        %v907 = vadd.f32 %v615, %v906
        %v908 = vpop.f32.mrf.mxu0
        %909 = vmatprep.mubr.f32.mxu0 0.0
        %910 = vmatmul.mubr.f32.gmra.mxu0 %v733
        %v911 = vpop.f32.mrf.mxu0
        %v912 = vadd.f32 %v620, %v911
        %v913 = vpop.f32.mrf.mxu0
        %914 = vmatprep.mubr.f32.mxu0 0.0
        %915 = vmatmul.mubr.f32.gmra.mxu0 %v735
        %v916 = vpop.f32.mrf.mxu0
        %v917 = vadd.f32 %v625, %v916
        %v918 = vpop.f32.mrf.mxu0
        %919 = vmatprep.mubr.f32.mxu0 0.0
        %920 = vmatmul.mubr.f32.gmra.mxu0 %v737
        %v921 = vpop.f32.mrf.mxu0
        %v922 = vadd.f32 %v630, %v921
        %v923 = vpop.f32.mrf.mxu0
        %924 = vmatprep.mubr.f32.mxu0 0.0
        %925 = vmatmul.mubr.f32.gmra.mxu0 %v739
        %v926 = vpop.f32.mrf.mxu0
        %v927 = vadd.f32 %v635, %v926
        %v928 = vpop.f32.mrf.mxu0
        %929 = vmatprep.mubr.f32.mxu0 0.0
        %930 = vmatmul.mubr.f32.gmra.mxu0 %v741
        %v931 = vpop.f32.mrf.mxu0
        %v932 = vadd.f32 %v640, %v931
        %v933 = vpop.f32.mrf.mxu0
        %934 = vmatprep.mubr.f32.mxu0 0.0
        %935 = vmatmul.mubr.f32.gmra.mxu0 %v743
        %v936 = vpop.f32.mrf.mxu0
        %v937 = vadd.f32 %v645, %v936
        %v938 = vpop.f32.mrf.mxu0
        %939 = vmatprep.mubr.f32.mxu0 0.0
        %940 = vmatmul.mubr.f32.gmra.mxu0 %v745
        %v941 = vpop.f32.mrf.mxu0
        %v942 = vadd.f32 %v650, %v941
        %v943 = vpop.f32.mrf.mxu0
        %944 = vmatprep.mubr.f32.mxu0 0.0
        %945 = vmatmul.mubr.f32.gmra.mxu0 %v747
        %v946 = vpop.f32.mrf.mxu0
        %v947 = vadd.f32 %v655, %v946
        %v948 = vpop.f32.mrf.mxu0
        %949 = vmatprep.mubr.f32.mxu0 0.0
        %950 = vmatmul.mubr.f32.gmra.mxu0 %v749
        %v951 = vpop.f32.mrf.mxu0
        %v952 = vadd.f32 %v660, %v951
        %v953 = vpop.f32.mrf.mxu0
        %954 = vmatprep.mubr.f32.mxu0 0.0
        %955 = vmatmul.mubr.f32.gmra.mxu0 %v751
        %v956 = vpop.f32.mrf.mxu0
        %v957 = vadd.f32 %v665, %v956
        %v958 = vpop.f32.mrf.mxu0
        %959 = vmatprep.mubr.f32.mxu0 0.0
        %960 = vmatmul.mubr.f32.gmra.mxu0 %v753
        %v961 = vpop.f32.mrf.mxu0
        %v962 = vadd.f32 %v670, %v961
        %v963 = vpop.f32.mrf.mxu0
        %964 = vmatprep.mubr.f32.mxu0 0.0
        %965 = vmatmul.mubr.f32.gmra.mxu0 %v755
        %v966 = vpop.f32.mrf.mxu0
        %v967 = vadd.f32 %v675, %v966
        %v968 = vpop.f32.mrf.mxu0
        %969 = vmatprep.mubr.f32.mxu0 0.0
        %970 = vmatmul.mubr.f32.gmra.mxu0 %v757
        %v971 = vpop.f32.mrf.mxu0
        %v972 = vadd.f32 %v680, %v971
        %v973 = vpop.f32.mrf.mxu0
        %974 = vmatprep.mubr.f32.mxu0 0.0
        %975 = vmatmul.mubr.f32.gmra.mxu0 %v759
        %v976 = vpop.f32.mrf.mxu0
        %v977 = vadd.f32 %v685, %v976
        %v978 = vpop.f32.mrf.mxu0
        %979 = vmatprep.mubr.f32.mxu0 0.0
        %980 = vmatmul.mubr.f32.gmra.mxu0 %v761
        %v981 = vpop.f32.mrf.mxu0
        %v982 = vadd.f32 %v690, %v981
        %v983 = vpop.f32.mrf.mxu0
        %984 = vmatprep.mubr.f32.mxu0 0.0
        %985 = vmatmul.mubr.f32.gmra.mxu0 %v763
        %v986 = vpop.f32.mrf.mxu0
        %v987 = vadd.f32 %v695, %v986
        %v988 = vpop.f32.mrf.mxu0
        %989 = vmatprep.mubr.f32.mxu0 0.0
        %990 = vmatmul.mubr.f32.gmra.mxu0 %v765
        %v991 = vpop.f32.mrf.mxu0
        %v992 = vadd.f32 %v700, %v991
        %v993 = vpop.f32.mrf.mxu0
        %994 = vdwg.mxu0
        %vm995 = vcmask 1045504
        %v996 = vrot.slane %v223, 2
        %v997 = vrot.slane %v224, 2
        %v998 = vsel %vm995, %v996, %v997
        %v999 = vrot.slane %v225, 2
        %v1000 = vsel %vm995, %v997, %v999
        %v1001 = vrot.slane %v226, 2
        %v1002 = vrot.slane %v227, 2
        %v1003 = vsel %vm995, %v1001, %v1002
        %v1004 = vrot.slane %v228, 2
        %v1005 = vsel %vm995, %v1002, %v1004
        %v1006 = vrot.slane %v229, 2
        %v1007 = vrot.slane %v230, 2
        %v1008 = vsel %vm995, %v1006, %v1007
        %v1009 = vrot.slane %v231, 2
        %v1010 = vsel %vm995, %v1007, %v1009
        %v1011 = vrot.slane %v232, 2
        %v1012 = vrot.slane %v233, 2
        %v1013 = vsel %vm995, %v1011, %v1012
        %v1014 = vrot.slane %v234, 2
        %v1015 = vsel %vm995, %v1012, %v1014
        %v1016 = vrot.slane %v235, 2
        %v1017 = vrot.slane %v236, 2
        %v1018 = vsel %vm995, %v1016, %v1017
        %v1019 = vrot.slane %v237, 2
        %v1020 = vsel %vm995, %v1017, %v1019
        %v1021 = vrot.slane %v238, 2
        %v1022 = vrot.slane %v239, 2
        %v1023 = vsel %vm995, %v1021, %v1022
        %v1024 = vrot.slane %v240, 2
        %v1025 = vsel %vm995, %v1022, %v1024
        %v1026 = vrot.slane %v241, 2
        %v1027 = vrot.slane %v242, 2
        %v1028 = vsel %vm995, %v1026, %v1027
        %v1029 = vrot.slane %v243, 2
        %v1030 = vsel %vm995, %v1027, %v1029
        %v1031 = vrot.slane %v244, 2
        %v1032 = vrot.slane %v245, 2
        %v1033 = vsel %vm995, %v1031, %v1032
        %v1034 = vrot.slane %v246, 2
        %v1035 = vsel %vm995, %v1032, %v1034
        %v1036 = vrot.slane %v247, 2
        %v1037 = vrot.slane %v248, 2
        %v1038 = vsel %vm995, %v1036, %v1037
        %v1039 = vrot.slane %v249, 2
        %v1040 = vsel %vm995, %v1037, %v1039
        %v1041 = vrot.slane %v250, 2
        %v1042 = vrot.slane %v251, 2
        %v1043 = vsel %vm995, %v1041, %v1042
        %v1044 = vrot.slane %v252, 2
        %v1045 = vsel %vm995, %v1042, %v1044
        %v1046 = vrot.slane %v253, 2
        %v1047 = vrot.slane %v254, 2
        %v1048 = vsel %vm995, %v1046, %v1047
        %v1049 = vrot.slane %v255, 2
        %v1050 = vsel %vm995, %v1047, %v1049
        %v1051 = vrot.slane %v256, 2
        %v1052 = vrot.slane %v257, 2
        %v1053 = vsel %vm995, %v1051, %v1052
        %v1054 = vrot.slane %v258, 2
        %v1055 = vsel %vm995, %v1052, %v1054
        %v1056 = vrot.slane %v259, 2
        %v1057 = vrot.slane %v260, 2
        %v1058 = vsel %vm995, %v1056, %v1057
        %v1059 = vrot.slane %v261, 2
        %v1060 = vsel %vm995, %v1057, %v1059
        %v1061 = vrot.slane %v262, 2
        %v1062 = vrot.slane %v263, 2
        %v1063 = vsel %vm995, %v1061, %v1062
        %v1064 = vrot.slane %v264, 2
        %v1065 = vsel %vm995, %v1062, %v1064
        %v1066 = vrot.slane %v265, 2
        %v1067 = vrot.slane %v266, 2
        %v1068 = vsel %vm995, %v1066, %v1067
        %v1069 = vrot.slane %v267, 2
        %v1070 = vsel %vm995, %v1067, %v1069
        %v1071 = vrot.slane %v268, 2
        %v1072 = vrot.slane %v269, 2
        %v1073 = vsel %vm995, %v1071, %v1072
        %v1074 = vrot.slane %v270, 2
        %v1075 = vsel %vm995, %v1072, %v1074
        %s1076 = scalar_lea.vmem %s1, 8
        %v1077 = vld [vmem:[%s1076] sm:$0xf]
        %v1078 = vsel %vm409, %v998, 0
        %v1080 = vsel %vm409, %v1000, 0
        %v1082 = vsel %vm409, %v1003, 0
        %v1084 = vsel %vm409, %v1005, 0
        %v1086 = vsel %vm409, %v1008, 0
        %v1088 = vsel %vm409, %v1010, 0
        %v1090 = vsel %vm409, %v1013, 0
        %v1092 = vsel %vm409, %v1015, 0
        %v1094 = vsel %vm409, %v1018, 0
        %v1096 = vsel %vm409, %v1020, 0
        %v1098 = vsel %vm409, %v1023, 0
        %v1100 = vsel %vm409, %v1025, 0
        %v1102 = vsel %vm409, %v1028, 0
        %v1104 = vsel %vm409, %v1030, 0
        %v1106 = vsel %vm409, %v1033, 0
        %v1108 = vsel %vm409, %v1035, 0
        %v1110 = vsel %vm409, %v1038, 0
        %v1112 = vsel %vm409, %v1040, 0
        %v1114 = vsel %vm409, %v1043, 0
        %v1116 = vsel %vm409, %v1045, 0
        %v1118 = vsel %vm409, %v1048, 0
        %v1120 = vsel %vm409, %v1050, 0
        %v1122 = vsel %vm409, %v1053, 0
        %v1124 = vsel %vm409, %v1055, 0
        %v1126 = vsel %vm409, %v1058, 0
        %v1128 = vsel %vm409, %v1060, 0
        %v1130 = vsel %vm409, %v1063, 0
        %v1132 = vsel %vm409, %v1065, 0
        %v1134 = vsel %vm409, %v1068, 0
        %v1136 = vsel %vm409, %v1070, 0
        %v1138 = vsel %vm409, %v1073, 0
        %v1140 = vsel %vm409, %v1075, 0
        %v1143 = vsel %vm474, %v1077, 0
        %1145 = vmatprep.subr.mxu0 0.0
        %1146 = vmatpush1.msra.mxu0 0.0
        %1147 = vmatprep.subr.mxu0 0.0
        %1148 = vmatpush1.msra.mxu0 0.0
        %1149 = vmatprep.subr.mxu0 0.0
        %1150 = vmatpush1.msra.mxu0 0.0
        %1151 = vmatprep.subr.mxu0 0.0
        %1152 = vmatpush1.msra.mxu0 0.0
        %1153 = vmatprep.subr.mxu0 0.0
        %1154 = vmatpush1.msra.mxu0 0.0
        %1155 = vmatprep.subr.mxu0 0.0
        %1156 = vmatpush1.msra.mxu0 0.0
        %1157 = vmatprep.subr.mxu0 0.0
        %1158 = vmatpush1.msra.mxu0 0.0
        %1159 = vmatprep.subr.mxu0 0.0
        %1160 = vmatpush1.msra.mxu0 0.0
        %1161 = vmatprep.subr.mxu0 0.0
        %1162 = vmatpush1.msra.mxu0 0.0
        %1163 = vmatprep.subr.mxu0 0.0
        %1164 = vmatpush1.msra.mxu0 0.0
        %1165 = vmatprep.subr.mxu0 0.0
        %1166 = vmatpush1.msra.mxu0 0.0
        %1167 = vmatprep.subr.mxu0 0.0
        %1168 = vmatpush1.msra.mxu0 0.0
        %1169 = vmatprep.subr.mxu0 0.0
        %1170 = vmatpush1.msra.mxu0 0.0
        %1171 = vmatprep.subr.mxu0 0.0
        %1172 = vmatpush1.msra.mxu0 0.0
        %1173 = vmatprep.subr.mxu0 0.0
        %1174 = vmatpush1.msra.mxu0 0.0
        %1175 = vmatprep.subr.mxu0 0.0
        %1176 = vmatpush1.msra.mxu0 %v1143
        %1177 = vmatprep.subr.mxu0 0.0
        %1178 = vmatpush2.msra.mxu0 0.0
        %1179 = vmatprep.subr.mxu0 0.0
        %1180 = vmatpush2.msra.mxu0 0.0
        %1181 = vmatprep.subr.mxu0 0.0
        %1182 = vmatpush2.msra.mxu0 0.0
        %1183 = vmatprep.subr.mxu0 0.0
        %1184 = vmatpush2.msra.mxu0 0.0
        %1185 = vmatprep.subr.mxu0 0.0
        %1186 = vmatpush2.msra.mxu0 0.0
        %1187 = vmatprep.subr.mxu0 0.0
        %1188 = vmatpush2.msra.mxu0 0.0
        %1189 = vmatprep.subr.mxu0 0.0
        %1190 = vmatpush2.msra.mxu0 0.0
        %1191 = vmatprep.subr.mxu0 0.0
        %1192 = vmatpush2.msra.mxu0 0.0
        %1193 = vmatprep.subr.mxu0 0.0
        %1194 = vmatpush2.msra.mxu0 0.0
        %1195 = vmatprep.subr.mxu0 0.0
        %1196 = vmatpush2.msra.mxu0 0.0
        %1197 = vmatprep.subr.mxu0 0.0
        %1198 = vmatpush2.msra.mxu0 0.0
        %1199 = vmatprep.subr.mxu0 0.0
        %1200 = vmatpush2.msra.mxu0 0.0
        %1201 = vmatprep.subr.mxu0 0.0
        %1202 = vmatpush2.msra.mxu0 0.0
        %1203 = vmatprep.subr.mxu0 0.0
        %1204 = vmatpush2.msra.mxu0 0.0
        %1205 = vmatprep.subr.mxu0 0.0
        %1206 = vmatpush2.msra.mxu0 0.0
        %1207 = vmatprep.subr.mxu0 0.0
        %1208 = vmatpush2.msra.mxu0 0.0
        %1209 = vmatprep.mubr.f32.mxu0 0.0
        %1210 = vmatmul.mubr.f32.gmra.mxu0 %v1078
        %v1211 = vpop.f32.mrf.mxu0
        %v1212 = vadd.f32 0.0, %v1211
        %v1213 = vpop.f32.mrf.mxu0
        %1214 = vmatprep.mubr.f32.mxu0 0.0
        %1215 = vmatmul.mubr.f32.gmra.mxu0 %v1080
        %v1216 = vpop.f32.mrf.mxu0
        %v1217 = vadd.f32 0.0, %v1216
        %v1218 = vpop.f32.mrf.mxu0
        %1219 = vmatprep.mubr.f32.mxu0 0.0
        %1220 = vmatmul.mubr.f32.gmra.mxu0 %v1082
        %v1221 = vpop.f32.mrf.mxu0
        %v1222 = vadd.f32 0.0, %v1221
        %v1223 = vpop.f32.mrf.mxu0
        %1224 = vmatprep.mubr.f32.mxu0 0.0
        %1225 = vmatmul.mubr.f32.gmra.mxu0 %v1084
        %v1226 = vpop.f32.mrf.mxu0
        %v1227 = vadd.f32 0.0, %v1226
        %v1228 = vpop.f32.mrf.mxu0
        %1229 = vmatprep.mubr.f32.mxu0 0.0
        %1230 = vmatmul.mubr.f32.gmra.mxu0 %v1086
        %v1231 = vpop.f32.mrf.mxu0
        %v1232 = vadd.f32 0.0, %v1231
        %v1233 = vpop.f32.mrf.mxu0
        %1234 = vmatprep.mubr.f32.mxu0 0.0
        %1235 = vmatmul.mubr.f32.gmra.mxu0 %v1088
        %v1236 = vpop.f32.mrf.mxu0
        %v1237 = vadd.f32 0.0, %v1236
        %v1238 = vpop.f32.mrf.mxu0
        %1239 = vmatprep.mubr.f32.mxu0 0.0
        %1240 = vmatmul.mubr.f32.gmra.mxu0 %v1090
        %v1241 = vpop.f32.mrf.mxu0
        %v1242 = vadd.f32 0.0, %v1241
        %v1243 = vpop.f32.mrf.mxu0
        %1244 = vmatprep.mubr.f32.mxu0 0.0
        %1245 = vmatmul.mubr.f32.gmra.mxu0 %v1092
        %v1246 = vpop.f32.mrf.mxu0
        %v1247 = vadd.f32 0.0, %v1246
        %v1248 = vpop.f32.mrf.mxu0
        %1249 = vmatprep.mubr.f32.mxu0 0.0
        %1250 = vmatmul.mubr.f32.gmra.mxu0 %v1094
        %v1251 = vpop.f32.mrf.mxu0
        %v1252 = vadd.f32 0.0, %v1251
        %v1253 = vpop.f32.mrf.mxu0
        %1254 = vmatprep.mubr.f32.mxu0 0.0
        %1255 = vmatmul.mubr.f32.gmra.mxu0 %v1096
        %v1256 = vpop.f32.mrf.mxu0
        %v1257 = vadd.f32 0.0, %v1256
        %v1258 = vpop.f32.mrf.mxu0
        %1259 = vmatprep.mubr.f32.mxu0 0.0
        %1260 = vmatmul.mubr.f32.gmra.mxu0 %v1098
        %v1261 = vpop.f32.mrf.mxu0
        %v1262 = vadd.f32 0.0, %v1261
        %v1263 = vpop.f32.mrf.mxu0
        %1264 = vmatprep.mubr.f32.mxu0 0.0
        %1265 = vmatmul.mubr.f32.gmra.mxu0 %v1100
        %v1266 = vpop.f32.mrf.mxu0
        %v1267 = vadd.f32 0.0, %v1266
        %v1268 = vpop.f32.mrf.mxu0
        %1269 = vmatprep.mubr.f32.mxu0 0.0
        %1270 = vmatmul.mubr.f32.gmra.mxu0 %v1102
        %v1271 = vpop.f32.mrf.mxu0
        %v1272 = vadd.f32 0.0, %v1271
        %v1273 = vpop.f32.mrf.mxu0
        %1274 = vmatprep.mubr.f32.mxu0 0.0
        %1275 = vmatmul.mubr.f32.gmra.mxu0 %v1104
        %v1276 = vpop.f32.mrf.mxu0
        %v1277 = vadd.f32 0.0, %v1276
        %v1278 = vpop.f32.mrf.mxu0
        %1279 = vmatprep.mubr.f32.mxu0 0.0
        %1280 = vmatmul.mubr.f32.gmra.mxu0 %v1106
        %v1281 = vpop.f32.mrf.mxu0
        %v1282 = vadd.f32 0.0, %v1281
        %v1283 = vpop.f32.mrf.mxu0
        %1284 = vmatprep.mubr.f32.mxu0 0.0
        %1285 = vmatmul.mubr.f32.gmra.mxu0 %v1108
        %v1286 = vpop.f32.mrf.mxu0
        %v1287 = vadd.f32 0.0, %v1286
        %v1288 = vpop.f32.mrf.mxu0
        %1289 = vmatprep.mubr.f32.mxu0 0.0
        %1290 = vmatmul.mubr.f32.gmra.mxu0 %v1110
        %v1291 = vpop.f32.mrf.mxu0
        %v1292 = vadd.f32 0.0, %v1291
        %v1293 = vpop.f32.mrf.mxu0
        %1294 = vmatprep.mubr.f32.mxu0 0.0
        %1295 = vmatmul.mubr.f32.gmra.mxu0 %v1112
        %v1296 = vpop.f32.mrf.mxu0
        %v1297 = vadd.f32 0.0, %v1296
        %v1298 = vpop.f32.mrf.mxu0
        %1299 = vmatprep.mubr.f32.mxu0 0.0
        %1300 = vmatmul.mubr.f32.gmra.mxu0 %v1114
        %v1301 = vpop.f32.mrf.mxu0
        %v1302 = vadd.f32 0.0, %v1301
        %v1303 = vpop.f32.mrf.mxu0
        %1304 = vmatprep.mubr.f32.mxu0 0.0
        %1305 = vmatmul.mubr.f32.gmra.mxu0 %v1116
        %v1306 = vpop.f32.mrf.mxu0
        %v1307 = vadd.f32 0.0, %v1306
        %v1308 = vpop.f32.mrf.mxu0
        %1309 = vmatprep.mubr.f32.mxu0 0.0
        %1310 = vmatmul.mubr.f32.gmra.mxu0 %v1118
        %v1311 = vpop.f32.mrf.mxu0
        %v1312 = vadd.f32 0.0, %v1311
        %v1313 = vpop.f32.mrf.mxu0
        %1314 = vmatprep.mubr.f32.mxu0 0.0
        %1315 = vmatmul.mubr.f32.gmra.mxu0 %v1120
        %v1316 = vpop.f32.mrf.mxu0
        %v1317 = vadd.f32 0.0, %v1316
        %v1318 = vpop.f32.mrf.mxu0
        %1319 = vmatprep.mubr.f32.mxu0 0.0
        %1320 = vmatmul.mubr.f32.gmra.mxu0 %v1122
        %v1321 = vpop.f32.mrf.mxu0
        %v1322 = vadd.f32 0.0, %v1321
        %v1323 = vpop.f32.mrf.mxu0
        %1324 = vmatprep.mubr.f32.mxu0 0.0
        %1325 = vmatmul.mubr.f32.gmra.mxu0 %v1124
        %v1326 = vpop.f32.mrf.mxu0
        %v1327 = vadd.f32 0.0, %v1326
        %v1328 = vpop.f32.mrf.mxu0
        %1329 = vmatprep.mubr.f32.mxu0 0.0
        %1330 = vmatmul.mubr.f32.gmra.mxu0 %v1126
        %v1331 = vpop.f32.mrf.mxu0
        %v1332 = vadd.f32 0.0, %v1331
        %v1333 = vpop.f32.mrf.mxu0
        %1334 = vmatprep.mubr.f32.mxu0 0.0
        %1335 = vmatmul.mubr.f32.gmra.mxu0 %v1128
        %v1336 = vpop.f32.mrf.mxu0
        %v1337 = vadd.f32 0.0, %v1336
        %v1338 = vpop.f32.mrf.mxu0
        %1339 = vmatprep.mubr.f32.mxu0 0.0
        %1340 = vmatmul.mubr.f32.gmra.mxu0 %v1130
        %v1341 = vpop.f32.mrf.mxu0
        %v1342 = vadd.f32 0.0, %v1341
        %v1343 = vpop.f32.mrf.mxu0
        %1344 = vmatprep.mubr.f32.mxu0 0.0
        %1345 = vmatmul.mubr.f32.gmra.mxu0 %v1132
        %v1346 = vpop.f32.mrf.mxu0
        %v1347 = vadd.f32 0.0, %v1346
        %v1348 = vpop.f32.mrf.mxu0
        %1349 = vmatprep.mubr.f32.mxu0 0.0
        %1350 = vmatmul.mubr.f32.gmra.mxu0 %v1134
        %v1351 = vpop.f32.mrf.mxu0
        %v1352 = vadd.f32 0.0, %v1351
        %v1353 = vpop.f32.mrf.mxu0
        %1354 = vmatprep.mubr.f32.mxu0 0.0
        %1355 = vmatmul.mubr.f32.gmra.mxu0 %v1136
        %v1356 = vpop.f32.mrf.mxu0
        %v1357 = vadd.f32 0.0, %v1356
        %v1358 = vpop.f32.mrf.mxu0
        %1359 = vmatprep.mubr.f32.mxu0 0.0
        %1360 = vmatmul.mubr.f32.gmra.mxu0 %v1138
        %v1361 = vpop.f32.mrf.mxu0
        %v1362 = vadd.f32 0.0, %v1361
        %v1363 = vpop.f32.mrf.mxu0
        %1364 = vmatprep.mubr.f32.mxu0 0.0
        %1365 = vmatmul.mubr.f32.gmra.mxu0 %v1140
        %v1366 = vpop.f32.mrf.mxu0
        %v1367 = vadd.f32 0.0, %v1366
        %v1368 = vpop.f32.mrf.mxu0
        %1369 = vdwg.mxu0
        %v1370 = vadd.f32 %v837, %v1212
        %v1371 = vadd.f32 %v842, %v1217
        %v1372 = vadd.f32 %v847, %v1222
        %v1373 = vadd.f32 %v852, %v1227
        %v1374 = vadd.f32 %v857, %v1232
        %v1375 = vadd.f32 %v862, %v1237
        %v1376 = vadd.f32 %v867, %v1242
        %v1377 = vadd.f32 %v872, %v1247
        %v1378 = vadd.f32 %v877, %v1252
        %v1379 = vadd.f32 %v882, %v1257
        %v1380 = vadd.f32 %v887, %v1262
        %v1381 = vadd.f32 %v892, %v1267
        %v1382 = vadd.f32 %v897, %v1272
        %v1383 = vadd.f32 %v902, %v1277
        %v1384 = vadd.f32 %v907, %v1282
        %v1385 = vadd.f32 %v912, %v1287
        %v1386 = vadd.f32 %v917, %v1292
        %v1387 = vadd.f32 %v922, %v1297
        %v1388 = vadd.f32 %v927, %v1302
        %v1389 = vadd.f32 %v932, %v1307
        %v1390 = vadd.f32 %v937, %v1312
        %v1391 = vadd.f32 %v942, %v1317
        %v1392 = vadd.f32 %v947, %v1322
        %v1393 = vadd.f32 %v952, %v1327
        %v1394 = vadd.f32 %v957, %v1332
        %v1395 = vadd.f32 %v962, %v1337
        %v1396 = vadd.f32 %v967, %v1342
        %v1397 = vadd.f32 %v972, %v1347
        %v1398 = vadd.f32 %v977, %v1352
        %v1399 = vadd.f32 %v982, %v1357
        %v1400 = vadd.f32 %v987, %v1362
        %v1401 = vadd.f32 %v992, %v1367
        %s1402 = scalar_lea.vmem %s1, 12
        %v1403 = vld [vmem:[%s1402] sm:$0xf]
        %v1405 = vsel %vm409, %v271, 0
        %v1408 = vsel %vm409, %v272, 0
        %v1411 = vsel %vm474, %v1403, 0
        %1413 = vmatprep.subr.mxu0 0.0
        %1414 = vmatpush1.msra.mxu0 0.0
        %1415 = vmatprep.subr.mxu0 0.0
        %1416 = vmatpush1.msra.mxu0 0.0
        %1417 = vmatprep.subr.mxu0 0.0
        %1418 = vmatpush1.msra.mxu0 0.0
        %1419 = vmatprep.subr.mxu0 0.0
        %1420 = vmatpush1.msra.mxu0 0.0
        %1421 = vmatprep.subr.mxu0 0.0
        %1422 = vmatpush1.msra.mxu0 0.0
        %1423 = vmatprep.subr.mxu0 0.0
        %1424 = vmatpush1.msra.mxu0 0.0
        %1425 = vmatprep.subr.mxu0 0.0
        %1426 = vmatpush1.msra.mxu0 0.0
        %1427 = vmatprep.subr.mxu0 0.0
        %1428 = vmatpush1.msra.mxu0 0.0
        %1429 = vmatprep.subr.mxu0 0.0
        %1430 = vmatpush1.msra.mxu0 0.0
        %1431 = vmatprep.subr.mxu0 0.0
        %1432 = vmatpush1.msra.mxu0 0.0
        %1433 = vmatprep.subr.mxu0 0.0
        %1434 = vmatpush1.msra.mxu0 0.0
        %1435 = vmatprep.subr.mxu0 0.0
        %1436 = vmatpush1.msra.mxu0 0.0
        %1437 = vmatprep.subr.mxu0 0.0
        %1438 = vmatpush1.msra.mxu0 0.0
        %1439 = vmatprep.subr.mxu0 0.0
        %1440 = vmatpush1.msra.mxu0 0.0
        %1441 = vmatprep.subr.mxu0 0.0
        %1442 = vmatpush1.msra.mxu0 0.0
        %1443 = vmatprep.subr.mxu0 0.0
        %1444 = vmatpush1.msra.mxu0 %v1411
        %1445 = vmatprep.subr.mxu0 0.0
        %1446 = vmatpush2.msra.mxu0 0.0
        %1447 = vmatprep.subr.mxu0 0.0
        %1448 = vmatpush2.msra.mxu0 0.0
        %1449 = vmatprep.subr.mxu0 0.0
        %1450 = vmatpush2.msra.mxu0 0.0
        %1451 = vmatprep.subr.mxu0 0.0
        %1452 = vmatpush2.msra.mxu0 0.0
        %1453 = vmatprep.subr.mxu0 0.0
        %1454 = vmatpush2.msra.mxu0 0.0
        %1455 = vmatprep.subr.mxu0 0.0
        %1456 = vmatpush2.msra.mxu0 0.0
        %1457 = vmatprep.subr.mxu0 0.0
        %1458 = vmatpush2.msra.mxu0 0.0
        %1459 = vmatprep.subr.mxu0 0.0
        %1460 = vmatpush2.msra.mxu0 0.0
        %1461 = vmatprep.subr.mxu0 0.0
        %1462 = vmatpush2.msra.mxu0 0.0
        %1463 = vmatprep.subr.mxu0 0.0
        %1464 = vmatpush2.msra.mxu0 0.0
        %1465 = vmatprep.subr.mxu0 0.0
        %1466 = vmatpush2.msra.mxu0 0.0
        %1467 = vmatprep.subr.mxu0 0.0
        %1468 = vmatpush2.msra.mxu0 0.0
        %1469 = vmatprep.subr.mxu0 0.0
        %1470 = vmatpush2.msra.mxu0 0.0
        %1471 = vmatprep.subr.mxu0 0.0
        %1472 = vmatpush2.msra.mxu0 0.0
        %1473 = vmatprep.subr.mxu0 0.0
        %1474 = vmatpush2.msra.mxu0 0.0
        %1475 = vmatprep.subr.mxu0 0.0
        %1476 = vmatpush2.msra.mxu0 0.0
        %1477 = vmatprep.mubr.f32.mxu0 0.0
        %1478 = vmatmul.mubr.f32.gmra.mxu0 %v707
        %v1479 = vpop.f32.mrf.mxu0
        %v1480 = vadd.f32 0.0, %v1479
        %v1481 = vpop.f32.mrf.mxu0
        %1482 = vmatprep.mubr.f32.mxu0 0.0
        %1483 = vmatmul.mubr.f32.gmra.mxu0 %v709
        %v1484 = vpop.f32.mrf.mxu0
        %v1485 = vadd.f32 0.0, %v1484
        %v1486 = vpop.f32.mrf.mxu0
        %1487 = vmatprep.mubr.f32.mxu0 0.0
        %1488 = vmatmul.mubr.f32.gmra.mxu0 %v711
        %v1489 = vpop.f32.mrf.mxu0
        %v1490 = vadd.f32 0.0, %v1489
        %v1491 = vpop.f32.mrf.mxu0
        %1492 = vmatprep.mubr.f32.mxu0 0.0
        %1493 = vmatmul.mubr.f32.gmra.mxu0 %v713
        %v1494 = vpop.f32.mrf.mxu0
        %v1495 = vadd.f32 0.0, %v1494
        %v1496 = vpop.f32.mrf.mxu0
        %1497 = vmatprep.mubr.f32.mxu0 0.0
        %1498 = vmatmul.mubr.f32.gmra.mxu0 %v715
        %v1499 = vpop.f32.mrf.mxu0
        %v1500 = vadd.f32 0.0, %v1499
        %v1501 = vpop.f32.mrf.mxu0
        %1502 = vmatprep.mubr.f32.mxu0 0.0
        %1503 = vmatmul.mubr.f32.gmra.mxu0 %v717
        %v1504 = vpop.f32.mrf.mxu0
        %v1505 = vadd.f32 0.0, %v1504
        %v1506 = vpop.f32.mrf.mxu0
        %1507 = vmatprep.mubr.f32.mxu0 0.0
        %1508 = vmatmul.mubr.f32.gmra.mxu0 %v719
        %v1509 = vpop.f32.mrf.mxu0
        %v1510 = vadd.f32 0.0, %v1509
        %v1511 = vpop.f32.mrf.mxu0
        %1512 = vmatprep.mubr.f32.mxu0 0.0
        %1513 = vmatmul.mubr.f32.gmra.mxu0 %v721
        %v1514 = vpop.f32.mrf.mxu0
        %v1515 = vadd.f32 0.0, %v1514
        %v1516 = vpop.f32.mrf.mxu0
        %1517 = vmatprep.mubr.f32.mxu0 0.0
        %1518 = vmatmul.mubr.f32.gmra.mxu0 %v723
        %v1519 = vpop.f32.mrf.mxu0
        %v1520 = vadd.f32 0.0, %v1519
        %v1521 = vpop.f32.mrf.mxu0
        %1522 = vmatprep.mubr.f32.mxu0 0.0
        %1523 = vmatmul.mubr.f32.gmra.mxu0 %v725
        %v1524 = vpop.f32.mrf.mxu0
        %v1525 = vadd.f32 0.0, %v1524
        %v1526 = vpop.f32.mrf.mxu0
        %1527 = vmatprep.mubr.f32.mxu0 0.0
        %1528 = vmatmul.mubr.f32.gmra.mxu0 %v727
        %v1529 = vpop.f32.mrf.mxu0
        %v1530 = vadd.f32 0.0, %v1529
        %v1531 = vpop.f32.mrf.mxu0
        %1532 = vmatprep.mubr.f32.mxu0 0.0
        %1533 = vmatmul.mubr.f32.gmra.mxu0 %v729
        %v1534 = vpop.f32.mrf.mxu0
        %v1535 = vadd.f32 0.0, %v1534
        %v1536 = vpop.f32.mrf.mxu0
        %1537 = vmatprep.mubr.f32.mxu0 0.0
        %1538 = vmatmul.mubr.f32.gmra.mxu0 %v731
        %v1539 = vpop.f32.mrf.mxu0
        %v1540 = vadd.f32 0.0, %v1539
        %v1541 = vpop.f32.mrf.mxu0
        %1542 = vmatprep.mubr.f32.mxu0 0.0
        %1543 = vmatmul.mubr.f32.gmra.mxu0 %v733
        %v1544 = vpop.f32.mrf.mxu0
        %v1545 = vadd.f32 0.0, %v1544
        %v1546 = vpop.f32.mrf.mxu0
        %1547 = vmatprep.mubr.f32.mxu0 0.0
        %1548 = vmatmul.mubr.f32.gmra.mxu0 %v735
        %v1549 = vpop.f32.mrf.mxu0
        %v1550 = vadd.f32 0.0, %v1549
        %v1551 = vpop.f32.mrf.mxu0
        %1552 = vmatprep.mubr.f32.mxu0 0.0
        %1553 = vmatmul.mubr.f32.gmra.mxu0 %v737
        %v1554 = vpop.f32.mrf.mxu0
        %v1555 = vadd.f32 0.0, %v1554
        %v1556 = vpop.f32.mrf.mxu0
        %1557 = vmatprep.mubr.f32.mxu0 0.0
        %1558 = vmatmul.mubr.f32.gmra.mxu0 %v739
        %v1559 = vpop.f32.mrf.mxu0
        %v1560 = vadd.f32 0.0, %v1559
        %v1561 = vpop.f32.mrf.mxu0
        %1562 = vmatprep.mubr.f32.mxu0 0.0
        %1563 = vmatmul.mubr.f32.gmra.mxu0 %v741
        %v1564 = vpop.f32.mrf.mxu0
        %v1565 = vadd.f32 0.0, %v1564
        %v1566 = vpop.f32.mrf.mxu0
        %1567 = vmatprep.mubr.f32.mxu0 0.0
        %1568 = vmatmul.mubr.f32.gmra.mxu0 %v743
        %v1569 = vpop.f32.mrf.mxu0
        %v1570 = vadd.f32 0.0, %v1569
        %v1571 = vpop.f32.mrf.mxu0
        %1572 = vmatprep.mubr.f32.mxu0 0.0
        %1573 = vmatmul.mubr.f32.gmra.mxu0 %v745
        %v1574 = vpop.f32.mrf.mxu0
        %v1575 = vadd.f32 0.0, %v1574
        %v1576 = vpop.f32.mrf.mxu0
        %1577 = vmatprep.mubr.f32.mxu0 0.0
        %1578 = vmatmul.mubr.f32.gmra.mxu0 %v747
        %v1579 = vpop.f32.mrf.mxu0
        %v1580 = vadd.f32 0.0, %v1579
        %v1581 = vpop.f32.mrf.mxu0
        %1582 = vmatprep.mubr.f32.mxu0 0.0
        %1583 = vmatmul.mubr.f32.gmra.mxu0 %v749
        %v1584 = vpop.f32.mrf.mxu0
        %v1585 = vadd.f32 0.0, %v1584
        %v1586 = vpop.f32.mrf.mxu0
        %1587 = vmatprep.mubr.f32.mxu0 0.0
        %1588 = vmatmul.mubr.f32.gmra.mxu0 %v751
        %v1589 = vpop.f32.mrf.mxu0
        %v1590 = vadd.f32 0.0, %v1589
        %v1591 = vpop.f32.mrf.mxu0
        %1592 = vmatprep.mubr.f32.mxu0 0.0
        %1593 = vmatmul.mubr.f32.gmra.mxu0 %v753
        %v1594 = vpop.f32.mrf.mxu0
        %v1595 = vadd.f32 0.0, %v1594
        %v1596 = vpop.f32.mrf.mxu0
        %1597 = vmatprep.mubr.f32.mxu0 0.0
        %1598 = vmatmul.mubr.f32.gmra.mxu0 %v755
        %v1599 = vpop.f32.mrf.mxu0
        %v1600 = vadd.f32 0.0, %v1599
        %v1601 = vpop.f32.mrf.mxu0
        %1602 = vmatprep.mubr.f32.mxu0 0.0
        %1603 = vmatmul.mubr.f32.gmra.mxu0 %v757
        %v1604 = vpop.f32.mrf.mxu0
        %v1605 = vadd.f32 0.0, %v1604
        %v1606 = vpop.f32.mrf.mxu0
        %1607 = vmatprep.mubr.f32.mxu0 0.0
        %1608 = vmatmul.mubr.f32.gmra.mxu0 %v759
        %v1609 = vpop.f32.mrf.mxu0
        %v1610 = vadd.f32 0.0, %v1609
        %v1611 = vpop.f32.mrf.mxu0
        %1612 = vmatprep.mubr.f32.mxu0 0.0
        %1613 = vmatmul.mubr.f32.gmra.mxu0 %v761
        %v1614 = vpop.f32.mrf.mxu0
        %v1615 = vadd.f32 0.0, %v1614
        %v1616 = vpop.f32.mrf.mxu0
        %1617 = vmatprep.mubr.f32.mxu0 0.0
        %1618 = vmatmul.mubr.f32.gmra.mxu0 %v763
        %v1619 = vpop.f32.mrf.mxu0
        %v1620 = vadd.f32 0.0, %v1619
        %v1621 = vpop.f32.mrf.mxu0
        %1622 = vmatprep.mubr.f32.mxu0 0.0
        %1623 = vmatmul.mubr.f32.gmra.mxu0 %v765
        %v1624 = vpop.f32.mrf.mxu0
        %v1625 = vadd.f32 0.0, %v1624
        %v1626 = vpop.f32.mrf.mxu0
        %1627 = vmatprep.mubr.f32.mxu0 0.0
        %1628 = vmatmul.mubr.f32.gmra.mxu0 %v1405
        %v1629 = vpop.f32.mrf.mxu0
        %v1630 = vadd.f32 0.0, %v1629
        %v1631 = vpop.f32.mrf.mxu0
        %1632 = vmatprep.mubr.f32.mxu0 0.0
        %1633 = vmatmul.mubr.f32.gmra.mxu0 %v1408
        %v1634 = vpop.f32.mrf.mxu0
        %v1635 = vadd.f32 0.0, %v1634
        %v1636 = vpop.f32.mrf.mxu0
        %1637 = vdwg.mxu0
        %v1638 = vadd.f32 %v1370, %v1480
        %v1639 = vadd.f32 %v1371, %v1485
        %v1640 = vadd.f32 %v1372, %v1490
        %v1641 = vadd.f32 %v1373, %v1495
        %v1642 = vadd.f32 %v1374, %v1500
        %v1643 = vadd.f32 %v1375, %v1505
        %v1644 = vadd.f32 %v1376, %v1510
        %v1645 = vadd.f32 %v1377, %v1515
        %v1646 = vadd.f32 %v1378, %v1520
        %v1647 = vadd.f32 %v1379, %v1525
        %v1648 = vadd.f32 %v1380, %v1530
        %v1649 = vadd.f32 %v1381, %v1535
        %v1650 = vadd.f32 %v1382, %v1540
        %v1651 = vadd.f32 %v1383, %v1545
        %v1652 = vadd.f32 %v1384, %v1550
        %v1653 = vadd.f32 %v1385, %v1555
        %v1654 = vadd.f32 %v1386, %v1560
        %v1655 = vadd.f32 %v1387, %v1565
        %v1656 = vadd.f32 %v1388, %v1570
        %v1657 = vadd.f32 %v1389, %v1575
        %v1658 = vadd.f32 %v1390, %v1580
        %v1659 = vadd.f32 %v1391, %v1585
        %v1660 = vadd.f32 %v1392, %v1590
        %v1661 = vadd.f32 %v1393, %v1595
        %v1662 = vadd.f32 %v1394, %v1600
        %v1663 = vadd.f32 %v1395, %v1605
        %v1664 = vadd.f32 %v1396, %v1610
        %v1665 = vadd.f32 %v1397, %v1615
        %v1666 = vadd.f32 %v1398, %v1620
        %v1667 = vadd.f32 %v1399, %v1625
        %v1668 = vadd.f32 %v1400, %v1630
        %v1669 = vadd.f32 %v1401, %v1635
        %v1671 = vrot.slane %v271, 1
        %v1672 = vrot.slane %v272, 1
        %v1673 = vsel %vm326, %v1671, %v1672
        %v1674 = vrot.slane %v273, 1
        %v1675 = vsel %vm326, %v1672, %v1674
        %s1676 = scalar_lea.vmem %s1, 16
        %v1677 = vld [vmem:[%s1676] sm:$0xf]
        %v1678 = vsel %vm409, %v1673, 0
        %v1680 = vsel %vm409, %v1675, 0
        %v1683 = vsel %vm474, %v1677, 0
        %1685 = vmatprep.subr.mxu0 0.0
        %1686 = vmatpush1.msra.mxu0 0.0
        %1687 = vmatprep.subr.mxu0 0.0
        %1688 = vmatpush1.msra.mxu0 0.0
        %1689 = vmatprep.subr.mxu0 0.0
        %1690 = vmatpush1.msra.mxu0 0.0
        %1691 = vmatprep.subr.mxu0 0.0
        %1692 = vmatpush1.msra.mxu0 0.0
        %1693 = vmatprep.subr.mxu0 0.0
        %1694 = vmatpush1.msra.mxu0 0.0
        %1695 = vmatprep.subr.mxu0 0.0
        %1696 = vmatpush1.msra.mxu0 0.0
        %1697 = vmatprep.subr.mxu0 0.0
        %1698 = vmatpush1.msra.mxu0 0.0
        %1699 = vmatprep.subr.mxu0 0.0
        %1700 = vmatpush1.msra.mxu0 0.0
        %1701 = vmatprep.subr.mxu0 0.0
        %1702 = vmatpush1.msra.mxu0 0.0
        %1703 = vmatprep.subr.mxu0 0.0
        %1704 = vmatpush1.msra.mxu0 0.0
        %1705 = vmatprep.subr.mxu0 0.0
        %1706 = vmatpush1.msra.mxu0 0.0
        %1707 = vmatprep.subr.mxu0 0.0
        %1708 = vmatpush1.msra.mxu0 0.0
        %1709 = vmatprep.subr.mxu0 0.0
        %1710 = vmatpush1.msra.mxu0 0.0
        %1711 = vmatprep.subr.mxu0 0.0
        %1712 = vmatpush1.msra.mxu0 0.0
        %1713 = vmatprep.subr.mxu0 0.0
        %1714 = vmatpush1.msra.mxu0 0.0
        %1715 = vmatprep.subr.mxu0 0.0
        %1716 = vmatpush1.msra.mxu0 %v1683
        %1717 = vmatprep.subr.mxu0 0.0
        %1718 = vmatpush2.msra.mxu0 0.0
        %1719 = vmatprep.subr.mxu0 0.0
        %1720 = vmatpush2.msra.mxu0 0.0
        %1721 = vmatprep.subr.mxu0 0.0
        %1722 = vmatpush2.msra.mxu0 0.0
        %1723 = vmatprep.subr.mxu0 0.0
        %1724 = vmatpush2.msra.mxu0 0.0
        %1725 = vmatprep.subr.mxu0 0.0
        %1726 = vmatpush2.msra.mxu0 0.0
        %1727 = vmatprep.subr.mxu0 0.0
        %1728 = vmatpush2.msra.mxu0 0.0
        %1729 = vmatprep.subr.mxu0 0.0
        %1730 = vmatpush2.msra.mxu0 0.0
        %1731 = vmatprep.subr.mxu0 0.0
        %1732 = vmatpush2.msra.mxu0 0.0
        %1733 = vmatprep.subr.mxu0 0.0
        %1734 = vmatpush2.msra.mxu0 0.0
        %1735 = vmatprep.subr.mxu0 0.0
        %1736 = vmatpush2.msra.mxu0 0.0
        %1737 = vmatprep.subr.mxu0 0.0
        %1738 = vmatpush2.msra.mxu0 0.0
        %1739 = vmatprep.subr.mxu0 0.0
        %1740 = vmatpush2.msra.mxu0 0.0
        %1741 = vmatprep.subr.mxu0 0.0
        %1742 = vmatpush2.msra.mxu0 0.0
        %1743 = vmatprep.subr.mxu0 0.0
        %1744 = vmatpush2.msra.mxu0 0.0
        %1745 = vmatprep.subr.mxu0 0.0
        %1746 = vmatpush2.msra.mxu0 0.0
        %1747 = vmatprep.subr.mxu0 0.0
        %1748 = vmatpush2.msra.mxu0 0.0
        %1749 = vmatprep.mubr.f32.mxu0 0.0
        %1750 = vmatmul.mubr.f32.gmra.mxu0 %v414
        %v1751 = vpop.f32.mrf.mxu0
        %v1752 = vadd.f32 0.0, %v1751
        %v1753 = vpop.f32.mrf.mxu0
        %1754 = vmatprep.mubr.f32.mxu0 0.0
        %1755 = vmatmul.mubr.f32.gmra.mxu0 %v416
        %v1756 = vpop.f32.mrf.mxu0
        %v1757 = vadd.f32 0.0, %v1756
        %v1758 = vpop.f32.mrf.mxu0
        %1759 = vmatprep.mubr.f32.mxu0 0.0
        %1760 = vmatmul.mubr.f32.gmra.mxu0 %v418
        %v1761 = vpop.f32.mrf.mxu0
        %v1762 = vadd.f32 0.0, %v1761
        %v1763 = vpop.f32.mrf.mxu0
        %1764 = vmatprep.mubr.f32.mxu0 0.0
        %1765 = vmatmul.mubr.f32.gmra.mxu0 %v420
        %v1766 = vpop.f32.mrf.mxu0
        %v1767 = vadd.f32 0.0, %v1766
        %v1768 = vpop.f32.mrf.mxu0
        %1769 = vmatprep.mubr.f32.mxu0 0.0
        %1770 = vmatmul.mubr.f32.gmra.mxu0 %v422
        %v1771 = vpop.f32.mrf.mxu0
        %v1772 = vadd.f32 0.0, %v1771
        %v1773 = vpop.f32.mrf.mxu0
        %1774 = vmatprep.mubr.f32.mxu0 0.0
        %1775 = vmatmul.mubr.f32.gmra.mxu0 %v424
        %v1776 = vpop.f32.mrf.mxu0
        %v1777 = vadd.f32 0.0, %v1776
        %v1778 = vpop.f32.mrf.mxu0
        %1779 = vmatprep.mubr.f32.mxu0 0.0
        %1780 = vmatmul.mubr.f32.gmra.mxu0 %v426
        %v1781 = vpop.f32.mrf.mxu0
        %v1782 = vadd.f32 0.0, %v1781
        %v1783 = vpop.f32.mrf.mxu0
        %1784 = vmatprep.mubr.f32.mxu0 0.0
        %1785 = vmatmul.mubr.f32.gmra.mxu0 %v428
        %v1786 = vpop.f32.mrf.mxu0
        %v1787 = vadd.f32 0.0, %v1786
        %v1788 = vpop.f32.mrf.mxu0
        %1789 = vmatprep.mubr.f32.mxu0 0.0
        %1790 = vmatmul.mubr.f32.gmra.mxu0 %v430
        %v1791 = vpop.f32.mrf.mxu0
        %v1792 = vadd.f32 0.0, %v1791
        %v1793 = vpop.f32.mrf.mxu0
        %1794 = vmatprep.mubr.f32.mxu0 0.0
        %1795 = vmatmul.mubr.f32.gmra.mxu0 %v432
        %v1796 = vpop.f32.mrf.mxu0
        %v1797 = vadd.f32 0.0, %v1796
        %v1798 = vpop.f32.mrf.mxu0
        %1799 = vmatprep.mubr.f32.mxu0 0.0
        %1800 = vmatmul.mubr.f32.gmra.mxu0 %v434
        %v1801 = vpop.f32.mrf.mxu0
        %v1802 = vadd.f32 0.0, %v1801
        %v1803 = vpop.f32.mrf.mxu0
        %1804 = vmatprep.mubr.f32.mxu0 0.0
        %1805 = vmatmul.mubr.f32.gmra.mxu0 %v436
        %v1806 = vpop.f32.mrf.mxu0
        %v1807 = vadd.f32 0.0, %v1806
        %v1808 = vpop.f32.mrf.mxu0
        %1809 = vmatprep.mubr.f32.mxu0 0.0
        %1810 = vmatmul.mubr.f32.gmra.mxu0 %v438
        %v1811 = vpop.f32.mrf.mxu0
        %v1812 = vadd.f32 0.0, %v1811
        %v1813 = vpop.f32.mrf.mxu0
        %1814 = vmatprep.mubr.f32.mxu0 0.0
        %1815 = vmatmul.mubr.f32.gmra.mxu0 %v440
        %v1816 = vpop.f32.mrf.mxu0
        %v1817 = vadd.f32 0.0, %v1816
        %v1818 = vpop.f32.mrf.mxu0
        %1819 = vmatprep.mubr.f32.mxu0 0.0
        %1820 = vmatmul.mubr.f32.gmra.mxu0 %v442
        %v1821 = vpop.f32.mrf.mxu0
        %v1822 = vadd.f32 0.0, %v1821
        %v1823 = vpop.f32.mrf.mxu0
        %1824 = vmatprep.mubr.f32.mxu0 0.0
        %1825 = vmatmul.mubr.f32.gmra.mxu0 %v444
        %v1826 = vpop.f32.mrf.mxu0
        %v1827 = vadd.f32 0.0, %v1826
        %v1828 = vpop.f32.mrf.mxu0
        %1829 = vmatprep.mubr.f32.mxu0 0.0
        %1830 = vmatmul.mubr.f32.gmra.mxu0 %v446
        %v1831 = vpop.f32.mrf.mxu0
        %v1832 = vadd.f32 0.0, %v1831
        %v1833 = vpop.f32.mrf.mxu0
        %1834 = vmatprep.mubr.f32.mxu0 0.0
        %1835 = vmatmul.mubr.f32.gmra.mxu0 %v448
        %v1836 = vpop.f32.mrf.mxu0
        %v1837 = vadd.f32 0.0, %v1836
        %v1838 = vpop.f32.mrf.mxu0
        %1839 = vmatprep.mubr.f32.mxu0 0.0
        %1840 = vmatmul.mubr.f32.gmra.mxu0 %v450
        %v1841 = vpop.f32.mrf.mxu0
        %v1842 = vadd.f32 0.0, %v1841
        %v1843 = vpop.f32.mrf.mxu0
        %1844 = vmatprep.mubr.f32.mxu0 0.0
        %1845 = vmatmul.mubr.f32.gmra.mxu0 %v452
        %v1846 = vpop.f32.mrf.mxu0
        %v1847 = vadd.f32 0.0, %v1846
        %v1848 = vpop.f32.mrf.mxu0
        %1849 = vmatprep.mubr.f32.mxu0 0.0
        %1850 = vmatmul.mubr.f32.gmra.mxu0 %v454
        %v1851 = vpop.f32.mrf.mxu0
        %v1852 = vadd.f32 0.0, %v1851
        %v1853 = vpop.f32.mrf.mxu0
        %1854 = vmatprep.mubr.f32.mxu0 0.0
        %1855 = vmatmul.mubr.f32.gmra.mxu0 %v456
        %v1856 = vpop.f32.mrf.mxu0
        %v1857 = vadd.f32 0.0, %v1856
        %v1858 = vpop.f32.mrf.mxu0
        %1859 = vmatprep.mubr.f32.mxu0 0.0
        %1860 = vmatmul.mubr.f32.gmra.mxu0 %v458
        %v1861 = vpop.f32.mrf.mxu0
        %v1862 = vadd.f32 0.0, %v1861
        %v1863 = vpop.f32.mrf.mxu0
        %1864 = vmatprep.mubr.f32.mxu0 0.0
        %1865 = vmatmul.mubr.f32.gmra.mxu0 %v460
        %v1866 = vpop.f32.mrf.mxu0
        %v1867 = vadd.f32 0.0, %v1866
        %v1868 = vpop.f32.mrf.mxu0
        %1869 = vmatprep.mubr.f32.mxu0 0.0
        %1870 = vmatmul.mubr.f32.gmra.mxu0 %v462
        %v1871 = vpop.f32.mrf.mxu0
        %v1872 = vadd.f32 0.0, %v1871
        %v1873 = vpop.f32.mrf.mxu0
        %1874 = vmatprep.mubr.f32.mxu0 0.0
        %1875 = vmatmul.mubr.f32.gmra.mxu0 %v464
        %v1876 = vpop.f32.mrf.mxu0
        %v1877 = vadd.f32 0.0, %v1876
        %v1878 = vpop.f32.mrf.mxu0
        %1879 = vmatprep.mubr.f32.mxu0 0.0
        %1880 = vmatmul.mubr.f32.gmra.mxu0 %v466
        %v1881 = vpop.f32.mrf.mxu0
        %v1882 = vadd.f32 0.0, %v1881
        %v1883 = vpop.f32.mrf.mxu0
        %1884 = vmatprep.mubr.f32.mxu0 0.0
        %1885 = vmatmul.mubr.f32.gmra.mxu0 %v468
        %v1886 = vpop.f32.mrf.mxu0
        %v1887 = vadd.f32 0.0, %v1886
        %v1888 = vpop.f32.mrf.mxu0
        %1889 = vmatprep.mubr.f32.mxu0 0.0
        %1890 = vmatmul.mubr.f32.gmra.mxu0 %v470
        %v1891 = vpop.f32.mrf.mxu0
        %v1892 = vadd.f32 0.0, %v1891
        %v1893 = vpop.f32.mrf.mxu0
        %1894 = vmatprep.mubr.f32.mxu0 0.0
        %1895 = vmatmul.mubr.f32.gmra.mxu0 %v472
        %v1896 = vpop.f32.mrf.mxu0
        %v1897 = vadd.f32 0.0, %v1896
        %v1898 = vpop.f32.mrf.mxu0
        %1899 = vmatprep.mubr.f32.mxu0 0.0
        %1900 = vmatmul.mubr.f32.gmra.mxu0 %v1678
        %v1901 = vpop.f32.mrf.mxu0
        %v1902 = vadd.f32 0.0, %v1901
        %v1903 = vpop.f32.mrf.mxu0
        %1904 = vmatprep.mubr.f32.mxu0 0.0
        %1905 = vmatmul.mubr.f32.gmra.mxu0 %v1680
        %v1906 = vpop.f32.mrf.mxu0
        %v1907 = vadd.f32 0.0, %v1906
        %v1908 = vpop.f32.mrf.mxu0
        %1909 = vdwg.mxu0
        %v1910 = vadd.f32 %v1638, %v1752
        %v1911 = vadd.f32 %v1639, %v1757
        %v1912 = vadd.f32 %v1640, %v1762
        %v1913 = vadd.f32 %v1641, %v1767
        %v1914 = vadd.f32 %v1642, %v1772
        %v1915 = vadd.f32 %v1643, %v1777
        %v1916 = vadd.f32 %v1644, %v1782
        %v1917 = vadd.f32 %v1645, %v1787
        %v1918 = vadd.f32 %v1646, %v1792
        %v1919 = vadd.f32 %v1647, %v1797
        %v1920 = vadd.f32 %v1648, %v1802
        %v1921 = vadd.f32 %v1649, %v1807
        %v1922 = vadd.f32 %v1650, %v1812
        %v1923 = vadd.f32 %v1651, %v1817
        %v1924 = vadd.f32 %v1652, %v1822
        %v1925 = vadd.f32 %v1653, %v1827
        %v1926 = vadd.f32 %v1654, %v1832
        %v1927 = vadd.f32 %v1655, %v1837
        %v1928 = vadd.f32 %v1656, %v1842
        %v1929 = vadd.f32 %v1657, %v1847
        %v1930 = vadd.f32 %v1658, %v1852
        %v1931 = vadd.f32 %v1659, %v1857
        %v1932 = vadd.f32 %v1660, %v1862
        %v1933 = vadd.f32 %v1661, %v1867
        %v1934 = vadd.f32 %v1662, %v1872
        %v1935 = vadd.f32 %v1663, %v1877
        %v1936 = vadd.f32 %v1664, %v1882
        %v1937 = vadd.f32 %v1665, %v1887
        %v1938 = vadd.f32 %v1666, %v1892
        %v1939 = vadd.f32 %v1667, %v1897
        %v1940 = vadd.f32 %v1668, %v1902
        %v1941 = vadd.f32 %v1669, %v1907
        %v1942 = vrot.slane %v271, 2
        %v1943 = vrot.slane %v272, 2
        %v1944 = vsel %vm995, %v1942, %v1943
        %v1945 = vrot.slane %v273, 2
        %v1946 = vsel %vm995, %v1943, %v1945
        %s1947 = scalar_lea.vmem %s1, 20
        %v1948 = vld [vmem:[%s1947] sm:$0xf]
        %v1949 = vsel %vm409, %v1944, 0
        %v1951 = vsel %vm409, %v1946, 0
        %v1954 = vsel %vm474, %v1948, 0
        %1956 = vmatprep.subr.mxu0 0.0
        %1957 = vmatpush1.msra.mxu0 0.0
        %1958 = vmatprep.subr.mxu0 0.0
        %1959 = vmatpush1.msra.mxu0 0.0
        %1960 = vmatprep.subr.mxu0 0.0
        %1961 = vmatpush1.msra.mxu0 0.0
        %1962 = vmatprep.subr.mxu0 0.0
        %1963 = vmatpush1.msra.mxu0 0.0
        %1964 = vmatprep.subr.mxu0 0.0
        %1965 = vmatpush1.msra.mxu0 0.0
        %1966 = vmatprep.subr.mxu0 0.0
        %1967 = vmatpush1.msra.mxu0 0.0
        %1968 = vmatprep.subr.mxu0 0.0
        %1969 = vmatpush1.msra.mxu0 0.0
        %1970 = vmatprep.subr.mxu0 0.0
        %1971 = vmatpush1.msra.mxu0 0.0
        %1972 = vmatprep.subr.mxu0 0.0
        %1973 = vmatpush1.msra.mxu0 0.0
        %1974 = vmatprep.subr.mxu0 0.0
        %1975 = vmatpush1.msra.mxu0 0.0
        %1976 = vmatprep.subr.mxu0 0.0
        %1977 = vmatpush1.msra.mxu0 0.0
        %1978 = vmatprep.subr.mxu0 0.0
        %1979 = vmatpush1.msra.mxu0 0.0
        %1980 = vmatprep.subr.mxu0 0.0
        %1981 = vmatpush1.msra.mxu0 0.0
        %1982 = vmatprep.subr.mxu0 0.0
        %1983 = vmatpush1.msra.mxu0 0.0
        %1984 = vmatprep.subr.mxu0 0.0
        %1985 = vmatpush1.msra.mxu0 0.0
        %1986 = vmatprep.subr.mxu0 0.0
        %1987 = vmatpush1.msra.mxu0 %v1954
        %1988 = vmatprep.subr.mxu0 0.0
        %1989 = vmatpush2.msra.mxu0 0.0
        %1990 = vmatprep.subr.mxu0 0.0
        %1991 = vmatpush2.msra.mxu0 0.0
        %1992 = vmatprep.subr.mxu0 0.0
        %1993 = vmatpush2.msra.mxu0 0.0
        %1994 = vmatprep.subr.mxu0 0.0
        %1995 = vmatpush2.msra.mxu0 0.0
        %1996 = vmatprep.subr.mxu0 0.0
        %1997 = vmatpush2.msra.mxu0 0.0
        %1998 = vmatprep.subr.mxu0 0.0
        %1999 = vmatpush2.msra.mxu0 0.0
        %2000 = vmatprep.subr.mxu0 0.0
        %2001 = vmatpush2.msra.mxu0 0.0
        %2002 = vmatprep.subr.mxu0 0.0
        %2003 = vmatpush2.msra.mxu0 0.0
        %2004 = vmatprep.subr.mxu0 0.0
        %2005 = vmatpush2.msra.mxu0 0.0
        %2006 = vmatprep.subr.mxu0 0.0
        %2007 = vmatpush2.msra.mxu0 0.0
        %2008 = vmatprep.subr.mxu0 0.0
        %2009 = vmatpush2.msra.mxu0 0.0
        %2010 = vmatprep.subr.mxu0 0.0
        %2011 = vmatpush2.msra.mxu0 0.0
        %2012 = vmatprep.subr.mxu0 0.0
        %2013 = vmatpush2.msra.mxu0 0.0
        %2014 = vmatprep.subr.mxu0 0.0
        %2015 = vmatpush2.msra.mxu0 0.0
        %2016 = vmatprep.subr.mxu0 0.0
        %2017 = vmatpush2.msra.mxu0 0.0
        %2018 = vmatprep.subr.mxu0 0.0
        %2019 = vmatpush2.msra.mxu0 0.0
        %2020 = vmatprep.mubr.f32.mxu0 0.0
        %2021 = vmatmul.mubr.f32.gmra.mxu0 %v1082
        %v2022 = vpop.f32.mrf.mxu0
        %v2023 = vadd.f32 0.0, %v2022
        %v2024 = vpop.f32.mrf.mxu0
        %2025 = vmatprep.mubr.f32.mxu0 0.0
        %2026 = vmatmul.mubr.f32.gmra.mxu0 %v1084
        %v2027 = vpop.f32.mrf.mxu0
        %v2028 = vadd.f32 0.0, %v2027
        %v2029 = vpop.f32.mrf.mxu0
        %2030 = vmatprep.mubr.f32.mxu0 0.0
        %2031 = vmatmul.mubr.f32.gmra.mxu0 %v1086
        %v2032 = vpop.f32.mrf.mxu0
        %v2033 = vadd.f32 0.0, %v2032
        %v2034 = vpop.f32.mrf.mxu0
        %2035 = vmatprep.mubr.f32.mxu0 0.0
        %2036 = vmatmul.mubr.f32.gmra.mxu0 %v1088
        %v2037 = vpop.f32.mrf.mxu0
        %v2038 = vadd.f32 0.0, %v2037
        %v2039 = vpop.f32.mrf.mxu0
        %2040 = vmatprep.mubr.f32.mxu0 0.0
        %2041 = vmatmul.mubr.f32.gmra.mxu0 %v1090
        %v2042 = vpop.f32.mrf.mxu0
        %v2043 = vadd.f32 0.0, %v2042
        %v2044 = vpop.f32.mrf.mxu0
        %2045 = vmatprep.mubr.f32.mxu0 0.0
        %2046 = vmatmul.mubr.f32.gmra.mxu0 %v1092
        %v2047 = vpop.f32.mrf.mxu0
        %v2048 = vadd.f32 0.0, %v2047
        %v2049 = vpop.f32.mrf.mxu0
        %2050 = vmatprep.mubr.f32.mxu0 0.0
        %2051 = vmatmul.mubr.f32.gmra.mxu0 %v1094
        %v2052 = vpop.f32.mrf.mxu0
        %v2053 = vadd.f32 0.0, %v2052
        %v2054 = vpop.f32.mrf.mxu0
        %2055 = vmatprep.mubr.f32.mxu0 0.0
        %2056 = vmatmul.mubr.f32.gmra.mxu0 %v1096
        %v2057 = vpop.f32.mrf.mxu0
        %v2058 = vadd.f32 0.0, %v2057
        %v2059 = vpop.f32.mrf.mxu0
        %2060 = vmatprep.mubr.f32.mxu0 0.0
        %2061 = vmatmul.mubr.f32.gmra.mxu0 %v1098
        %v2062 = vpop.f32.mrf.mxu0
        %v2063 = vadd.f32 0.0, %v2062
        %v2064 = vpop.f32.mrf.mxu0
        %2065 = vmatprep.mubr.f32.mxu0 0.0
        %2066 = vmatmul.mubr.f32.gmra.mxu0 %v1100
        %v2067 = vpop.f32.mrf.mxu0
        %v2068 = vadd.f32 0.0, %v2067
        %v2069 = vpop.f32.mrf.mxu0
        %2070 = vmatprep.mubr.f32.mxu0 0.0
        %2071 = vmatmul.mubr.f32.gmra.mxu0 %v1102
        %v2072 = vpop.f32.mrf.mxu0
        %v2073 = vadd.f32 0.0, %v2072
        %v2074 = vpop.f32.mrf.mxu0
        %2075 = vmatprep.mubr.f32.mxu0 0.0
        %2076 = vmatmul.mubr.f32.gmra.mxu0 %v1104
        %v2077 = vpop.f32.mrf.mxu0
        %v2078 = vadd.f32 0.0, %v2077
        %v2079 = vpop.f32.mrf.mxu0
        %2080 = vmatprep.mubr.f32.mxu0 0.0
        %2081 = vmatmul.mubr.f32.gmra.mxu0 %v1106
        %v2082 = vpop.f32.mrf.mxu0
        %v2083 = vadd.f32 0.0, %v2082
        %v2084 = vpop.f32.mrf.mxu0
        %2085 = vmatprep.mubr.f32.mxu0 0.0
        %2086 = vmatmul.mubr.f32.gmra.mxu0 %v1108
        %v2087 = vpop.f32.mrf.mxu0
        %v2088 = vadd.f32 0.0, %v2087
        %v2089 = vpop.f32.mrf.mxu0
        %2090 = vmatprep.mubr.f32.mxu0 0.0
        %2091 = vmatmul.mubr.f32.gmra.mxu0 %v1110
        %v2092 = vpop.f32.mrf.mxu0
        %v2093 = vadd.f32 0.0, %v2092
        %v2094 = vpop.f32.mrf.mxu0
        %2095 = vmatprep.mubr.f32.mxu0 0.0
        %2096 = vmatmul.mubr.f32.gmra.mxu0 %v1112
        %v2097 = vpop.f32.mrf.mxu0
        %v2098 = vadd.f32 0.0, %v2097
        %v2099 = vpop.f32.mrf.mxu0
        %2100 = vmatprep.mubr.f32.mxu0 0.0
        %2101 = vmatmul.mubr.f32.gmra.mxu0 %v1114
        %v2102 = vpop.f32.mrf.mxu0
        %v2103 = vadd.f32 0.0, %v2102
        %v2104 = vpop.f32.mrf.mxu0
        %2105 = vmatprep.mubr.f32.mxu0 0.0
        %2106 = vmatmul.mubr.f32.gmra.mxu0 %v1116
        %v2107 = vpop.f32.mrf.mxu0
        %v2108 = vadd.f32 0.0, %v2107
        %v2109 = vpop.f32.mrf.mxu0
        %2110 = vmatprep.mubr.f32.mxu0 0.0
        %2111 = vmatmul.mubr.f32.gmra.mxu0 %v1118
        %v2112 = vpop.f32.mrf.mxu0
        %v2113 = vadd.f32 0.0, %v2112
        %v2114 = vpop.f32.mrf.mxu0
        %2115 = vmatprep.mubr.f32.mxu0 0.0
        %2116 = vmatmul.mubr.f32.gmra.mxu0 %v1120
        %v2117 = vpop.f32.mrf.mxu0
        %v2118 = vadd.f32 0.0, %v2117
        %v2119 = vpop.f32.mrf.mxu0
        %2120 = vmatprep.mubr.f32.mxu0 0.0
        %2121 = vmatmul.mubr.f32.gmra.mxu0 %v1122
        %v2122 = vpop.f32.mrf.mxu0
        %v2123 = vadd.f32 0.0, %v2122
        %v2124 = vpop.f32.mrf.mxu0
        %2125 = vmatprep.mubr.f32.mxu0 0.0
        %2126 = vmatmul.mubr.f32.gmra.mxu0 %v1124
        %v2127 = vpop.f32.mrf.mxu0
        %v2128 = vadd.f32 0.0, %v2127
        %v2129 = vpop.f32.mrf.mxu0
        %2130 = vmatprep.mubr.f32.mxu0 0.0
        %2131 = vmatmul.mubr.f32.gmra.mxu0 %v1126
        %v2132 = vpop.f32.mrf.mxu0
        %v2133 = vadd.f32 0.0, %v2132
        %v2134 = vpop.f32.mrf.mxu0
        %2135 = vmatprep.mubr.f32.mxu0 0.0
        %2136 = vmatmul.mubr.f32.gmra.mxu0 %v1128
        %v2137 = vpop.f32.mrf.mxu0
        %v2138 = vadd.f32 0.0, %v2137
        %v2139 = vpop.f32.mrf.mxu0
        %2140 = vmatprep.mubr.f32.mxu0 0.0
        %2141 = vmatmul.mubr.f32.gmra.mxu0 %v1130
        %v2142 = vpop.f32.mrf.mxu0
        %v2143 = vadd.f32 0.0, %v2142
        %v2144 = vpop.f32.mrf.mxu0
        %2145 = vmatprep.mubr.f32.mxu0 0.0
        %2146 = vmatmul.mubr.f32.gmra.mxu0 %v1132
        %v2147 = vpop.f32.mrf.mxu0
        %v2148 = vadd.f32 0.0, %v2147
        %v2149 = vpop.f32.mrf.mxu0
        %2150 = vmatprep.mubr.f32.mxu0 0.0
        %2151 = vmatmul.mubr.f32.gmra.mxu0 %v1134
        %v2152 = vpop.f32.mrf.mxu0
        %v2153 = vadd.f32 0.0, %v2152
        %v2154 = vpop.f32.mrf.mxu0
        %2155 = vmatprep.mubr.f32.mxu0 0.0
        %2156 = vmatmul.mubr.f32.gmra.mxu0 %v1136
        %v2157 = vpop.f32.mrf.mxu0
        %v2158 = vadd.f32 0.0, %v2157
        %v2159 = vpop.f32.mrf.mxu0
        %2160 = vmatprep.mubr.f32.mxu0 0.0
        %2161 = vmatmul.mubr.f32.gmra.mxu0 %v1138
        %v2162 = vpop.f32.mrf.mxu0
        %v2163 = vadd.f32 0.0, %v2162
        %v2164 = vpop.f32.mrf.mxu0
        %2165 = vmatprep.mubr.f32.mxu0 0.0
        %2166 = vmatmul.mubr.f32.gmra.mxu0 %v1140
        %v2167 = vpop.f32.mrf.mxu0
        %v2168 = vadd.f32 0.0, %v2167
        %v2169 = vpop.f32.mrf.mxu0
        %2170 = vmatprep.mubr.f32.mxu0 0.0
        %2171 = vmatmul.mubr.f32.gmra.mxu0 %v1949
        %v2172 = vpop.f32.mrf.mxu0
        %v2173 = vadd.f32 0.0, %v2172
        %v2174 = vpop.f32.mrf.mxu0
        %2175 = vmatprep.mubr.f32.mxu0 0.0
        %2176 = vmatmul.mubr.f32.gmra.mxu0 %v1951
        %v2177 = vpop.f32.mrf.mxu0
        %v2178 = vadd.f32 0.0, %v2177
        %v2179 = vpop.f32.mrf.mxu0
        %2180 = vdwg.mxu0
        %v2181 = vadd.f32 %v1910, %v2023
        %v2182 = vadd.f32 %v1911, %v2028
        %v2183 = vadd.f32 %v1912, %v2033
        %v2184 = vadd.f32 %v1913, %v2038
        %v2185 = vadd.f32 %v1914, %v2043
        %v2186 = vadd.f32 %v1915, %v2048
        %v2187 = vadd.f32 %v1916, %v2053
        %v2188 = vadd.f32 %v1917, %v2058
        %v2189 = vadd.f32 %v1918, %v2063
        %v2190 = vadd.f32 %v1919, %v2068
        %v2191 = vadd.f32 %v1920, %v2073
        %v2192 = vadd.f32 %v1921, %v2078
        %v2193 = vadd.f32 %v1922, %v2083
        %v2194 = vadd.f32 %v1923, %v2088
        %v2195 = vadd.f32 %v1924, %v2093
        %v2196 = vadd.f32 %v1925, %v2098
        %v2197 = vadd.f32 %v1926, %v2103
        %v2198 = vadd.f32 %v1927, %v2108
        %v2199 = vadd.f32 %v1928, %v2113
        %v2200 = vadd.f32 %v1929, %v2118
        %v2201 = vadd.f32 %v1930, %v2123
        %v2202 = vadd.f32 %v1931, %v2128
        %v2203 = vadd.f32 %v1932, %v2133
        %v2204 = vadd.f32 %v1933, %v2138
        %v2205 = vadd.f32 %v1934, %v2143
        %v2206 = vadd.f32 %v1935, %v2148
        %v2207 = vadd.f32 %v1936, %v2153
        %v2208 = vadd.f32 %v1937, %v2158
        %v2209 = vadd.f32 %v1938, %v2163
        %v2210 = vadd.f32 %v1939, %v2168
        %v2211 = vadd.f32 %v1940, %v2173
        %v2212 = vadd.f32 %v1941, %v2178
        %s2213 = scalar_lea.vmem %s1, 24
        %v2214 = vld [vmem:[%s2213] sm:$0xf]
        %v2216 = vsel %vm409, %v274, 0
        %v2219 = vsel %vm409, %v275, 0
        %v2222 = vsel %vm474, %v2214, 0
        %2224 = vmatprep.subr.mxu0 0.0
        %2225 = vmatpush1.msra.mxu0 0.0
        %2226 = vmatprep.subr.mxu0 0.0
        %2227 = vmatpush1.msra.mxu0 0.0
        %2228 = vmatprep.subr.mxu0 0.0
        %2229 = vmatpush1.msra.mxu0 0.0
        %2230 = vmatprep.subr.mxu0 0.0
        %2231 = vmatpush1.msra.mxu0 0.0
        %2232 = vmatprep.subr.mxu0 0.0
        %2233 = vmatpush1.msra.mxu0 0.0
        %2234 = vmatprep.subr.mxu0 0.0
        %2235 = vmatpush1.msra.mxu0 0.0
        %2236 = vmatprep.subr.mxu0 0.0
        %2237 = vmatpush1.msra.mxu0 0.0
        %2238 = vmatprep.subr.mxu0 0.0
        %2239 = vmatpush1.msra.mxu0 0.0
        %2240 = vmatprep.subr.mxu0 0.0
        %2241 = vmatpush1.msra.mxu0 0.0
        %2242 = vmatprep.subr.mxu0 0.0
        %2243 = vmatpush1.msra.mxu0 0.0
        %2244 = vmatprep.subr.mxu0 0.0
        %2245 = vmatpush1.msra.mxu0 0.0
        %2246 = vmatprep.subr.mxu0 0.0
        %2247 = vmatpush1.msra.mxu0 0.0
        %2248 = vmatprep.subr.mxu0 0.0
        %2249 = vmatpush1.msra.mxu0 0.0
        %2250 = vmatprep.subr.mxu0 0.0
        %2251 = vmatpush1.msra.mxu0 0.0
        %2252 = vmatprep.subr.mxu0 0.0
        %2253 = vmatpush1.msra.mxu0 0.0
        %2254 = vmatprep.subr.mxu0 0.0
        %2255 = vmatpush1.msra.mxu0 %v2222
        %2256 = vmatprep.subr.mxu0 0.0
        %2257 = vmatpush2.msra.mxu0 0.0
        %2258 = vmatprep.subr.mxu0 0.0
        %2259 = vmatpush2.msra.mxu0 0.0
        %2260 = vmatprep.subr.mxu0 0.0
        %2261 = vmatpush2.msra.mxu0 0.0
        %2262 = vmatprep.subr.mxu0 0.0
        %2263 = vmatpush2.msra.mxu0 0.0
        %2264 = vmatprep.subr.mxu0 0.0
        %2265 = vmatpush2.msra.mxu0 0.0
        %2266 = vmatprep.subr.mxu0 0.0
        %2267 = vmatpush2.msra.mxu0 0.0
        %2268 = vmatprep.subr.mxu0 0.0
        %2269 = vmatpush2.msra.mxu0 0.0
        %2270 = vmatprep.subr.mxu0 0.0
        %2271 = vmatpush2.msra.mxu0 0.0
        %2272 = vmatprep.subr.mxu0 0.0
        %2273 = vmatpush2.msra.mxu0 0.0
        %2274 = vmatprep.subr.mxu0 0.0
        %2275 = vmatpush2.msra.mxu0 0.0
        %2276 = vmatprep.subr.mxu0 0.0
        %2277 = vmatpush2.msra.mxu0 0.0
        %2278 = vmatprep.subr.mxu0 0.0
        %2279 = vmatpush2.msra.mxu0 0.0
        %2280 = vmatprep.subr.mxu0 0.0
        %2281 = vmatpush2.msra.mxu0 0.0
        %2282 = vmatprep.subr.mxu0 0.0
        %2283 = vmatpush2.msra.mxu0 0.0
        %2284 = vmatprep.subr.mxu0 0.0
        %2285 = vmatpush2.msra.mxu0 0.0
        %2286 = vmatprep.subr.mxu0 0.0
        %2287 = vmatpush2.msra.mxu0 0.0
        %2288 = vmatprep.mubr.f32.mxu0 0.0
        %2289 = vmatmul.mubr.f32.gmra.mxu0 %v711
        %v2290 = vpop.f32.mrf.mxu0
        %v2291 = vadd.f32 0.0, %v2290
        %v2292 = vpop.f32.mrf.mxu0
        %2293 = vmatprep.mubr.f32.mxu0 0.0
        %2294 = vmatmul.mubr.f32.gmra.mxu0 %v713
        %v2295 = vpop.f32.mrf.mxu0
        %v2296 = vadd.f32 0.0, %v2295
        %v2297 = vpop.f32.mrf.mxu0
        %2298 = vmatprep.mubr.f32.mxu0 0.0
        %2299 = vmatmul.mubr.f32.gmra.mxu0 %v715
        %v2300 = vpop.f32.mrf.mxu0
        %v2301 = vadd.f32 0.0, %v2300
        %v2302 = vpop.f32.mrf.mxu0
        %2303 = vmatprep.mubr.f32.mxu0 0.0
        %2304 = vmatmul.mubr.f32.gmra.mxu0 %v717
        %v2305 = vpop.f32.mrf.mxu0
        %v2306 = vadd.f32 0.0, %v2305
        %v2307 = vpop.f32.mrf.mxu0
        %2308 = vmatprep.mubr.f32.mxu0 0.0
        %2309 = vmatmul.mubr.f32.gmra.mxu0 %v719
        %v2310 = vpop.f32.mrf.mxu0
        %v2311 = vadd.f32 0.0, %v2310
        %v2312 = vpop.f32.mrf.mxu0
        %2313 = vmatprep.mubr.f32.mxu0 0.0
        %2314 = vmatmul.mubr.f32.gmra.mxu0 %v721
        %v2315 = vpop.f32.mrf.mxu0
        %v2316 = vadd.f32 0.0, %v2315
        %v2317 = vpop.f32.mrf.mxu0
        %2318 = vmatprep.mubr.f32.mxu0 0.0
        %2319 = vmatmul.mubr.f32.gmra.mxu0 %v723
        %v2320 = vpop.f32.mrf.mxu0
        %v2321 = vadd.f32 0.0, %v2320
        %v2322 = vpop.f32.mrf.mxu0
        %2323 = vmatprep.mubr.f32.mxu0 0.0
        %2324 = vmatmul.mubr.f32.gmra.mxu0 %v725
        %v2325 = vpop.f32.mrf.mxu0
        %v2326 = vadd.f32 0.0, %v2325
        %v2327 = vpop.f32.mrf.mxu0
        %2328 = vmatprep.mubr.f32.mxu0 0.0
        %2329 = vmatmul.mubr.f32.gmra.mxu0 %v727
        %v2330 = vpop.f32.mrf.mxu0
        %v2331 = vadd.f32 0.0, %v2330
        %v2332 = vpop.f32.mrf.mxu0
        %2333 = vmatprep.mubr.f32.mxu0 0.0
        %2334 = vmatmul.mubr.f32.gmra.mxu0 %v729
        %v2335 = vpop.f32.mrf.mxu0
        %v2336 = vadd.f32 0.0, %v2335
        %v2337 = vpop.f32.mrf.mxu0
        %2338 = vmatprep.mubr.f32.mxu0 0.0
        %2339 = vmatmul.mubr.f32.gmra.mxu0 %v731
        %v2340 = vpop.f32.mrf.mxu0
        %v2341 = vadd.f32 0.0, %v2340
        %v2342 = vpop.f32.mrf.mxu0
        %2343 = vmatprep.mubr.f32.mxu0 0.0
        %2344 = vmatmul.mubr.f32.gmra.mxu0 %v733
        %v2345 = vpop.f32.mrf.mxu0
        %v2346 = vadd.f32 0.0, %v2345
        %v2347 = vpop.f32.mrf.mxu0
        %2348 = vmatprep.mubr.f32.mxu0 0.0
        %2349 = vmatmul.mubr.f32.gmra.mxu0 %v735
        %v2350 = vpop.f32.mrf.mxu0
        %v2351 = vadd.f32 0.0, %v2350
        %v2352 = vpop.f32.mrf.mxu0
        %2353 = vmatprep.mubr.f32.mxu0 0.0
        %2354 = vmatmul.mubr.f32.gmra.mxu0 %v737
        %v2355 = vpop.f32.mrf.mxu0
        %v2356 = vadd.f32 0.0, %v2355
        %v2357 = vpop.f32.mrf.mxu0
        %2358 = vmatprep.mubr.f32.mxu0 0.0
        %2359 = vmatmul.mubr.f32.gmra.mxu0 %v739
        %v2360 = vpop.f32.mrf.mxu0
        %v2361 = vadd.f32 0.0, %v2360
        %v2362 = vpop.f32.mrf.mxu0
        %2363 = vmatprep.mubr.f32.mxu0 0.0
        %2364 = vmatmul.mubr.f32.gmra.mxu0 %v741
        %v2365 = vpop.f32.mrf.mxu0
        %v2366 = vadd.f32 0.0, %v2365
        %v2367 = vpop.f32.mrf.mxu0
        %2368 = vmatprep.mubr.f32.mxu0 0.0
        %2369 = vmatmul.mubr.f32.gmra.mxu0 %v743
        %v2370 = vpop.f32.mrf.mxu0
        %v2371 = vadd.f32 0.0, %v2370
        %v2372 = vpop.f32.mrf.mxu0
        %2373 = vmatprep.mubr.f32.mxu0 0.0
        %2374 = vmatmul.mubr.f32.gmra.mxu0 %v745
        %v2375 = vpop.f32.mrf.mxu0
        %v2376 = vadd.f32 0.0, %v2375
        %v2377 = vpop.f32.mrf.mxu0
        %2378 = vmatprep.mubr.f32.mxu0 0.0
        %2379 = vmatmul.mubr.f32.gmra.mxu0 %v747
        %v2380 = vpop.f32.mrf.mxu0
        %v2381 = vadd.f32 0.0, %v2380
        %v2382 = vpop.f32.mrf.mxu0
        %2383 = vmatprep.mubr.f32.mxu0 0.0
        %2384 = vmatmul.mubr.f32.gmra.mxu0 %v749
        %v2385 = vpop.f32.mrf.mxu0
        %v2386 = vadd.f32 0.0, %v2385
        %v2387 = vpop.f32.mrf.mxu0
        %2388 = vmatprep.mubr.f32.mxu0 0.0
        %2389 = vmatmul.mubr.f32.gmra.mxu0 %v751
        %v2390 = vpop.f32.mrf.mxu0
        %v2391 = vadd.f32 0.0, %v2390
        %v2392 = vpop.f32.mrf.mxu0
        %2393 = vmatprep.mubr.f32.mxu0 0.0
        %2394 = vmatmul.mubr.f32.gmra.mxu0 %v753
        %v2395 = vpop.f32.mrf.mxu0
        %v2396 = vadd.f32 0.0, %v2395
        %v2397 = vpop.f32.mrf.mxu0
        %2398 = vmatprep.mubr.f32.mxu0 0.0
        %2399 = vmatmul.mubr.f32.gmra.mxu0 %v755
        %v2400 = vpop.f32.mrf.mxu0
        %v2401 = vadd.f32 0.0, %v2400
        %v2402 = vpop.f32.mrf.mxu0
        %2403 = vmatprep.mubr.f32.mxu0 0.0
        %2404 = vmatmul.mubr.f32.gmra.mxu0 %v757
        %v2405 = vpop.f32.mrf.mxu0
        %v2406 = vadd.f32 0.0, %v2405
        %v2407 = vpop.f32.mrf.mxu0
        %2408 = vmatprep.mubr.f32.mxu0 0.0
        %2409 = vmatmul.mubr.f32.gmra.mxu0 %v759
        %v2410 = vpop.f32.mrf.mxu0
        %v2411 = vadd.f32 0.0, %v2410
        %v2412 = vpop.f32.mrf.mxu0
        %2413 = vmatprep.mubr.f32.mxu0 0.0
        %2414 = vmatmul.mubr.f32.gmra.mxu0 %v761
        %v2415 = vpop.f32.mrf.mxu0
        %v2416 = vadd.f32 0.0, %v2415
        %v2417 = vpop.f32.mrf.mxu0
        %2418 = vmatprep.mubr.f32.mxu0 0.0
        %2419 = vmatmul.mubr.f32.gmra.mxu0 %v763
        %v2420 = vpop.f32.mrf.mxu0
        %v2421 = vadd.f32 0.0, %v2420
        %v2422 = vpop.f32.mrf.mxu0
        %2423 = vmatprep.mubr.f32.mxu0 0.0
        %2424 = vmatmul.mubr.f32.gmra.mxu0 %v765
        %v2425 = vpop.f32.mrf.mxu0
        %v2426 = vadd.f32 0.0, %v2425
        %v2427 = vpop.f32.mrf.mxu0
        %2428 = vmatprep.mubr.f32.mxu0 0.0
        %2429 = vmatmul.mubr.f32.gmra.mxu0 %v1405
        %v2430 = vpop.f32.mrf.mxu0
        %v2431 = vadd.f32 0.0, %v2430
        %v2432 = vpop.f32.mrf.mxu0
        %2433 = vmatprep.mubr.f32.mxu0 0.0
        %2434 = vmatmul.mubr.f32.gmra.mxu0 %v1408
        %v2435 = vpop.f32.mrf.mxu0
        %v2436 = vadd.f32 0.0, %v2435
        %v2437 = vpop.f32.mrf.mxu0
        %2438 = vmatprep.mubr.f32.mxu0 0.0
        %2439 = vmatmul.mubr.f32.gmra.mxu0 %v2216
        %v2440 = vpop.f32.mrf.mxu0
        %v2441 = vadd.f32 0.0, %v2440
        %v2442 = vpop.f32.mrf.mxu0
        %2443 = vmatprep.mubr.f32.mxu0 0.0
        %2444 = vmatmul.mubr.f32.gmra.mxu0 %v2219
        %v2445 = vpop.f32.mrf.mxu0
        %v2446 = vadd.f32 0.0, %v2445
        %v2447 = vpop.f32.mrf.mxu0
        %2448 = vdwg.mxu0
        %v2449 = vadd.f32 %v2181, %v2291
        %v2450 = vadd.f32 %v2182, %v2296
        %v2451 = vadd.f32 %v2183, %v2301
        %v2452 = vadd.f32 %v2184, %v2306
        %v2453 = vadd.f32 %v2185, %v2311
        %v2454 = vadd.f32 %v2186, %v2316
        %v2455 = vadd.f32 %v2187, %v2321
        %v2456 = vadd.f32 %v2188, %v2326
        %v2457 = vadd.f32 %v2189, %v2331
        %v2458 = vadd.f32 %v2190, %v2336
        %v2459 = vadd.f32 %v2191, %v2341
        %v2460 = vadd.f32 %v2192, %v2346
        %v2461 = vadd.f32 %v2193, %v2351
        %v2462 = vadd.f32 %v2194, %v2356
        %v2463 = vadd.f32 %v2195, %v2361
        %v2464 = vadd.f32 %v2196, %v2366
        %v2465 = vadd.f32 %v2197, %v2371
        %v2466 = vadd.f32 %v2198, %v2376
        %v2467 = vadd.f32 %v2199, %v2381
        %v2468 = vadd.f32 %v2200, %v2386
        %v2469 = vadd.f32 %v2201, %v2391
        %v2470 = vadd.f32 %v2202, %v2396
        %v2471 = vadd.f32 %v2203, %v2401
        %v2472 = vadd.f32 %v2204, %v2406
        %v2473 = vadd.f32 %v2205, %v2411
        %v2474 = vadd.f32 %v2206, %v2416
        %v2475 = vadd.f32 %v2207, %v2421
        %v2476 = vadd.f32 %v2208, %v2426
        %v2477 = vadd.f32 %v2209, %v2431
        %v2478 = vadd.f32 %v2210, %v2436
        %v2479 = vadd.f32 %v2211, %v2441
        %v2480 = vadd.f32 %v2212, %v2446
        %v2482 = vrot.slane %v274, 1
        %v2483 = vrot.slane %v275, 1
        %v2484 = vsel %vm326, %v2482, %v2483
        %v2485 = vrot.slane %v276, 1
        %v2486 = vsel %vm326, %v2483, %v2485
        %s2487 = scalar_lea.vmem %s1, 28
        %v2488 = vld [vmem:[%s2487] sm:$0xf]
        %v2489 = vsel %vm409, %v2484, 0
        %v2491 = vsel %vm409, %v2486, 0
        %v2494 = vsel %vm474, %v2488, 0
        %2496 = vmatprep.subr.mxu0 0.0
        %2497 = vmatpush1.msra.mxu0 0.0
        %2498 = vmatprep.subr.mxu0 0.0
        %2499 = vmatpush1.msra.mxu0 0.0
        %2500 = vmatprep.subr.mxu0 0.0
        %2501 = vmatpush1.msra.mxu0 0.0
        %2502 = vmatprep.subr.mxu0 0.0
        %2503 = vmatpush1.msra.mxu0 0.0
        %2504 = vmatprep.subr.mxu0 0.0
        %2505 = vmatpush1.msra.mxu0 0.0
        %2506 = vmatprep.subr.mxu0 0.0
        %2507 = vmatpush1.msra.mxu0 0.0
        %2508 = vmatprep.subr.mxu0 0.0
        %2509 = vmatpush1.msra.mxu0 0.0
        %2510 = vmatprep.subr.mxu0 0.0
        %2511 = vmatpush1.msra.mxu0 0.0
        %2512 = vmatprep.subr.mxu0 0.0
        %2513 = vmatpush1.msra.mxu0 0.0
        %2514 = vmatprep.subr.mxu0 0.0
        %2515 = vmatpush1.msra.mxu0 0.0
        %2516 = vmatprep.subr.mxu0 0.0
        %2517 = vmatpush1.msra.mxu0 0.0
        %2518 = vmatprep.subr.mxu0 0.0
        %2519 = vmatpush1.msra.mxu0 0.0
        %2520 = vmatprep.subr.mxu0 0.0
        %2521 = vmatpush1.msra.mxu0 0.0
        %2522 = vmatprep.subr.mxu0 0.0
        %2523 = vmatpush1.msra.mxu0 0.0
        %2524 = vmatprep.subr.mxu0 0.0
        %2525 = vmatpush1.msra.mxu0 0.0
        %2526 = vmatprep.subr.mxu0 0.0
        %2527 = vmatpush1.msra.mxu0 %v2494
        %2528 = vmatprep.subr.mxu0 0.0
        %2529 = vmatpush2.msra.mxu0 0.0
        %2530 = vmatprep.subr.mxu0 0.0
        %2531 = vmatpush2.msra.mxu0 0.0
        %2532 = vmatprep.subr.mxu0 0.0
        %2533 = vmatpush2.msra.mxu0 0.0
        %2534 = vmatprep.subr.mxu0 0.0
        %2535 = vmatpush2.msra.mxu0 0.0
        %2536 = vmatprep.subr.mxu0 0.0
        %2537 = vmatpush2.msra.mxu0 0.0
        %2538 = vmatprep.subr.mxu0 0.0
        %2539 = vmatpush2.msra.mxu0 0.0
        %2540 = vmatprep.subr.mxu0 0.0
        %2541 = vmatpush2.msra.mxu0 0.0
        %2542 = vmatprep.subr.mxu0 0.0
        %2543 = vmatpush2.msra.mxu0 0.0
        %2544 = vmatprep.subr.mxu0 0.0
        %2545 = vmatpush2.msra.mxu0 0.0
        %2546 = vmatprep.subr.mxu0 0.0
        %2547 = vmatpush2.msra.mxu0 0.0
        %2548 = vmatprep.subr.mxu0 0.0
        %2549 = vmatpush2.msra.mxu0 0.0
        %2550 = vmatprep.subr.mxu0 0.0
        %2551 = vmatpush2.msra.mxu0 0.0
        %2552 = vmatprep.subr.mxu0 0.0
        %2553 = vmatpush2.msra.mxu0 0.0
        %2554 = vmatprep.subr.mxu0 0.0
        %2555 = vmatpush2.msra.mxu0 0.0
        %2556 = vmatprep.subr.mxu0 0.0
        %2557 = vmatpush2.msra.mxu0 0.0
        %2558 = vmatprep.subr.mxu0 0.0
        %2559 = vmatpush2.msra.mxu0 0.0
        %2560 = vmatprep.mubr.f32.mxu0 0.0
        %2561 = vmatmul.mubr.f32.gmra.mxu0 %v418
        %v2562 = vpop.f32.mrf.mxu0
        %v2563 = vadd.f32 0.0, %v2562
        %v2564 = vpop.f32.mrf.mxu0
        %2565 = vmatprep.mubr.f32.mxu0 0.0
        %2566 = vmatmul.mubr.f32.gmra.mxu0 %v420
        %v2567 = vpop.f32.mrf.mxu0
        %v2568 = vadd.f32 0.0, %v2567
        %v2569 = vpop.f32.mrf.mxu0
        %2570 = vmatprep.mubr.f32.mxu0 0.0
        %2571 = vmatmul.mubr.f32.gmra.mxu0 %v422
        %v2572 = vpop.f32.mrf.mxu0
        %v2573 = vadd.f32 0.0, %v2572
        %v2574 = vpop.f32.mrf.mxu0
        %2575 = vmatprep.mubr.f32.mxu0 0.0
        %2576 = vmatmul.mubr.f32.gmra.mxu0 %v424
        %v2577 = vpop.f32.mrf.mxu0
        %v2578 = vadd.f32 0.0, %v2577
        %v2579 = vpop.f32.mrf.mxu0
        %2580 = vmatprep.mubr.f32.mxu0 0.0
        %2581 = vmatmul.mubr.f32.gmra.mxu0 %v426
        %v2582 = vpop.f32.mrf.mxu0
        %v2583 = vadd.f32 0.0, %v2582
        %v2584 = vpop.f32.mrf.mxu0
        %2585 = vmatprep.mubr.f32.mxu0 0.0
        %2586 = vmatmul.mubr.f32.gmra.mxu0 %v428
        %v2587 = vpop.f32.mrf.mxu0
        %v2588 = vadd.f32 0.0, %v2587
        %v2589 = vpop.f32.mrf.mxu0
        %2590 = vmatprep.mubr.f32.mxu0 0.0
        %2591 = vmatmul.mubr.f32.gmra.mxu0 %v430
        %v2592 = vpop.f32.mrf.mxu0
        %v2593 = vadd.f32 0.0, %v2592
        %v2594 = vpop.f32.mrf.mxu0
        %2595 = vmatprep.mubr.f32.mxu0 0.0
        %2596 = vmatmul.mubr.f32.gmra.mxu0 %v432
        %v2597 = vpop.f32.mrf.mxu0
        %v2598 = vadd.f32 0.0, %v2597
        %v2599 = vpop.f32.mrf.mxu0
        %2600 = vmatprep.mubr.f32.mxu0 0.0
        %2601 = vmatmul.mubr.f32.gmra.mxu0 %v434
        %v2602 = vpop.f32.mrf.mxu0
        %v2603 = vadd.f32 0.0, %v2602
        %v2604 = vpop.f32.mrf.mxu0
        %2605 = vmatprep.mubr.f32.mxu0 0.0
        %2606 = vmatmul.mubr.f32.gmra.mxu0 %v436
        %v2607 = vpop.f32.mrf.mxu0
        %v2608 = vadd.f32 0.0, %v2607
        %v2609 = vpop.f32.mrf.mxu0
        %2610 = vmatprep.mubr.f32.mxu0 0.0
        %2611 = vmatmul.mubr.f32.gmra.mxu0 %v438
        %v2612 = vpop.f32.mrf.mxu0
        %v2613 = vadd.f32 0.0, %v2612
        %v2614 = vpop.f32.mrf.mxu0
        %2615 = vmatprep.mubr.f32.mxu0 0.0
        %2616 = vmatmul.mubr.f32.gmra.mxu0 %v440
        %v2617 = vpop.f32.mrf.mxu0
        %v2618 = vadd.f32 0.0, %v2617
        %v2619 = vpop.f32.mrf.mxu0
        %2620 = vmatprep.mubr.f32.mxu0 0.0
        %2621 = vmatmul.mubr.f32.gmra.mxu0 %v442
        %v2622 = vpop.f32.mrf.mxu0
        %v2623 = vadd.f32 0.0, %v2622
        %v2624 = vpop.f32.mrf.mxu0
        %2625 = vmatprep.mubr.f32.mxu0 0.0
        %2626 = vmatmul.mubr.f32.gmra.mxu0 %v444
        %v2627 = vpop.f32.mrf.mxu0
        %v2628 = vadd.f32 0.0, %v2627
        %v2629 = vpop.f32.mrf.mxu0
        %2630 = vmatprep.mubr.f32.mxu0 0.0
        %2631 = vmatmul.mubr.f32.gmra.mxu0 %v446
        %v2632 = vpop.f32.mrf.mxu0
        %v2633 = vadd.f32 0.0, %v2632
        %v2634 = vpop.f32.mrf.mxu0
        %2635 = vmatprep.mubr.f32.mxu0 0.0
        %2636 = vmatmul.mubr.f32.gmra.mxu0 %v448
        %v2637 = vpop.f32.mrf.mxu0
        %v2638 = vadd.f32 0.0, %v2637
        %v2639 = vpop.f32.mrf.mxu0
        %2640 = vmatprep.mubr.f32.mxu0 0.0
        %2641 = vmatmul.mubr.f32.gmra.mxu0 %v450
        %v2642 = vpop.f32.mrf.mxu0
        %v2643 = vadd.f32 0.0, %v2642
        %v2644 = vpop.f32.mrf.mxu0
        %2645 = vmatprep.mubr.f32.mxu0 0.0
        %2646 = vmatmul.mubr.f32.gmra.mxu0 %v452
        %v2647 = vpop.f32.mrf.mxu0
        %v2648 = vadd.f32 0.0, %v2647
        %v2649 = vpop.f32.mrf.mxu0
        %2650 = vmatprep.mubr.f32.mxu0 0.0
        %2651 = vmatmul.mubr.f32.gmra.mxu0 %v454
        %v2652 = vpop.f32.mrf.mxu0
        %v2653 = vadd.f32 0.0, %v2652
        %v2654 = vpop.f32.mrf.mxu0
        %2655 = vmatprep.mubr.f32.mxu0 0.0
        %2656 = vmatmul.mubr.f32.gmra.mxu0 %v456
        %v2657 = vpop.f32.mrf.mxu0
        %v2658 = vadd.f32 0.0, %v2657
        %v2659 = vpop.f32.mrf.mxu0
        %2660 = vmatprep.mubr.f32.mxu0 0.0
        %2661 = vmatmul.mubr.f32.gmra.mxu0 %v458
        %v2662 = vpop.f32.mrf.mxu0
        %v2663 = vadd.f32 0.0, %v2662
        %v2664 = vpop.f32.mrf.mxu0
        %2665 = vmatprep.mubr.f32.mxu0 0.0
        %2666 = vmatmul.mubr.f32.gmra.mxu0 %v460
        %v2667 = vpop.f32.mrf.mxu0
        %v2668 = vadd.f32 0.0, %v2667
        %v2669 = vpop.f32.mrf.mxu0
        %2670 = vmatprep.mubr.f32.mxu0 0.0
        %2671 = vmatmul.mubr.f32.gmra.mxu0 %v462
        %v2672 = vpop.f32.mrf.mxu0
        %v2673 = vadd.f32 0.0, %v2672
        %v2674 = vpop.f32.mrf.mxu0
        %2675 = vmatprep.mubr.f32.mxu0 0.0
        %2676 = vmatmul.mubr.f32.gmra.mxu0 %v464
        %v2677 = vpop.f32.mrf.mxu0
        %v2678 = vadd.f32 0.0, %v2677
        %v2679 = vpop.f32.mrf.mxu0
        %2680 = vmatprep.mubr.f32.mxu0 0.0
        %2681 = vmatmul.mubr.f32.gmra.mxu0 %v466
        %v2682 = vpop.f32.mrf.mxu0
        %v2683 = vadd.f32 0.0, %v2682
        %v2684 = vpop.f32.mrf.mxu0
        %2685 = vmatprep.mubr.f32.mxu0 0.0
        %2686 = vmatmul.mubr.f32.gmra.mxu0 %v468
        %v2687 = vpop.f32.mrf.mxu0
        %v2688 = vadd.f32 0.0, %v2687
        %v2689 = vpop.f32.mrf.mxu0
        %2690 = vmatprep.mubr.f32.mxu0 0.0
        %2691 = vmatmul.mubr.f32.gmra.mxu0 %v470
        %v2692 = vpop.f32.mrf.mxu0
        %v2693 = vadd.f32 0.0, %v2692
        %v2694 = vpop.f32.mrf.mxu0
        %2695 = vmatprep.mubr.f32.mxu0 0.0
        %2696 = vmatmul.mubr.f32.gmra.mxu0 %v472
        %v2697 = vpop.f32.mrf.mxu0
        %v2698 = vadd.f32 0.0, %v2697
        %v2699 = vpop.f32.mrf.mxu0
        %2700 = vmatprep.mubr.f32.mxu0 0.0
        %2701 = vmatmul.mubr.f32.gmra.mxu0 %v1678
        %v2702 = vpop.f32.mrf.mxu0
        %v2703 = vadd.f32 0.0, %v2702
        %v2704 = vpop.f32.mrf.mxu0
        %2705 = vmatprep.mubr.f32.mxu0 0.0
        %2706 = vmatmul.mubr.f32.gmra.mxu0 %v1680
        %v2707 = vpop.f32.mrf.mxu0
        %v2708 = vadd.f32 0.0, %v2707
        %v2709 = vpop.f32.mrf.mxu0
        %2710 = vmatprep.mubr.f32.mxu0 0.0
        %2711 = vmatmul.mubr.f32.gmra.mxu0 %v2489
        %v2712 = vpop.f32.mrf.mxu0
        %v2713 = vadd.f32 0.0, %v2712
        %v2714 = vpop.f32.mrf.mxu0
        %2715 = vmatprep.mubr.f32.mxu0 0.0
        %2716 = vmatmul.mubr.f32.gmra.mxu0 %v2491
        %v2717 = vpop.f32.mrf.mxu0
        %v2718 = vadd.f32 0.0, %v2717
        %v2719 = vpop.f32.mrf.mxu0
        %2720 = vdwg.mxu0
        %v2721 = vadd.f32 %v2449, %v2563
        %v2722 = vadd.f32 %v2450, %v2568
        %v2723 = vadd.f32 %v2451, %v2573
        %v2724 = vadd.f32 %v2452, %v2578
        %v2725 = vadd.f32 %v2453, %v2583
        %v2726 = vadd.f32 %v2454, %v2588
        %v2727 = vadd.f32 %v2455, %v2593
        %v2728 = vadd.f32 %v2456, %v2598
        %v2729 = vadd.f32 %v2457, %v2603
        %v2730 = vadd.f32 %v2458, %v2608
        %v2731 = vadd.f32 %v2459, %v2613
        %v2732 = vadd.f32 %v2460, %v2618
        %v2733 = vadd.f32 %v2461, %v2623
        %v2734 = vadd.f32 %v2462, %v2628
        %v2735 = vadd.f32 %v2463, %v2633
        %v2736 = vadd.f32 %v2464, %v2638
        %v2737 = vadd.f32 %v2465, %v2643
        %v2738 = vadd.f32 %v2466, %v2648
        %v2739 = vadd.f32 %v2467, %v2653
        %v2740 = vadd.f32 %v2468, %v2658
        %v2741 = vadd.f32 %v2469, %v2663
        %v2742 = vadd.f32 %v2470, %v2668
        %v2743 = vadd.f32 %v2471, %v2673
        %v2744 = vadd.f32 %v2472, %v2678
        %v2745 = vadd.f32 %v2473, %v2683
        %v2746 = vadd.f32 %v2474, %v2688
        %v2747 = vadd.f32 %v2475, %v2693
        %v2748 = vadd.f32 %v2476, %v2698
        %v2749 = vadd.f32 %v2477, %v2703
        %v2750 = vadd.f32 %v2478, %v2708
        %v2751 = vadd.f32 %v2479, %v2713
        %v2752 = vadd.f32 %v2480, %v2718
        %v2753 = vrot.slane %v274, 2
        %v2754 = vrot.slane %v275, 2
        %v2755 = vsel %vm995, %v2753, %v2754
        %v2756 = vrot.slane %v276, 2
        %v2757 = vsel %vm995, %v2754, %v2756
        %s2758 = scalar_lea.vmem %s1, 32
        %v2759 = vld [vmem:[%s2758] sm:$0xf]
        %v2760 = vsel %vm409, %v2755, 0
        %v2762 = vsel %vm409, %v2757, 0
        %v2765 = vsel %vm474, %v2759, 0
        %2767 = vmatprep.subr.mxu0 0.0
        %2768 = vmatpush1.msra.mxu0 0.0
        %2769 = vmatprep.subr.mxu0 0.0
        %2770 = vmatpush1.msra.mxu0 0.0
        %2771 = vmatprep.subr.mxu0 0.0
        %2772 = vmatpush1.msra.mxu0 0.0
        %2773 = vmatprep.subr.mxu0 0.0
        %2774 = vmatpush1.msra.mxu0 0.0
        %2775 = vmatprep.subr.mxu0 0.0
        %2776 = vmatpush1.msra.mxu0 0.0
        %2777 = vmatprep.subr.mxu0 0.0
        %2778 = vmatpush1.msra.mxu0 0.0
        %2779 = vmatprep.subr.mxu0 0.0
        %2780 = vmatpush1.msra.mxu0 0.0
        %2781 = vmatprep.subr.mxu0 0.0
        %2782 = vmatpush1.msra.mxu0 0.0
        %2783 = vmatprep.subr.mxu0 0.0
        %2784 = vmatpush1.msra.mxu0 0.0
        %2785 = vmatprep.subr.mxu0 0.0
        %2786 = vmatpush1.msra.mxu0 0.0
        %2787 = vmatprep.subr.mxu0 0.0
        %2788 = vmatpush1.msra.mxu0 0.0
        %2789 = vmatprep.subr.mxu0 0.0
        %2790 = vmatpush1.msra.mxu0 0.0
        %2791 = vmatprep.subr.mxu0 0.0
        %2792 = vmatpush1.msra.mxu0 0.0
        %2793 = vmatprep.subr.mxu0 0.0
        %2794 = vmatpush1.msra.mxu0 0.0
        %2795 = vmatprep.subr.mxu0 0.0
        %2796 = vmatpush1.msra.mxu0 0.0
        %2797 = vmatprep.subr.mxu0 0.0
        %2798 = vmatpush1.msra.mxu0 %v2765
        %2799 = vmatprep.subr.mxu0 0.0
        %2800 = vmatpush2.msra.mxu0 0.0
        %2801 = vmatprep.subr.mxu0 0.0
        %2802 = vmatpush2.msra.mxu0 0.0
        %2803 = vmatprep.subr.mxu0 0.0
        %2804 = vmatpush2.msra.mxu0 0.0
        %2805 = vmatprep.subr.mxu0 0.0
        %2806 = vmatpush2.msra.mxu0 0.0
        %2807 = vmatprep.subr.mxu0 0.0
        %2808 = vmatpush2.msra.mxu0 0.0
        %2809 = vmatprep.subr.mxu0 0.0
        %2810 = vmatpush2.msra.mxu0 0.0
        %2811 = vmatprep.subr.mxu0 0.0
        %2812 = vmatpush2.msra.mxu0 0.0
        %2813 = vmatprep.subr.mxu0 0.0
        %2814 = vmatpush2.msra.mxu0 0.0
        %2815 = vmatprep.subr.mxu0 0.0
        %2816 = vmatpush2.msra.mxu0 0.0
        %2817 = vmatprep.subr.mxu0 0.0
        %2818 = vmatpush2.msra.mxu0 0.0
        %2819 = vmatprep.subr.mxu0 0.0
        %2820 = vmatpush2.msra.mxu0 0.0
        %2821 = vmatprep.subr.mxu0 0.0
        %2822 = vmatpush2.msra.mxu0 0.0
        %2823 = vmatprep.subr.mxu0 0.0
        %2824 = vmatpush2.msra.mxu0 0.0
        %2825 = vmatprep.subr.mxu0 0.0
        %2826 = vmatpush2.msra.mxu0 0.0
        %2827 = vmatprep.subr.mxu0 0.0
        %2828 = vmatpush2.msra.mxu0 0.0
        %2829 = vmatprep.subr.mxu0 0.0
        %2830 = vmatpush2.msra.mxu0 0.0
        %2831 = vmatprep.mubr.f32.mxu0 0.0
        %2832 = vmatmul.mubr.f32.gmra.mxu0 %v1086
        %v2833 = vpop.f32.mrf.mxu0
        %v2834 = vadd.f32 0.0, %v2833
        %v2835 = vpop.f32.mrf.mxu0
        %2836 = vmatprep.mubr.f32.mxu0 0.0
        %2837 = vmatmul.mubr.f32.gmra.mxu0 %v1088
        %v2838 = vpop.f32.mrf.mxu0
        %v2839 = vadd.f32 0.0, %v2838
        %v2840 = vpop.f32.mrf.mxu0
        %2841 = vmatprep.mubr.f32.mxu0 0.0
        %2842 = vmatmul.mubr.f32.gmra.mxu0 %v1090
        %v2843 = vpop.f32.mrf.mxu0
        %v2844 = vadd.f32 0.0, %v2843
        %v2845 = vpop.f32.mrf.mxu0
        %2846 = vmatprep.mubr.f32.mxu0 0.0
        %2847 = vmatmul.mubr.f32.gmra.mxu0 %v1092
        %v2848 = vpop.f32.mrf.mxu0
        %v2849 = vadd.f32 0.0, %v2848
        %v2850 = vpop.f32.mrf.mxu0
        %2851 = vmatprep.mubr.f32.mxu0 0.0
        %2852 = vmatmul.mubr.f32.gmra.mxu0 %v1094
        %v2853 = vpop.f32.mrf.mxu0
        %v2854 = vadd.f32 0.0, %v2853
        %v2855 = vpop.f32.mrf.mxu0
        %2856 = vmatprep.mubr.f32.mxu0 0.0
        %2857 = vmatmul.mubr.f32.gmra.mxu0 %v1096
        %v2858 = vpop.f32.mrf.mxu0
        %v2859 = vadd.f32 0.0, %v2858
        %v2860 = vpop.f32.mrf.mxu0
        %2861 = vmatprep.mubr.f32.mxu0 0.0
        %2862 = vmatmul.mubr.f32.gmra.mxu0 %v1098
        %v2863 = vpop.f32.mrf.mxu0
        %v2864 = vadd.f32 0.0, %v2863
        %v2865 = vpop.f32.mrf.mxu0
        %2866 = vmatprep.mubr.f32.mxu0 0.0
        %2867 = vmatmul.mubr.f32.gmra.mxu0 %v1100
        %v2868 = vpop.f32.mrf.mxu0
        %v2869 = vadd.f32 0.0, %v2868
        %v2870 = vpop.f32.mrf.mxu0
        %2871 = vmatprep.mubr.f32.mxu0 0.0
        %2872 = vmatmul.mubr.f32.gmra.mxu0 %v1102
        %v2873 = vpop.f32.mrf.mxu0
        %v2874 = vadd.f32 0.0, %v2873
        %v2875 = vpop.f32.mrf.mxu0
        %2876 = vmatprep.mubr.f32.mxu0 0.0
        %2877 = vmatmul.mubr.f32.gmra.mxu0 %v1104
        %v2878 = vpop.f32.mrf.mxu0
        %v2879 = vadd.f32 0.0, %v2878
        %v2880 = vpop.f32.mrf.mxu0
        %2881 = vmatprep.mubr.f32.mxu0 0.0
        %2882 = vmatmul.mubr.f32.gmra.mxu0 %v1106
        %v2883 = vpop.f32.mrf.mxu0
        %v2884 = vadd.f32 0.0, %v2883
        %v2885 = vpop.f32.mrf.mxu0
        %2886 = vmatprep.mubr.f32.mxu0 0.0
        %2887 = vmatmul.mubr.f32.gmra.mxu0 %v1108
        %v2888 = vpop.f32.mrf.mxu0
        %v2889 = vadd.f32 0.0, %v2888
        %v2890 = vpop.f32.mrf.mxu0
        %2891 = vmatprep.mubr.f32.mxu0 0.0
        %2892 = vmatmul.mubr.f32.gmra.mxu0 %v1110
        %v2893 = vpop.f32.mrf.mxu0
        %v2894 = vadd.f32 0.0, %v2893
        %v2895 = vpop.f32.mrf.mxu0
        %2896 = vmatprep.mubr.f32.mxu0 0.0
        %2897 = vmatmul.mubr.f32.gmra.mxu0 %v1112
        %v2898 = vpop.f32.mrf.mxu0
        %v2899 = vadd.f32 0.0, %v2898
        %v2900 = vpop.f32.mrf.mxu0
        %2901 = vmatprep.mubr.f32.mxu0 0.0
        %2902 = vmatmul.mubr.f32.gmra.mxu0 %v1114
        %v2903 = vpop.f32.mrf.mxu0
        %v2904 = vadd.f32 0.0, %v2903
        %v2905 = vpop.f32.mrf.mxu0
        %2906 = vmatprep.mubr.f32.mxu0 0.0
        %2907 = vmatmul.mubr.f32.gmra.mxu0 %v1116
        %v2908 = vpop.f32.mrf.mxu0
        %v2909 = vadd.f32 0.0, %v2908
        %v2910 = vpop.f32.mrf.mxu0
        %2911 = vmatprep.mubr.f32.mxu0 0.0
        %2912 = vmatmul.mubr.f32.gmra.mxu0 %v1118
        %v2913 = vpop.f32.mrf.mxu0
        %v2914 = vadd.f32 0.0, %v2913
        %v2915 = vpop.f32.mrf.mxu0
        %2916 = vmatprep.mubr.f32.mxu0 0.0
        %2917 = vmatmul.mubr.f32.gmra.mxu0 %v1120
        %v2918 = vpop.f32.mrf.mxu0
        %v2919 = vadd.f32 0.0, %v2918
        %v2920 = vpop.f32.mrf.mxu0
        %2921 = vmatprep.mubr.f32.mxu0 0.0
        %2922 = vmatmul.mubr.f32.gmra.mxu0 %v1122
        %v2923 = vpop.f32.mrf.mxu0
        %v2924 = vadd.f32 0.0, %v2923
        %v2925 = vpop.f32.mrf.mxu0
        %2926 = vmatprep.mubr.f32.mxu0 0.0
        %2927 = vmatmul.mubr.f32.gmra.mxu0 %v1124
        %v2928 = vpop.f32.mrf.mxu0
        %v2929 = vadd.f32 0.0, %v2928
        %v2930 = vpop.f32.mrf.mxu0
        %2931 = vmatprep.mubr.f32.mxu0 0.0
        %2932 = vmatmul.mubr.f32.gmra.mxu0 %v1126
        %v2933 = vpop.f32.mrf.mxu0
        %v2934 = vadd.f32 0.0, %v2933
        %v2935 = vpop.f32.mrf.mxu0
        %2936 = vmatprep.mubr.f32.mxu0 0.0
        %2937 = vmatmul.mubr.f32.gmra.mxu0 %v1128
        %v2938 = vpop.f32.mrf.mxu0
        %v2939 = vadd.f32 0.0, %v2938
        %v2940 = vpop.f32.mrf.mxu0
        %2941 = vmatprep.mubr.f32.mxu0 0.0
        %2942 = vmatmul.mubr.f32.gmra.mxu0 %v1130
        %v2943 = vpop.f32.mrf.mxu0
        %v2944 = vadd.f32 0.0, %v2943
        %v2945 = vpop.f32.mrf.mxu0
        %2946 = vmatprep.mubr.f32.mxu0 0.0
        %2947 = vmatmul.mubr.f32.gmra.mxu0 %v1132
        %v2948 = vpop.f32.mrf.mxu0
        %v2949 = vadd.f32 0.0, %v2948
        %v2950 = vpop.f32.mrf.mxu0
        %2951 = vmatprep.mubr.f32.mxu0 0.0
        %2952 = vmatmul.mubr.f32.gmra.mxu0 %v1134
        %v2953 = vpop.f32.mrf.mxu0
        %v2954 = vadd.f32 0.0, %v2953
        %v2955 = vpop.f32.mrf.mxu0
        %2956 = vmatprep.mubr.f32.mxu0 0.0
        %2957 = vmatmul.mubr.f32.gmra.mxu0 %v1136
        %v2958 = vpop.f32.mrf.mxu0
        %v2959 = vadd.f32 0.0, %v2958
        %v2960 = vpop.f32.mrf.mxu0
        %2961 = vmatprep.mubr.f32.mxu0 0.0
        %2962 = vmatmul.mubr.f32.gmra.mxu0 %v1138
        %v2963 = vpop.f32.mrf.mxu0
        %v2964 = vadd.f32 0.0, %v2963
        %v2965 = vpop.f32.mrf.mxu0
        %2966 = vmatprep.mubr.f32.mxu0 0.0
        %2967 = vmatmul.mubr.f32.gmra.mxu0 %v1140
        %v2968 = vpop.f32.mrf.mxu0
        %v2969 = vadd.f32 0.0, %v2968
        %v2970 = vpop.f32.mrf.mxu0
        %2971 = vmatprep.mubr.f32.mxu0 0.0
        %2972 = vmatmul.mubr.f32.gmra.mxu0 %v1949
        %v2973 = vpop.f32.mrf.mxu0
        %v2974 = vadd.f32 0.0, %v2973
        %v2975 = vpop.f32.mrf.mxu0
        %2976 = vmatprep.mubr.f32.mxu0 0.0
        %2977 = vmatmul.mubr.f32.gmra.mxu0 %v1951
        %v2978 = vpop.f32.mrf.mxu0
        %v2979 = vadd.f32 0.0, %v2978
        %v2980 = vpop.f32.mrf.mxu0
        %2981 = vmatprep.mubr.f32.mxu0 0.0
        %2982 = vmatmul.mubr.f32.gmra.mxu0 %v2760
        %v2983 = vpop.f32.mrf.mxu0
        %v2984 = vadd.f32 0.0, %v2983
        %v2985 = vpop.f32.mrf.mxu0
        %2986 = vmatprep.mubr.f32.mxu0 0.0
        %2987 = vmatmul.mubr.f32.gmra.mxu0 %v2762
        %v2988 = vpop.f32.mrf.mxu0
        %v2989 = vadd.f32 0.0, %v2988
        %v2990 = vpop.f32.mrf.mxu0
        %2991 = vdwg.mxu0
        %v2992 = vadd.f32 %v2721, %v2834
        %v2993 = vadd.f32 %v2722, %v2839
        %v2994 = vadd.f32 %v2723, %v2844
        %v2995 = vadd.f32 %v2724, %v2849
        %v2996 = vadd.f32 %v2725, %v2854
        %v2997 = vadd.f32 %v2726, %v2859
        %v2998 = vadd.f32 %v2727, %v2864
        %v2999 = vadd.f32 %v2728, %v2869
        %v3000 = vadd.f32 %v2729, %v2874
        %v3001 = vadd.f32 %v2730, %v2879
        %v3002 = vadd.f32 %v2731, %v2884
        %v3003 = vadd.f32 %v2732, %v2889
        %v3004 = vadd.f32 %v2733, %v2894
        %v3005 = vadd.f32 %v2734, %v2899
        %v3006 = vadd.f32 %v2735, %v2904
        %v3007 = vadd.f32 %v2736, %v2909
        %v3008 = vadd.f32 %v2737, %v2914
        %v3009 = vadd.f32 %v2738, %v2919
        %v3010 = vadd.f32 %v2739, %v2924
        %v3011 = vadd.f32 %v2740, %v2929
        %v3012 = vadd.f32 %v2741, %v2934
        %v3013 = vadd.f32 %v2742, %v2939
        %v3014 = vadd.f32 %v2743, %v2944
        %v3015 = vadd.f32 %v2744, %v2949
        %v3016 = vadd.f32 %v2745, %v2954
        %v3017 = vadd.f32 %v2746, %v2959
        %v3018 = vadd.f32 %v2747, %v2964
        %v3019 = vadd.f32 %v2748, %v2969
        %v3020 = vadd.f32 %v2749, %v2974
        %v3021 = vadd.f32 %v2750, %v2979
        %v3022 = vadd.f32 %v2751, %v2984
        %v3023 = vadd.f32 %v2752, %v2989
        %v3024 = vmax.f32 %v2992, 0.0
        %v3025 = vmax.f32 %v2993, 0.0
        %v3026 = vmax.f32 %v2994, 0.0
        %v3027 = vmax.f32 %v2995, 0.0
        %v3028 = vmax.f32 %v2996, 0.0
        %v3029 = vmax.f32 %v2997, 0.0
        %v3030 = vmax.f32 %v2998, 0.0
        %v3031 = vmax.f32 %v2999, 0.0
        %v3032 = vmax.f32 %v3000, 0.0
        %v3033 = vmax.f32 %v3001, 0.0
        %v3034 = vmax.f32 %v3002, 0.0
        %v3035 = vmax.f32 %v3003, 0.0
        %v3036 = vmax.f32 %v3004, 0.0
        %v3037 = vmax.f32 %v3005, 0.0
        %v3038 = vmax.f32 %v3006, 0.0
        %v3039 = vmax.f32 %v3007, 0.0
        %v3040 = vmax.f32 %v3008, 0.0
        %v3041 = vmax.f32 %v3009, 0.0
        %v3042 = vmax.f32 %v3010, 0.0
        %v3043 = vmax.f32 %v3011, 0.0
        %v3044 = vmax.f32 %v3012, 0.0
        %v3045 = vmax.f32 %v3013, 0.0
        %v3046 = vmax.f32 %v3014, 0.0
        %v3047 = vmax.f32 %v3015, 0.0
        %v3048 = vmax.f32 %v3016, 0.0
        %v3049 = vmax.f32 %v3017, 0.0
        %v3050 = vmax.f32 %v3018, 0.0
        %v3051 = vmax.f32 %v3019, 0.0
        %v3052 = vmax.f32 %v3020, 0.0
        %v3053 = vmax.f32 %v3021, 0.0
        %v3054 = vmax.f32 %v3022, 0.0
        %v3055 = vmax.f32 %v3023, 0.0
        %v3056 = vld [vmem:[%s2] sm:$0xff]
        %v3057 = vld [vmem:[%s2 + $0x8] sm:$0xff]
        %3058 = vmatprep.subr.mxu0 0.0
        %3059 = vmatpush1.msra.mxu0 %v3039
        %3060 = vmatprep.subr.mxu0 0.0
        %3061 = vmatpush1.msra.mxu0 %v3038
        %3062 = vmatprep.subr.mxu0 0.0
        %3063 = vmatpush1.msra.mxu0 %v3037
        %3064 = vmatprep.subr.mxu0 0.0
        %3065 = vmatpush1.msra.mxu0 %v3036
        %3066 = vmatprep.subr.mxu0 0.0
        %3067 = vmatpush1.msra.mxu0 %v3035
        %3068 = vmatprep.subr.mxu0 0.0
        %3069 = vmatpush1.msra.mxu0 %v3034
        %3070 = vmatprep.subr.mxu0 0.0
        %3071 = vmatpush1.msra.mxu0 %v3033
        %3072 = vmatprep.subr.mxu0 0.0
        %3073 = vmatpush1.msra.mxu0 %v3032
        %3074 = vmatprep.subr.mxu0 0.0
        %3075 = vmatpush1.msra.mxu0 %v3031
        %3076 = vmatprep.subr.mxu0 0.0
        %3077 = vmatpush1.msra.mxu0 %v3030
        %3078 = vmatprep.subr.mxu0 0.0
        %3079 = vmatpush1.msra.mxu0 %v3029
        %3080 = vmatprep.subr.mxu0 0.0
        %3081 = vmatpush1.msra.mxu0 %v3028
        %3082 = vmatprep.subr.mxu0 0.0
        %3083 = vmatpush1.msra.mxu0 %v3027
        %3084 = vmatprep.subr.mxu0 0.0
        %3085 = vmatpush1.msra.mxu0 %v3026
        %3086 = vmatprep.subr.mxu0 0.0
        %3087 = vmatpush1.msra.mxu0 %v3025
        %3088 = vmatprep.subr.mxu0 0.0
        %3089 = vmatpush1.msra.mxu0 %v3024
        %3090 = vmatprep.subr.mxu0 0.0
        %3091 = vmatpush2.msra.mxu0 %v3055
        %3092 = vmatprep.subr.mxu0 0.0
        %3093 = vmatpush2.msra.mxu0 %v3054
        %3094 = vmatprep.subr.mxu0 0.0
        %3095 = vmatpush2.msra.mxu0 %v3053
        %3096 = vmatprep.subr.mxu0 0.0
        %3097 = vmatpush2.msra.mxu0 %v3052
        %3098 = vmatprep.subr.mxu0 0.0
        %3099 = vmatpush2.msra.mxu0 %v3051
        %3100 = vmatprep.subr.mxu0 0.0
        %3101 = vmatpush2.msra.mxu0 %v3050
        %3102 = vmatprep.subr.mxu0 0.0
        %3103 = vmatpush2.msra.mxu0 %v3049
        %3104 = vmatprep.subr.mxu0 0.0
        %3105 = vmatpush2.msra.mxu0 %v3048
        %3106 = vmatprep.subr.mxu0 0.0
        %3107 = vmatpush2.msra.mxu0 %v3047
        %3108 = vmatprep.subr.mxu0 0.0
        %3109 = vmatpush2.msra.mxu0 %v3046
        %3110 = vmatprep.subr.mxu0 0.0
        %3111 = vmatpush2.msra.mxu0 %v3045
        %3112 = vmatprep.subr.mxu0 0.0
        %3113 = vmatpush2.msra.mxu0 %v3044
        %3114 = vmatprep.subr.mxu0 0.0
        %3115 = vmatpush2.msra.mxu0 %v3043
        %3116 = vmatprep.subr.mxu0 0.0
        %3117 = vmatpush2.msra.mxu0 %v3042
        %3118 = vmatprep.subr.mxu0 0.0
        %3119 = vmatpush2.msra.mxu0 %v3041
        %3120 = vmatprep.subr.mxu0 0.0
        %3121 = vmatpush2.msra.mxu0 %v3040
        %3122 = vmatprep.mubr.f32.mxu0 %v3057
        %3123 = vmatmul.mubr.f32.gmra.mxu0 %v3056
        %v3124 = vpop.f32.mrf.mxu0
        %v3125 = vadd.f32 0.0, %v3124
        %v3126 = vpop.f32.mrf.mxu0
        %3127 = vdwg.mxu0
        %v3128 = vld [vmem:[%s3] sm:$0xff]
        %v3129 = vld [vmem:[%s3 + $0x8] sm:$0xff]
        %v3130 = vld [vmem:[%s3 + $0x10] sm:$0xff]
        %v3131 = vld [vmem:[%s3 + $0x18] sm:$0xff]
        %v3132 = vld [vmem:[%s3 + $0x20] sm:$0xff]
        %v3133 = vld [vmem:[%s3 + $0x28] sm:$0xff]
        %v3134 = vld [vmem:[%s3 + $0x30] sm:$0xff]
        %v3135 = vld [vmem:[%s3 + $0x38] sm:$0xff]
        %v3136 = vld [vmem:[%s3 + $0x40] sm:$0xff]
        %v3137 = vld [vmem:[%s3 + $0x48] sm:$0xff]
        %v3138 = vld [vmem:[%s3 + $0x50] sm:$0xff]
        %v3139 = vld [vmem:[%s3 + $0x58] sm:$0xff]
        %v3140 = vld [vmem:[%s3 + $0x60] sm:$0xff]
        %v3141 = vld [vmem:[%s3 + $0x68] sm:$0xff]
        %v3142 = vld [vmem:[%s3 + $0x70] sm:$0xff]
        %v3143 = vld [vmem:[%s3 + $0x78] sm:$0xff]
        %v3144 = vld [vmem:[%s4] sm:$0x1]
        %v3146 = vlaneseq
        %v3147 = vshrl.u32 %v3146, 7
        %v3148 = vsub.s32 0, %v3147
        %v3149 = vrot.slane %v3144, %v3148
        %3151 = vmatprep.subr.mxu0 0.0
        %3152 = vmatpush1.msra.mxu0 %v3143
        %3153 = vmatprep.subr.mxu0 0.0
        %3154 = vmatpush1.msra.mxu0 %v3142
        %3155 = vmatprep.subr.mxu0 0.0
        %3156 = vmatpush1.msra.mxu0 %v3141
        %3157 = vmatprep.subr.mxu0 0.0
        %3158 = vmatpush1.msra.mxu0 %v3140
        %3159 = vmatprep.subr.mxu0 0.0
        %3160 = vmatpush1.msra.mxu0 %v3139
        %3161 = vmatprep.subr.mxu0 0.0
        %3162 = vmatpush1.msra.mxu0 %v3138
        %3163 = vmatprep.subr.mxu0 0.0
        %3164 = vmatpush1.msra.mxu0 %v3137
        %3165 = vmatprep.subr.mxu0 0.0
        %3166 = vmatpush1.msra.mxu0 %v3136
        %3167 = vmatprep.subr.mxu0 0.0
        %3168 = vmatpush1.msra.mxu0 %v3135
        %3169 = vmatprep.subr.mxu0 0.0
        %3170 = vmatpush1.msra.mxu0 %v3134
        %3171 = vmatprep.subr.mxu0 0.0
        %3172 = vmatpush1.msra.mxu0 %v3133
        %3173 = vmatprep.subr.mxu0 0.0
        %3174 = vmatpush1.msra.mxu0 %v3132
        %3175 = vmatprep.subr.mxu0 0.0
        %3176 = vmatpush1.msra.mxu0 %v3131
        %3177 = vmatprep.subr.mxu0 0.0
        %3178 = vmatpush1.msra.mxu0 %v3130
        %3179 = vmatprep.subr.mxu0 0.0
        %3180 = vmatpush1.msra.mxu0 %v3129
        %3181 = vmatprep.subr.mxu0 0.0
        %3182 = vmatpush1.msra.mxu0 %v3128
        %3183 = vmatprep.subr.mxu0 0.0
        %3184 = vmatpush2.msra.mxu0 0.0
        %3185 = vmatprep.subr.mxu0 0.0
        %3186 = vmatpush2.msra.mxu0 0.0
        %3187 = vmatprep.subr.mxu0 0.0
        %3188 = vmatpush2.msra.mxu0 0.0
        %3189 = vmatprep.subr.mxu0 0.0
        %3190 = vmatpush2.msra.mxu0 0.0
        %3191 = vmatprep.subr.mxu0 0.0
        %3192 = vmatpush2.msra.mxu0 0.0
        %3193 = vmatprep.subr.mxu0 0.0
        %3194 = vmatpush2.msra.mxu0 0.0
        %3195 = vmatprep.subr.mxu0 0.0
        %3196 = vmatpush2.msra.mxu0 0.0
        %3197 = vmatprep.subr.mxu0 0.0
        %3198 = vmatpush2.msra.mxu0 0.0
        %3199 = vmatprep.subr.mxu0 0.0
        %3200 = vmatpush2.msra.mxu0 0.0
        %3201 = vmatprep.subr.mxu0 0.0
        %3202 = vmatpush2.msra.mxu0 0.0
        %3203 = vmatprep.subr.mxu0 0.0
        %3204 = vmatpush2.msra.mxu0 0.0
        %3205 = vmatprep.subr.mxu0 0.0
        %3206 = vmatpush2.msra.mxu0 0.0
        %3207 = vmatprep.subr.mxu0 0.0
        %3208 = vmatpush2.msra.mxu0 0.0
        %3209 = vmatprep.subr.mxu0 0.0
        %3210 = vmatpush2.msra.mxu0 0.0
        %3211 = vmatprep.subr.mxu0 0.0
        %3212 = vmatpush2.msra.mxu0 0.0
        %3213 = vmatprep.subr.mxu0 0.0
        %3214 = vmatpush2.msra.mxu0 0.0
        %3215 = vmatprep.mubr.f32.mxu0 0.0
        %3216 = vmatmul.mubr.f32.gmra.mxu0 %v3125
        %v3217 = vpop.f32.mrf.mxu0
        %v3218 = vadd.f32 %v3149, %v3217
        %v3219 = vpop.f32.mrf.mxu0
        %3220 = vdwg.mxu0
        %3221 = vst [vmem:[%s217] sm:$0xff] %v3218
        %s3222 = sand.u32 %s137, 1
        %s3223 = scalar_lea.sflag [#allocation3], %s3222
        %s3224 = sand.u32 %s137, 1
        %s3225 = smul.addr %s3224, 8
        %s3226 = scalar_lea.vmem [#allocation2], %s3225
        // Predicated region
        $region41: #{tpu_custom_call.1} parent=39 // pred_check
          %p3227 = pneg %p147
        $region42: #{tpu_custom_call.1} parent=39 // pred_check_branch
          %3229 = sbr.rel (%p3227) target = $region44
        $region43: #{tpu_custom_call.1} parent=39 // pred_region
          %s3231 = ssub.s32 128, 128
          %3232 = vsyncadd %s3223, %s3231
          %s3233 = smul.addr %s19, 128
          %s3234 = scalar_lea.hbm %s5, %s3233
          %s3236 = sshll.u32 %s3226, 4
          %s3237 = int_to_ptr.vmem [resolvable:$true] %s3236
          %3239 = dma.vmem_to_hbm [thread:$0]  %s3237, 128, %s3234, %s3223
        $region44: #{tpu_custom_call.1} parent=39 // pred_fallthru
          _
      $region40: #{tpu_custom_call.1} parent=5 // pred_fallthru
        _
      %p3240 = scmp.le.s32.totalorder 2, %s14
      // Predicated region
      $region45: #{tpu_custom_call.1} parent=5 // pred_check
        %p3241 = pneg %p3240
      $region46: #{tpu_custom_call.1} parent=5 // pred_check_branch
        %3243 = sbr.rel (%p3241) target = $region48
      $region47: #{tpu_custom_call.1} parent=5 // pred_region
        %s3244 = ssub.s32 %s14, 2
        // Predicated region
        $region49: #{tpu_custom_call.1} parent=47 // pred_check
          %p3245 = pneg %p153
        $region50: #{tpu_custom_call.1} parent=47 // pred_check_branch
          %3247 = sbr.rel (%p3245) target = $region52
        $region51: #{tpu_custom_call.1} parent=47 // pred_region
          %s3248 = sand.u32 %s138, 1
          %s3249 = scalar_lea.sflag [#allocation3], %s3248
          %s3250 = sand.u32 %s138, 1
          %s3251 = smul.addr %s3250, 8
          %s3252 = scalar_lea.vmem [#allocation2], %s3251
          %3253 = dma.done %s3249, 128
        $region52: #{tpu_custom_call.1} parent=47 // pred_fallthru
          _
      $region48: #{tpu_custom_call.1} parent=5 // pred_fallthru
        _
    $region6: #{tpu_custom_call.1} parent=1 // loop_footer
      %s18 = sadd.s32 1, %s14
    $region7: #{tpu_custom_call.1} parent=1 // loop_footer_branch
      %13 = sbr.rel target = $region3
    $region8: #{tpu_custom_call.1} parent=1 // loop_exit
      _
    %3254 = vsyncpa [#allocation3], 1
    %s3255 = scalar_lea.sflag [#allocation3], 1
    %3256 = vsyncpa %s3255, 1

</llo_original>
